<compile_context>
chip_gen: v6e
topology: v6e:2x2x1
jax: 0.10.0
libtpu: 0.0.40
codegen_flags: <defaults>
</compile_context>

<pallas_src>
import functools

import jax
import jax.numpy as jnp
from jax.experimental import pallas as pl
from jax.experimental.pallas import tpu as pltpu

EPS = 1e-5      # CLIP layer_norm_eps
LANE = 128      # TPU lane width -> pad all HBM-visible feature dims to this


def _round_up(n, m):
    return ((n + m - 1) // m) * m


# ------------------------------ in-kernel helpers ----------------------------

def _ln(x, g, b, true_dim):
    """LayerNorm over the first `true_dim` lanes of x; lanes >= true_dim are exactly zero."""
    s1 = jnp.sum(x, axis=-1, keepdims=True)
    s2 = jnp.sum(x * x, axis=-1, keepdims=True)
    mean = s1 * (1.0 / true_dim)
    var = jnp.maximum(s2 * (1.0 / true_dim) - mean * mean, 0.0)
    inv = jax.lax.rsqrt(var + EPS)
    return (x - mean) * inv * g + b


# --------------------------------- kernels -----------------------------------

def _embed_kernel(H, tok_ref, wp_ref, pos_ref, g_ref, b_ref, o_ref):
    # tok_ref: (1, S, C*P*P) bf16 (row 0 is a zero "CLS" patch); wp: (C*P*P, HP) bf16
    # pos_ref: (S, HP) f32 (cls embedding folded into row 0); g/b: (1, HP) f32
    x = jnp.dot(tok_ref[0], wp_ref[...], preferred_element_type=jnp.float32)
    x = x + pos_ref[...]
    o_ref[0] = _ln(x, g_ref[...], b_ref[...], H).astype(o_ref.dtype)


def _layer_kernel(nh, dh, H, scale,
                  x_ref, ln1g_ref, ln1b_ref, wqkv_ref, bqkv_ref, wo_ref, bo_ref,
                  ln2g_ref, ln2b_ref, w1_ref, b1_ref, w2_ref, b2_ref, o_ref):
    S, HP = x_ref.shape[1], x_ref.shape[2]
    x = x_ref[0].astype(jnp.float32)                               # (S, HP) residual stream

    # ---- attention block: LN1 + fused QKV + softmax attention + out-proj + residual ----
    h = _ln(x, ln1g_ref[...], ln1b_ref[...], H).astype(jnp.bfloat16)
    qkv = jnp.dot(h, wqkv_ref[...],
                  preferred_element_type=jnp.float32) + bqkv_ref[...]      # (S, 3*HP) f32
    q = qkv[:, 0 * HP:1 * HP]
    k = qkv[:, 1 * HP:2 * HP]
    v = qkv[:, 2 * HP:3 * HP]

    attn = jnp.zeros((S, HP), jnp.float32)
    for hh in range(nh):                                           # static unroll over true heads
        sl = slice(hh * dh, (hh + 1) * dh)
        # scores: contract last dims directly (no k.T relayout), f32 on the MXU
        s = jax.lax.dot_general(q[:, sl], k[:, sl], (((1,), (1,)), ((), ())),
                                preferred_element_type=jnp.float32) * scale
        s = s - jnp.max(s, axis=-1, keepdims=True)
        p = jnp.exp(s)
        p = p * pl.reciprocal(jnp.sum(p, axis=-1, keepdims=True), approx=True)
        ctx = jnp.dot(p, v[:, sl], preferred_element_type=jnp.float32)     # (S, dh)
        # out-projection accumulated per head: identical to concat(heads) @ W_o
        attn = attn + jnp.dot(ctx.astype(jnp.bfloat16), wo_ref[hh],
                              preferred_element_type=jnp.float32)
    x = x + attn + bo_ref[...]

    # ---- MLP block: LN2 + FC1 (quick_gelu) + FC2 + residual ----
    h2 = _ln(x, ln2g_ref[...], ln2b_ref[...], H).astype(jnp.bfloat16)
    y = jnp.dot(h2, w1_ref[...], preferred_element_type=jnp.float32) + b1_ref[...]
    y = y * jax.nn.sigmoid(1.702 * y)                              # QuickGELU in f32
    y = jnp.dot(y.astype(jnp.bfloat16), w2_ref[...],
                preferred_element_type=jnp.float32) + b2_ref[...]
    o_ref[0] = (x + y).astype(o_ref.dtype)


def _head_kernel(H, xcls_ref, g_ref, b_ref, w_ref, bias_ref, o_ref):
    # xcls: (B, HP) bf16 CLS tokens; post-LN + classifier matmul (classes padded to 128 lanes)
    xc = xcls_ref[...].astype(jnp.float32)
    h = _ln(xc, g_ref[...], b_ref[...], H)
    o_ref[...] = jnp.dot(h.astype(jnp.bfloat16), w_ref[...],
                         preferred_element_type=jnp.float32) + bias_ref[...]


# ------------------------------ parameter init -------------------------------

CFG = dict(channels=3, image=16, patch=8, hidden=32, heads=4,
           intermediate=64, layers=2, num_classes=10)


def _pad2(w, rows, cols):
    r, c = w.shape
    return jnp.pad(w, ((0, rows - r), (0, cols - c)))


def init_params(key, cfg):
    C, P, H = cfg["channels"], cfg["patch"], cfg["hidden"]
    inter, ncls, nh = cfg["intermediate"], cfg["num_classes"], cfg["heads"]
    dh = H // nh
    n_patches = (cfg["image"] // P) ** 2
    S = n_patches + 1
    CPP = C * P * P
    HP = _round_up(H, LANE)
    IP = _round_up(inter, LANE)
    NCP = _round_up(ncls, LANE)

    def nrm(k, shape):
        return 0.02 * jax.random.normal(k, shape, jnp.float32)

    keys = iter(jax.random.split(key, 64))

    def ln_pair():
        g = jnp.pad(jnp.ones((1, H), jnp.float32), ((0, 0), (0, HP - H)))  # padded gamma = 0
        return g, jnp.zeros((1, HP), jnp.float32)

    # patch conv weight (H, C, P, P) -> (C*P*P, H) -> pad lane dim -> bf16
    wp = nrm(next(keys), (H, C, P, P)).reshape(H, CPP).T
    wp = _pad2(wp, CPP, HP).astype(jnp.bfloat16)

    cls_emb = nrm(next(keys), (H,))
    pos_emb = nrm(next(keys), (S, H))
    pos_tab = _pad2(pos_emb.at[0].add(cls_emb), S, HP)   # cls token folded into row 0, f32

    pre_g, pre_b = ln_pair()
    post_g, post_b = ln_pair()

    params = {
        "patch_w": wp, "pos_tab": pos_tab,
        "pre_ln_g": pre_g, "pre_ln_b": pre_b,
        "post_ln_g": post_g, "post_ln_b": post_b,
        "cls_w": _pad2(nrm(next(keys), (H, ncls)), HP, NCP).astype(jnp.bfloat16),
        "cls_b": jnp.zeros((1, NCP), jnp.float32),
        "layers": [],
    }

    for _ in range(cfg["layers"]):
        qw = nrm(next(keys), (H, H))
        kw = nrm(next(keys), (H, H))
        vw = nrm(next(keys), (H, H))
        w_qkv = jnp.concatenate(
            [_pad2(qw, HP, HP), _pad2(kw, HP, HP), _pad2(vw, HP, HP)],
            axis=1).astype(jnp.bfloat16)                              # (HP, 3*HP)
        ow = _pad2(nrm(next(keys), (H, H)), H, HP)                    # (H, HP)
        w_o = ow.reshape(nh, dh, HP).astype(jnp.bfloat16)             # per-head rows
        ln1_g, ln1_b = ln_pair()
        ln2_g, ln2_b = ln_pair()
        params["layers"].append({
            "ln1_g": ln1_g, "ln1_b": ln1_b,
            "w_qkv": w_qkv, "b_qkv": jnp.zeros((1, 3 * HP), jnp.float32),
            "w_o": w_o, "b_o": jnp.zeros((1, HP), jnp.float32),
            "ln2_g": ln2_g, "ln2_b": ln2_b,
            "w1": _pad2(nrm(next(keys), (H, inter)), HP, IP).astype(jnp.bfloat16),
            "b1": jnp.zeros((1, IP), jnp.float32),
            "w2": _pad2(nrm(next(keys), (inter, H)), IP, HP).astype(jnp.bfloat16),
            "b2": jnp.zeros((1, HP), jnp.float32),
        })
    return params


# -------------------------------- forward pass --------------------------------

def clip_classifier_forward(params, pixel_values, cfg):
    B, C, Himg, Wimg = pixel_values.shape
    P, H, nh = cfg["patch"], cfg["hidden"], cfg["heads"]
    inter, ncls = cfg["intermediate"], cfg["num_classes"]
    dh = H // nh
    gh, gw = Himg // P, Wimg // P
    n_patches = gh * gw
    S = n_patches + 1
    CPP = C * P * P
    HP = _round_up(H, LANE)
    IP = _round_up(inter, LANE)
    NCP = _round_up(ncls, LANE)
    scale = dh ** -0.5

    # unfold NCHW -> (B, n_patches, C*P*P); prepend a zero row that becomes the CLS slot
    patches = pixel_values.reshape(B, C, gh, P, gw, P)
    patches = patches.transpose(0, 2, 4, 1, 3, 5).reshape(B, n_patches, CPP)
    tok = jnp.concatenate(
        [jnp.zeros((B, 1, CPP), patches.dtype), patches], axis=1).astype(jnp.bfloat16)

    parallel_b = pltpu.CompilerParams(dimension_semantics=("parallel",))

    # --- fused patch-embed + cls/pos add + pre-LN ---
    x = pl.pallas_call(
        functools.partial(_embed_kernel, H),
        out_shape=jax.ShapeDtypeStruct((B, S, HP), jnp.bfloat16),
        grid=(B,),
        in_specs=[pl.BlockSpec((1, S, CPP), lambda i: (i, 0, 0)),
                  pl.BlockSpec((CPP, HP), lambda i: (0, 0)),
                  pl.BlockSpec((S, HP), lambda i: (0, 0)),
                  pl.BlockSpec((1, HP), lambda i: (0, 0)),
                  pl.BlockSpec((1, HP), lambda i: (0, 0))],
        out_specs=pl.BlockSpec((1, S, HP), lambda i: (i, 0, 0)),
        compiler_params=parallel_b,
    )(tok, params["patch_w"], params["pos_tab"], params["pre_ln_g"], params["pre_ln_b"])

    # --- one fused kernel per transformer encoder layer ---
    layer_fn = pl.pallas_call(
        functools.partial(_layer_kernel, nh, dh, H, scale),
        out_shape=jax.ShapeDtypeStruct((B, S, HP), jnp.bfloat16),
        grid=(B,),
        in_specs=[pl.BlockSpec((1, S, HP), lambda i: (i, 0, 0)),     # x (residual stream)
                  pl.BlockSpec((1, HP), lambda i: (0, 0)),           # ln1_g
                  pl.BlockSpec((1, HP), lambda i: (0, 0)),           # ln1_b
                  pl.BlockSpec((HP, 3 * HP), lambda i: (0, 0)),      # fused QKV weight
                  pl.BlockSpec((1, 3 * HP), lambda i: (0, 0)),       # fused QKV bias
                  pl.BlockSpec((nh, dh, HP), lambda i: (0, 0, 0)),   # out-proj weight (per head)
                  pl.BlockSpec((1, HP), lambda i: (0, 0)),           # out-proj bias
                  pl.BlockSpec((1, HP), lambda i: (0, 0)),           # ln2_g
                  pl.BlockSpec((1, HP), lambda i: (0, 0)),           # ln2_b
                  pl.BlockSpec((HP, IP), lambda i: (0, 0)),          # fc1 weight
                  pl.BlockSpec((1, IP), lambda i: (0, 0)),           # fc1 bias
                  pl.BlockSpec((IP, HP), lambda i: (0, 0)),          # fc2 weight
                  pl.BlockSpec((1, HP), lambda i: (0, 0))],          # fc2 bias
        out_specs=pl.BlockSpec((1, S, HP), lambda i: (i, 0, 0)),
        compiler_params=parallel_b,
    )
    for lyr in params["layers"]:
        x = layer_fn(x, lyr["ln1_g"], lyr["ln1_b"], lyr["w_qkv"], lyr["b_qkv"],
                     lyr["w_o"], lyr["b_o"], lyr["ln2_g"], lyr["ln2_b"],
                     lyr["w1"], lyr["b1"], lyr["w2"], lyr["b2"])

    # --- pooler_output = post_layernorm(CLS token), then classifier (classes padded to 128) ---
    pooled_in = x[:, 0, :]                                           # (B, HP) bf16, tiny slice
    logits_padded = pl.pallas_call(
        functools.partial(_head_kernel, H),
        out_shape=jax.ShapeDtypeStruct((B, NCP), jnp.float32),
    )(pooled_in, params["post_ln_g"], params["post_ln_b"], params["cls_w"], params["cls_b"])
    return logits_padded[:, :ncls]


# ------------------------------------ main ------------------------------------

if __name__ == "__main__":
    key = jax.random.PRNGKey(0)
    k_param, k_data = jax.random.split(key)
    params = init_params(k_param, CFG)
    pixel_values = jax.random.normal(
        k_data, (2, CFG["channels"], CFG["image"], CFG["image"]), jnp.float32)

    fwd = jax.jit(lambda p, pv: clip_classifier_forward(p, pv, CFG))
    logits = fwd(params, pixel_values)
    logits = jax.block_until_ready(logits)
    assert logits.shape == (2, CFG["num_classes"])
    print("KERNEL_OK")
</pallas_src>

<mosaic_0001>
module attributes {stable_mosaic.version = 11 : i64} {
  func.func @_embed_kernel(%arg0: i32, %arg1: memref<1x5x192xbf16, #tpu.memory_space<vmem>>, %arg2: memref<192x128xbf16, #tpu.memory_space<vmem>>, %arg3: memref<5x128xf32, #tpu.memory_space<vmem>>, %arg4: memref<1x128xf32, #tpu.memory_space<vmem>>, %arg5: memref<1x128xf32, #tpu.memory_space<vmem>>, %arg6: memref<1x5x128xbf16, #tpu.memory_space<vmem>>) attributes {dimension_semantics = [#tpu.dimension_semantics<parallel>], iteration_bounds = array<i64: 2>, scalar_prefetch = 0 : i64, scratch_operands = 0 : i64, tpu.core_type = #tpu.core_type<tc>, window_params = [{transform_indices = @transform_0, window_bounds = array<i64: 1, 5, 192>}, {pipeline_mode = #tpu.pipeline_mode<synchronous>, transform_indices = @transform_1, window_bounds = array<i64: 192, 128>}, {pipeline_mode = #tpu.pipeline_mode<synchronous>, transform_indices = @transform_2, window_bounds = array<i64: 5, 128>}, {pipeline_mode = #tpu.pipeline_mode<synchronous>, transform_indices = @transform_3, window_bounds = array<i64: 1, 128>}, {pipeline_mode = #tpu.pipeline_mode<synchronous>, transform_indices = @transform_4, window_bounds = array<i64: 1, 128>}, {transform_indices = @transform_5, window_bounds = array<i64: 1, 5, 128>}]} {
    %c0 = arith.constant 0 : index
    %c0_0 = arith.constant 0 : index
    %c0_1 = arith.constant 0 : index
    %0 = vector.load %arg1[%c0, %c0_0, %c0_1] : memref<1x5x192xbf16, #tpu.memory_space<vmem>>, vector<1x5x192xbf16>
    %1 = vector.shape_cast %0 : vector<1x5x192xbf16> to vector<5x192xbf16>
    %c0_2 = arith.constant 0 : index
    %c0_3 = arith.constant 0 : index
    %2 = vector.load %arg2[%c0_2, %c0_3] : memref<192x128xbf16, #tpu.memory_space<vmem>>, vector<192x128xbf16>
    %cst = arith.constant dense<0.000000e+00> : vector<5x128xf32>
    %3 = tpu.matmul %1, %2, %cst {dimension_numbers = #tpu.dot_dimension_numbers<[1], [0], [0], [1], [0, 0, 1, 1], [], []>} : vector<5x192xbf16>, vector<192x128xbf16>, vector<5x128xf32> -> vector<5x128xf32>
    %c0_4 = arith.constant 0 : index
    %c0_5 = arith.constant 0 : index
    %4 = vector.load %arg3[%c0_4, %c0_5] : memref<5x128xf32, #tpu.memory_space<vmem>>, vector<5x128xf32>
    %5 = arith.addf %3, %4 : vector<5x128xf32>
    %c0_6 = arith.constant 0 : index
    %c0_7 = arith.constant 0 : index
    %6 = vector.load %arg4[%c0_6, %c0_7] : memref<1x128xf32, #tpu.memory_space<vmem>>, vector<1x128xf32>
    %c0_8 = arith.constant 0 : index
    %c0_9 = arith.constant 0 : index
    %7 = vector.load %arg5[%c0_8, %c0_9] : memref<1x128xf32, #tpu.memory_space<vmem>>, vector<1x128xf32>
    %cst_10 = arith.constant dense<0.000000e+00> : vector<5xf32>
    %8 = vector.multi_reduction <add>, %5, %cst_10 [1] : vector<5x128xf32> to vector<5xf32>
    %9 = vector.shape_cast %8 : vector<5xf32> to vector<5x1xf32>
    %10 = arith.mulf %5, %5 : vector<5x128xf32>
    %cst_11 = arith.constant dense<0.000000e+00> : vector<5xf32>
    %11 = vector.multi_reduction <add>, %10, %cst_11 [1] : vector<5x128xf32> to vector<5xf32>
    %12 = vector.shape_cast %11 : vector<5xf32> to vector<5x1xf32>
    %cst_12 = arith.constant 3.125000e-02 : f32
    %13 = vector.broadcast %cst_12 : f32 to vector<5x1xf32>
    %14 = arith.mulf %9, %13 : vector<5x1xf32>
    %cst_13 = arith.constant 3.125000e-02 : f32
    %15 = vector.broadcast %cst_13 : f32 to vector<5x1xf32>
    %16 = arith.mulf %12, %15 : vector<5x1xf32>
    %17 = arith.mulf %14, %14 : vector<5x1xf32>
    %18 = arith.subf %16, %17 : vector<5x1xf32>
    %cst_14 = arith.constant 0.000000e+00 : f32
    %19 = vector.broadcast %cst_14 : f32 to vector<5x1xf32>
    %20 = arith.maximumf %18, %19 : vector<5x1xf32>
    %cst_15 = arith.constant 9.99999974E-6 : f32
    %21 = vector.broadcast %cst_15 : f32 to vector<5x1xf32>
    %22 = arith.addf %20, %21 : vector<5x1xf32>
    %23 = math.rsqrt %22 : vector<5x1xf32>
    %24 = vector.broadcast %14 : vector<5x1xf32> to vector<5x128xf32>
    %25 = arith.subf %5, %24 : vector<5x128xf32>
    %26 = vector.broadcast %23 : vector<5x1xf32> to vector<5x128xf32>
    %27 = arith.mulf %25, %26 : vector<5x128xf32>
    %28 = vector.broadcast %6 : vector<1x128xf32> to vector<5x128xf32>
    %29 = arith.mulf %27, %28 : vector<5x128xf32>
    %30 = vector.broadcast %7 : vector<1x128xf32> to vector<5x128xf32>
    %31 = arith.addf %29, %30 : vector<5x128xf32>
    %32 = arith.truncf %31 : vector<5x128xf32> to vector<5x128xbf16>
    %c0_16 = arith.constant 0 : index
    %c0_17 = arith.constant 0 : index
    %c0_18 = arith.constant 0 : index
    %33 = vector.load %arg6[%c0_16, %c0_17, %c0_18] : memref<1x5x128xbf16, #tpu.memory_space<vmem>>, vector<1x5x128xbf16>
    %34 = vector.shape_cast %33 : vector<1x5x128xbf16> to vector<5x128xbf16>
    %35 = vector.shape_cast %32 : vector<5x128xbf16> to vector<1x5x128xbf16>
    tpu.vector_store %arg6[%c0_16, %c0_17, %c0_18], %35 {strides = array<i32>} : memref<1x5x128xbf16, #tpu.memory_space<vmem>>, vector<1x5x128xbf16>,
    return
  }
  func.func @transform_0(%arg0: i32) -> (i32, i32, i32) {
    %c0_i32 = arith.constant 0 : i32
    %c0_i32_0 = arith.constant 0 : i32
    %c0_i32_1 = arith.constant 0 : i32
    return %arg0, %c0_i32, %c0_i32_0 : i32, i32, i32
  }
  func.func @transform_1(%arg0: i32) -> (i32, i32) {
    %c0_i32 = arith.constant 0 : i32
    %c0_i32_0 = arith.constant 0 : i32
    %c0_i32_1 = arith.constant 0 : i32
    return %c0_i32, %c0_i32_0 : i32, i32
  }
  func.func @transform_2(%arg0: i32) -> (i32, i32) {
    %c0_i32 = arith.constant 0 : i32
    %c0_i32_0 = arith.constant 0 : i32
    %c0_i32_1 = arith.constant 0 : i32
    return %c0_i32, %c0_i32_0 : i32, i32
  }
  func.func @transform_3(%arg0: i32) -> (i32, i32) {
    %c0_i32 = arith.constant 0 : i32
    %c0_i32_0 = arith.constant 0 : i32
    %c0_i32_1 = arith.constant 0 : i32
    return %c0_i32, %c0_i32_0 : i32, i32
  }
  func.func @transform_4(%arg0: i32) -> (i32, i32) {
    %c0_i32 = arith.constant 0 : i32
    %c0_i32_0 = arith.constant 0 : i32
    %c0_i32_1 = arith.constant 0 : i32
    return %c0_i32, %c0_i32_0 : i32, i32
  }
  func.func @transform_5(%arg0: i32) -> (i32, i32, i32) {
    %c0_i32 = arith.constant 0 : i32
    %c0_i32_0 = arith.constant 0 : i32
    %c0_i32_1 = arith.constant 0 : i32
    return %arg0, %c0_i32, %c0_i32_0 : i32, i32, i32
  }
}

module attributes {stable_mosaic.version = 11 : i64} {
  func.func @_layer_kernel(%arg0: i32, %arg1: memref<1x5x128xbf16, #tpu.memory_space<vmem>>, %arg2: memref<1x128xf32, #tpu.memory_space<vmem>>, %arg3: memref<1x128xf32, #tpu.memory_space<vmem>>, %arg4: memref<128x384xbf16, #tpu.memory_space<vmem>>, %arg5: memref<1x384xf32, #tpu.memory_space<vmem>>, %arg6: memref<4x8x128xbf16, #tpu.memory_space<vmem>>, %arg7: memref<1x128xf32, #tpu.memory_space<vmem>>, %arg8: memref<1x128xf32, #tpu.memory_space<vmem>>, %arg9: memref<1x128xf32, #tpu.memory_space<vmem>>, %arg10: memref<128x128xbf16, #tpu.memory_space<vmem>>, %arg11: memref<1x128xf32, #tpu.memory_space<vmem>>, %arg12: memref<128x128xbf16, #tpu.memory_space<vmem>>, %arg13: memref<1x128xf32, #tpu.memory_space<vmem>>, %arg14: memref<1x5x128xbf16, #tpu.memory_space<vmem>>) attributes {dimension_semantics = [#tpu.dimension_semantics<parallel>], iteration_bounds = array<i64: 2>, scalar_prefetch = 0 : i64, scratch_operands = 0 : i64, tpu.core_type = #tpu.core_type<tc>, window_params = [{transform_indices = @transform_0, window_bounds = array<i64: 1, 5, 128>}, {pipeline_mode = #tpu.pipeline_mode<synchronous>, transform_indices = @transform_1, window_bounds = array<i64: 1, 128>}, {pipeline_mode = #tpu.pipeline_mode<synchronous>, transform_indices = @transform_2, window_bounds = array<i64: 1, 128>}, {pipeline_mode = #tpu.pipeline_mode<synchronous>, transform_indices = @transform_3, window_bounds = array<i64: 128, 384>}, {pipeline_mode = #tpu.pipeline_mode<synchronous>, transform_indices = @transform_4, window_bounds = array<i64: 1, 384>}, {pipeline_mode = #tpu.pipeline_mode<synchronous>, transform_indices = @transform_5, window_bounds = array<i64: 4, 8, 128>}, {pipeline_mode = #tpu.pipeline_mode<synchronous>, transform_indices = @transform_6, window_bounds = array<i64: 1, 128>}, {pipeline_mode = #tpu.pipeline_mode<synchronous>, transform_indices = @transform_7, window_bounds = array<i64: 1, 128>}, {pipeline_mode = #tpu.pipeline_mode<synchronous>, transform_indices = @transform_8, window_bounds = array<i64: 1, 128>}, {pipeline_mode = #tpu.pipeline_mode<synchronous>, transform_indices = @transform_9, window_bounds = array<i64: 128, 128>}, {pipeline_mode = #tpu.pipeline_mode<synchronous>, transform_indices = @transform_10, window_bounds = array<i64: 1, 128>}, {pipeline_mode = #tpu.pipeline_mode<synchronous>, transform_indices = @transform_11, window_bounds = array<i64: 128, 128>}, {pipeline_mode = #tpu.pipeline_mode<synchronous>, transform_indices = @transform_12, window_bounds = array<i64: 1, 128>}, {transform_indices = @transform_13, window_bounds = array<i64: 1, 5, 128>}]} {
    %c0 = arith.constant 0 : index
    %c0_0 = arith.constant 0 : index
    %c0_1 = arith.constant 0 : index
    %0 = vector.load %arg1[%c0, %c0_0, %c0_1] : memref<1x5x128xbf16, #tpu.memory_space<vmem>>, vector<1x5x128xbf16>
    %1 = vector.shape_cast %0 : vector<1x5x128xbf16> to vector<5x128xbf16>
    %2 = arith.extf %1 : vector<5x128xbf16> to vector<5x128xf32>
    %c0_2 = arith.constant 0 : index
    %c0_3 = arith.constant 0 : index
    %3 = vector.load %arg2[%c0_2, %c0_3] : memref<1x128xf32, #tpu.memory_space<vmem>>, vector<1x128xf32>
    %c0_4 = arith.constant 0 : index
    %c0_5 = arith.constant 0 : index
    %4 = vector.load %arg3[%c0_4, %c0_5] : memref<1x128xf32, #tpu.memory_space<vmem>>, vector<1x128xf32>
    %cst = arith.constant dense<0.000000e+00> : vector<5xf32>
    %5 = vector.multi_reduction <add>, %2, %cst [1] : vector<5x128xf32> to vector<5xf32>
    %6 = vector.shape_cast %5 : vector<5xf32> to vector<5x1xf32>
    %7 = arith.mulf %2, %2 : vector<5x128xf32>
    %cst_6 = arith.constant dense<0.000000e+00> : vector<5xf32>
    %8 = vector.multi_reduction <add>, %7, %cst_6 [1] : vector<5x128xf32> to vector<5xf32>
    %9 = vector.shape_cast %8 : vector<5xf32> to vector<5x1xf32>
    %cst_7 = arith.constant 3.125000e-02 : f32
    %10 = vector.broadcast %cst_7 : f32 to vector<5x1xf32>
    %11 = arith.mulf %6, %10 : vector<5x1xf32>
    %cst_8 = arith.constant 3.125000e-02 : f32
    %12 = vector.broadcast %cst_8 : f32 to vector<5x1xf32>
    %13 = arith.mulf %9, %12 : vector<5x1xf32>
    %14 = arith.mulf %11, %11 : vector<5x1xf32>
    %15 = arith.subf %13, %14 : vector<5x1xf32>
    %cst_9 = arith.constant 0.000000e+00 : f32
    %16 = vector.broadcast %cst_9 : f32 to vector<5x1xf32>
    %17 = arith.maximumf %15, %16 : vector<5x1xf32>
    %cst_10 = arith.constant 9.99999974E-6 : f32
    %18 = vector.broadcast %cst_10 : f32 to vector<5x1xf32>
    %19 = arith.addf %17, %18 : vector<5x1xf32>
    %20 = math.rsqrt %19 : vector<5x1xf32>
    %21 = vector.broadcast %11 : vector<5x1xf32> to vector<5x128xf32>
    %22 = arith.subf %2, %21 : vector<5x128xf32>
    %23 = vector.broadcast %20 : vector<5x1xf32> to vector<5x128xf32>
    %24 = arith.mulf %22, %23 : vector<5x128xf32>
    %25 = vector.broadcast %3 : vector<1x128xf32> to vector<5x128xf32>
    %26 = arith.mulf %24, %25 : vector<5x128xf32>
    %27 = vector.broadcast %4 : vector<1x128xf32> to vector<5x128xf32>
    %28 = arith.addf %26, %27 : vector<5x128xf32>
    %29 = arith.truncf %28 : vector<5x128xf32> to vector<5x128xbf16>
    %c0_11 = arith.constant 0 : index
    %c0_12 = arith.constant 0 : index
    %30 = vector.load %arg4[%c0_11, %c0_12] : memref<128x384xbf16, #tpu.memory_space<vmem>>, vector<128x384xbf16>
    %cst_13 = arith.constant dense<0.000000e+00> : vector<5x384xf32>
    %31 = tpu.matmul %29, %30, %cst_13 {dimension_numbers = #tpu.dot_dimension_numbers<[1], [0], [0], [1], [0, 0, 1, 1], [], []>} : vector<5x128xbf16>, vector<128x384xbf16>, vector<5x384xf32> -> vector<5x384xf32>
    %c0_14 = arith.constant 0 : index
    %c0_15 = arith.constant 0 : index
    %32 = vector.load %arg5[%c0_14, %c0_15] : memref<1x384xf32, #tpu.memory_space<vmem>>, vector<1x384xf32>
    %33 = vector.broadcast %32 : vector<1x384xf32> to vector<5x384xf32>
    %34 = arith.addf %31, %33 : vector<5x384xf32>
    %35 = vector.extract_strided_slice %34 {offsets = [0, 0], sizes = [5, 128], strides = [1, 1]} : vector<5x384xf32> to vector<5x128xf32>
    %36 = vector.extract_strided_slice %34 {offsets = [0, 128], sizes = [5, 128], strides = [1, 1]} : vector<5x384xf32> to vector<5x128xf32>
    %37 = vector.extract_strided_slice %34 {offsets = [0, 256], sizes = [5, 128], strides = [1, 1]} : vector<5x384xf32> to vector<5x128xf32>
    %cst_16 = arith.constant 0.000000e+00 : f32
    %38 = vector.broadcast %cst_16 : f32 to vector<5x128xf32>
    %39 = vector.extract_strided_slice %35 {offsets = [0, 0], sizes = [5, 8], strides = [1, 1]} : vector<5x128xf32> to vector<5x8xf32>
    %40 = vector.extract_strided_slice %36 {offsets = [0, 0], sizes = [5, 8], strides = [1, 1]} : vector<5x128xf32> to vector<5x8xf32>
    %cst_17 = arith.constant dense<0.000000e+00> : vector<5x5xf32>
    %41 = tpu.matmul %39, %40, %cst_17 {dimension_numbers = #tpu.dot_dimension_numbers<[1], [1], [0], [0], [0, 0, 1, 0], [], []>} : vector<5x8xf32>, vector<5x8xf32>, vector<5x5xf32> -> vector<5x5xf32>
    %cst_18 = arith.constant 0.353553385 : f32
    %42 = vector.broadcast %cst_18 : f32 to vector<5x5xf32>
    %43 = arith.mulf %41, %42 : vector<5x5xf32>
    %cst_19 = arith.constant dense<0xFF800000> : vector<5xf32>
    %44 = vector.multi_reduction <maximumf>, %43, %cst_19 [1] : vector<5x5xf32> to vector<5xf32>
    %45 = vector.shape_cast %44 : vector<5xf32> to vector<5x1xf32>
    %46 = vector.broadcast %45 : vector<5x1xf32> to vector<5x5xf32>
    %47 = arith.subf %43, %46 : vector<5x5xf32>
    %48 = math.exp %47 : vector<5x5xf32>
    %cst_20 = arith.constant dense<0.000000e+00> : vector<5xf32>
    %49 = vector.multi_reduction <add>, %48, %cst_20 [1] : vector<5x5xf32> to vector<5xf32>
    %50 = vector.shape_cast %49 : vector<5xf32> to vector<5x1xf32>
    %51 = tpu.reciprocal %50 {approx = true} : vector<5x1xf32> -> vector<5x1xf32>
    %52 = vector.broadcast %51 : vector<5x1xf32> to vector<5x5xf32>
    %53 = arith.mulf %48, %52 : vector<5x5xf32>
    %54 = vector.extract_strided_slice %37 {offsets = [0, 0], sizes = [5, 8], strides = [1, 1]} : vector<5x128xf32> to vector<5x8xf32>
    %cst_21 = arith.constant dense<0.000000e+00> : vector<5x8xf32>
    %55 = tpu.matmul %53, %54, %cst_21 {dimension_numbers = #tpu.dot_dimension_numbers<[1], [0], [0], [1], [0, 0, 1, 1], [], []>} : vector<5x5xf32>, vector<5x8xf32>, vector<5x8xf32> -> vector<5x8xf32>
    %56 = arith.truncf %55 : vector<5x8xf32> to vector<5x8xbf16>
    %c0_22 = arith.constant 0 : index
    %c0_23 = arith.constant 0 : index
    %c0_24 = arith.constant 0 : index
    %57 = vector.load %arg6[%c0_22, %c0_23, %c0_24] : memref<4x8x128xbf16, #tpu.memory_space<vmem>>, vector<1x8x128xbf16>
    %58 = vector.shape_cast %57 : vector<1x8x128xbf16> to vector<8x128xbf16>
    %cst_25 = arith.constant dense<0.000000e+00> : vector<5x128xf32>
    %59 = tpu.matmul %56, %58, %cst_25 {dimension_numbers = #tpu.dot_dimension_numbers<[1], [0], [0], [1], [0, 0, 1, 1], [], []>} : vector<5x8xbf16>, vector<8x128xbf16>, vector<5x128xf32> -> vector<5x128xf32>
    %60 = arith.addf %38, %59 : vector<5x128xf32>
    %61 = vector.extract_strided_slice %35 {offsets = [0, 8], sizes = [5, 8], strides = [1, 1]} : vector<5x128xf32> to vector<5x8xf32>
    %62 = vector.extract_strided_slice %36 {offsets = [0, 8], sizes = [5, 8], strides = [1, 1]} : vector<5x128xf32> to vector<5x8xf32>
    %cst_26 = arith.constant dense<0.000000e+00> : vector<5x5xf32>
    %63 = tpu.matmul %61, %62, %cst_26 {dimension_numbers = #tpu.dot_dimension_numbers<[1], [1], [0], [0], [0, 0, 1, 0], [], []>} : vector<5x8xf32>, vector<5x8xf32>, vector<5x5xf32> -> vector<5x5xf32>
    %cst_27 = arith.constant 0.353553385 : f32
    %64 = vector.broadcast %cst_27 : f32 to vector<5x5xf32>
    %65 = arith.mulf %63, %64 : vector<5x5xf32>
    %cst_28 = arith.constant dense<0xFF800000> : vector<5xf32>
    %66 = vector.multi_reduction <maximumf>, %65, %cst_28 [1] : vector<5x5xf32> to vector<5xf32>
    %67 = vector.shape_cast %66 : vector<5xf32> to vector<5x1xf32>
    %68 = vector.broadcast %67 : vector<5x1xf32> to vector<5x5xf32>
    %69 = arith.subf %65, %68 : vector<5x5xf32>
    %70 = math.exp %69 : vector<5x5xf32>
    %cst_29 = arith.constant dense<0.000000e+00> : vector<5xf32>
    %71 = vector.multi_reduction <add>, %70, %cst_29 [1] : vector<5x5xf32> to vector<5xf32>
    %72 = vector.shape_cast %71 : vector<5xf32> to vector<5x1xf32>
    %73 = tpu.reciprocal %72 {approx = true} : vector<5x1xf32> -> vector<5x1xf32>
    %74 = vector.broadcast %73 : vector<5x1xf32> to vector<5x5xf32>
    %75 = arith.mulf %70, %74 : vector<5x5xf32>
    %76 = vector.extract_strided_slice %37 {offsets = [0, 8], sizes = [5, 8], strides = [1, 1]} : vector<5x128xf32> to vector<5x8xf32>
    %cst_30 = arith.constant dense<0.000000e+00> : vector<5x8xf32>
    %77 = tpu.matmul %75, %76, %cst_30 {dimension_numbers = #tpu.dot_dimension_numbers<[1], [0], [0], [1], [0, 0, 1, 1], [], []>} : vector<5x5xf32>, vector<5x8xf32>, vector<5x8xf32> -> vector<5x8xf32>
    %78 = arith.truncf %77 : vector<5x8xf32> to vector<5x8xbf16>
    %c1 = arith.constant 1 : index
    %c0_31 = arith.constant 0 : index
    %c0_32 = arith.constant 0 : index
    %79 = vector.load %arg6[%c1, %c0_31, %c0_32] : memref<4x8x128xbf16, #tpu.memory_space<vmem>>, vector<1x8x128xbf16>
    %80 = vector.shape_cast %79 : vector<1x8x128xbf16> to vector<8x128xbf16>
    %cst_33 = arith.constant dense<0.000000e+00> : vector<5x128xf32>
    %81 = tpu.matmul %78, %80, %cst_33 {dimension_numbers = #tpu.dot_dimension_numbers<[1], [0], [0], [1], [0, 0, 1, 1], [], []>} : vector<5x8xbf16>, vector<8x128xbf16>, vector<5x128xf32> -> vector<5x128xf32>
    %82 = arith.addf %60, %81 : vector<5x128xf32>
    %83 = vector.extract_strided_slice %35 {offsets = [0, 16], sizes = [5, 8], strides = [1, 1]} : vector<5x128xf32> to vector<5x8xf32>
    %84 = vector.extract_strided_slice %36 {offsets = [0, 16], sizes = [5, 8], strides = [1, 1]} : vector<5x128xf32> to vector<5x8xf32>
    %cst_34 = arith.constant dense<0.000000e+00> : vector<5x5xf32>
    %85 = tpu.matmul %83, %84, %cst_34 {dimension_numbers = #tpu.dot_dimension_numbers<[1], [1], [0], [0], [0, 0, 1, 0], [], []>} : vector<5x8xf32>, vector<5x8xf32>, vector<5x5xf32> -> vector<5x5xf32>
    %cst_35 = arith.constant 0.353553385 : f32
    %86 = vector.broadcast %cst_35 : f32 to vector<5x5xf32>
    %87 = arith.mulf %85, %86 : vector<5x5xf32>
    %cst_36 = arith.constant dense<0xFF800000> : vector<5xf32>
    %88 = vector.multi_reduction <maximumf>, %87, %cst_36 [1] : vector<5x5xf32> to vector<5xf32>
    %89 = vector.shape_cast %88 : vector<5xf32> to vector<5x1xf32>
    %90 = vector.broadcast %89 : vector<5x1xf32> to vector<5x5xf32>
    %91 = arith.subf %87, %90 : vector<5x5xf32>
    %92 = math.exp %91 : vector<5x5xf32>
    %cst_37 = arith.constant dense<0.000000e+00> : vector<5xf32>
    %93 = vector.multi_reduction <add>, %92, %cst_37 [1] : vector<5x5xf32> to vector<5xf32>
    %94 = vector.shape_cast %93 : vector<5xf32> to vector<5x1xf32>
    %95 = tpu.reciprocal %94 {approx = true} : vector<5x1xf32> -> vector<5x1xf32>
    %96 = vector.broadcast %95 : vector<5x1xf32> to vector<5x5xf32>
    %97 = arith.mulf %92, %96 : vector<5x5xf32>
    %98 = vector.extract_strided_slice %37 {offsets = [0, 16], sizes = [5, 8], strides = [1, 1]} : vector<5x128xf32> to vector<5x8xf32>
    %cst_38 = arith.constant dense<0.000000e+00> : vector<5x8xf32>
    %99 = tpu.matmul %97, %98, %cst_38 {dimension_numbers = #tpu.dot_dimension_numbers<[1], [0], [0], [1], [0, 0, 1, 1], [], []>} : vector<5x5xf32>, vector<5x8xf32>, vector<5x8xf32> -> vector<5x8xf32>
    %100 = arith.truncf %99 : vector<5x8xf32> to vector<5x8xbf16>
    %c2 = arith.constant 2 : index
    %c0_39 = arith.constant 0 : index
    %c0_40 = arith.constant 0 : index
    %101 = vector.load %arg6[%c2, %c0_39, %c0_40] : memref<4x8x128xbf16, #tpu.memory_space<vmem>>, vector<1x8x128xbf16>
    %102 = vector.shape_cast %101 : vector<1x8x128xbf16> to vector<8x128xbf16>
    %cst_41 = arith.constant dense<0.000000e+00> : vector<5x128xf32>
    %103 = tpu.matmul %100, %102, %cst_41 {dimension_numbers = #tpu.dot_dimension_numbers<[1], [0], [0], [1], [0, 0, 1, 1], [], []>} : vector<5x8xbf16>, vector<8x128xbf16>, vector<5x128xf32> -> vector<5x128xf32>
    %104 = arith.addf %82, %103 : vector<5x128xf32>
    %105 = vector.extract_strided_slice %35 {offsets = [0, 24], sizes = [5, 8], strides = [1, 1]} : vector<5x128xf32> to vector<5x8xf32>
    %106 = vector.extract_strided_slice %36 {offsets = [0, 24], sizes = [5, 8], strides = [1, 1]} : vector<5x128xf32> to vector<5x8xf32>
    %cst_42 = arith.constant dense<0.000000e+00> : vector<5x5xf32>
    %107 = tpu.matmul %105, %106, %cst_42 {dimension_numbers = #tpu.dot_dimension_numbers<[1], [1], [0], [0], [0, 0, 1, 0], [], []>} : vector<5x8xf32>, vector<5x8xf32>, vector<5x5xf32> -> vector<5x5xf32>
    %cst_43 = arith.constant 0.353553385 : f32
    %108 = vector.broadcast %cst_43 : f32 to vector<5x5xf32>
    %109 = arith.mulf %107, %108 : vector<5x5xf32>
    %cst_44 = arith.constant dense<0xFF800000> : vector<5xf32>
    %110 = vector.multi_reduction <maximumf>, %109, %cst_44 [1] : vector<5x5xf32> to vector<5xf32>
    %111 = vector.shape_cast %110 : vector<5xf32> to vector<5x1xf32>
    %112 = vector.broadcast %111 : vector<5x1xf32> to vector<5x5xf32>
    %113 = arith.subf %109, %112 : vector<5x5xf32>
    %114 = math.exp %113 : vector<5x5xf32>
    %cst_45 = arith.constant dense<0.000000e+00> : vector<5xf32>
    %115 = vector.multi_reduction <add>, %114, %cst_45 [1] : vector<5x5xf32> to vector<5xf32>
    %116 = vector.shape_cast %115 : vector<5xf32> to vector<5x1xf32>
    %117 = tpu.reciprocal %116 {approx = true} : vector<5x1xf32> -> vector<5x1xf32>
    %118 = vector.broadcast %117 : vector<5x1xf32> to vector<5x5xf32>
    %119 = arith.mulf %114, %118 : vector<5x5xf32>
    %120 = vector.extract_strided_slice %37 {offsets = [0, 24], sizes = [5, 8], strides = [1, 1]} : vector<5x128xf32> to vector<5x8xf32>
    %cst_46 = arith.constant dense<0.000000e+00> : vector<5x8xf32>
    %121 = tpu.matmul %119, %120, %cst_46 {dimension_numbers = #tpu.dot_dimension_numbers<[1], [0], [0], [1], [0, 0, 1, 1], [], []>} : vector<5x5xf32>, vector<5x8xf32>, vector<5x8xf32> -> vector<5x8xf32>
    %122 = arith.truncf %121 : vector<5x8xf32> to vector<5x8xbf16>
    %c3 = arith.constant 3 : index
    %c0_47 = arith.constant 0 : index
    %c0_48 = arith.constant 0 : index
    %123 = vector.load %arg6[%c3, %c0_47, %c0_48] : memref<4x8x128xbf16, #tpu.memory_space<vmem>>, vector<1x8x128xbf16>
    %124 = vector.shape_cast %123 : vector<1x8x128xbf16> to vector<8x128xbf16>
    %cst_49 = arith.constant dense<0.000000e+00> : vector<5x128xf32>
    %125 = tpu.matmul %122, %124, %cst_49 {dimension_numbers = #tpu.dot_dimension_numbers<[1], [0], [0], [1], [0, 0, 1, 1], [], []>} : vector<5x8xbf16>, vector<8x128xbf16>, vector<5x128xf32> -> vector<5x128xf32>
    %126 = arith.addf %104, %125 : vector<5x128xf32>
    %127 = arith.addf %2, %126 : vector<5x128xf32>
    %c0_50 = arith.constant 0 : index
    %c0_51 = arith.constant 0 : index
    %128 = vector.load %arg7[%c0_50, %c0_51] : memref<1x128xf32, #tpu.memory_space<vmem>>, vector<1x128xf32>
    %129 = vector.broadcast %128 : vector<1x128xf32> to vector<5x128xf32>
    %130 = arith.addf %127, %129 : vector<5x128xf32>
    %c0_52 = arith.constant 0 : index
    %c0_53 = arith.constant 0 : index
    %131 = vector.load %arg8[%c0_52, %c0_53] : memref<1x128xf32, #tpu.memory_space<vmem>>, vector<1x128xf32>
    %c0_54 = arith.constant 0 : index
    %c0_55 = arith.constant 0 : index
    %132 = vector.load %arg9[%c0_54, %c0_55] : memref<1x128xf32, #tpu.memory_space<vmem>>, vector<1x128xf32>
    %cst_56 = arith.constant dense<0.000000e+00> : vector<5xf32>
    %133 = vector.multi_reduction <add>, %130, %cst_56 [1] : vector<5x128xf32> to vector<5xf32>
    %134 = vector.shape_cast %133 : vector<5xf32> to vector<5x1xf32>
    %135 = arith.mulf %130, %130 : vector<5x128xf32>
    %cst_57 = arith.constant dense<0.000000e+00> : vector<5xf32>
    %136 = vector.multi_reduction <add>, %135, %cst_57 [1] : vector<5x128xf32> to vector<5xf32>
    %137 = vector.shape_cast %136 : vector<5xf32> to vector<5x1xf32>
    %cst_58 = arith.constant 3.125000e-02 : f32
    %138 = vector.broadcast %cst_58 : f32 to vector<5x1xf32>
    %139 = arith.mulf %134, %138 : vector<5x1xf32>
    %cst_59 = arith.constant 3.125000e-02 : f32
    %140 = vector.broadcast %cst_59 : f32 to vector<5x1xf32>
    %141 = arith.mulf %137, %140 : vector<5x1xf32>
    %142 = arith.mulf %139, %139 : vector<5x1xf32>
    %143 = arith.subf %141, %142 : vector<5x1xf32>
    %cst_60 = arith.constant 0.000000e+00 : f32
    %144 = vector.broadcast %cst_60 : f32 to vector<5x1xf32>
    %145 = arith.maximumf %143, %144 : vector<5x1xf32>
    %cst_61 = arith.constant 9.99999974E-6 : f32
    %146 = vector.broadcast %cst_61 : f32 to vector<5x1xf32>
    %147 = arith.addf %145, %146 : vector<5x1xf32>
    %148 = math.rsqrt %147 : vector<5x1xf32>
    %149 = vector.broadcast %139 : vector<5x1xf32> to vector<5x128xf32>
    %150 = arith.subf %130, %149 : vector<5x128xf32>
    %151 = vector.broadcast %148 : vector<5x1xf32> to vector<5x128xf32>
    %152 = arith.mulf %150, %151 : vector<5x128xf32>
    %153 = vector.broadcast %131 : vector<1x128xf32> to vector<5x128xf32>
    %154 = arith.mulf %152, %153 : vector<5x128xf32>
    %155 = vector.broadcast %132 : vector<1x128xf32> to vector<5x128xf32>
    %156 = arith.addf %154, %155 : vector<5x128xf32>
    %157 = arith.truncf %156 : vector<5x128xf32> to vector<5x128xbf16>
    %c0_62 = arith.constant 0 : index
    %c0_63 = arith.constant 0 : index
    %158 = vector.load %arg10[%c0_62, %c0_63] : memref<128x128xbf16, #tpu.memory_space<vmem>>, vector<128x128xbf16>
    %cst_64 = arith.constant dense<0.000000e+00> : vector<5x128xf32>
    %159 = tpu.matmul %157, %158, %cst_64 {dimension_numbers = #tpu.dot_dimension_numbers<[1], [0], [0], [1], [0, 0, 1, 1], [], []>} : vector<5x128xbf16>, vector<128x128xbf16>, vector<5x128xf32> -> vector<5x128xf32>
    %c0_65 = arith.constant 0 : index
    %c0_66 = arith.constant 0 : index
    %160 = vector.load %arg11[%c0_65, %c0_66] : memref<1x128xf32, #tpu.memory_space<vmem>>, vector<1x128xf32>
    %161 = vector.broadcast %160 : vector<1x128xf32> to vector<5x128xf32>
    %162 = arith.addf %159, %161 : vector<5x128xf32>
    %cst_67 = arith.constant 1.702000e+00 : f32
    %163 = vector.broadcast %cst_67 : f32 to vector<5x128xf32>
    %164 = arith.mulf %163, %162 : vector<5x128xf32>
    %165 = arith.negf %164 : vector<5x128xf32>
    %166 = math.exp %165 : vector<5x128xf32>
    %cst_68 = arith.constant 1.000000e+00 : f32
    %167 = vector.broadcast %cst_68 : f32 to vector<5x128xf32>
    %168 = arith.addf %167, %166 : vector<5x128xf32>
    %169 = arith.divf %167, %168 : vector<5x128xf32>
    %170 = arith.mulf %162, %169 : vector<5x128xf32>
    %171 = arith.truncf %170 : vector<5x128xf32> to vector<5x128xbf16>
    %c0_69 = arith.constant 0 : index
    %c0_70 = arith.constant 0 : index
    %172 = vector.load %arg12[%c0_69, %c0_70] : memref<128x128xbf16, #tpu.memory_space<vmem>>, vector<128x128xbf16>
    %cst_71 = arith.constant dense<0.000000e+00> : vector<5x128xf32>
    %173 = tpu.matmul %171, %172, %cst_71 {dimension_numbers = #tpu.dot_dimension_numbers<[1], [0], [0], [1], [0, 0, 1, 1], [], []>} : vector<5x128xbf16>, vector<128x128xbf16>, vector<5x128xf32> -> vector<5x128xf32>
    %c0_72 = arith.constant 0 : index
    %c0_73 = arith.constant 0 : index
    %174 = vector.load %arg13[%c0_72, %c0_73] : memref<1x128xf32, #tpu.memory_space<vmem>>, vector<1x128xf32>
    %175 = vector.broadcast %174 : vector<1x128xf32> to vector<5x128xf32>
    %176 = arith.addf %173, %175 : vector<5x128xf32>
    %177 = arith.addf %130, %176 : vector<5x128xf32>
    %178 = arith.truncf %177 : vector<5x128xf32> to vector<5x128xbf16>
    %c0_74 = arith.constant 0 : index
    %c0_75 = arith.constant 0 : index
    %c0_76 = arith.constant 0 : index
    %179 = vector.load %arg14[%c0_74, %c0_75, %c0_76] : memref<1x5x128xbf16, #tpu.memory_space<vmem>>, vector<1x5x128xbf16>
    %180 = vector.shape_cast %179 : vector<1x5x128xbf16> to vector<5x128xbf16>
    %181 = vector.shape_cast %178 : vector<5x128xbf16> to vector<1x5x128xbf16>
    tpu.vector_store %arg14[%c0_74, %c0_75, %c0_76], %181 {strides = array<i32>} : memref<1x5x128xbf16, #tpu.memory_space<vmem>>, vector<1x5x128xbf16>,
    return
  }
  func.func @transform_0(%arg0: i32) -> (i32, i32, i32) {
    %c0_i32 = arith.constant 0 : i32
    %c0_i32_0 = arith.constant 0 : i32
    %c0_i32_1 = arith.constant 0 : i32
    return %arg0, %c0_i32, %c0_i32_0 : i32, i32, i32
  }
  func.func @transform_1(%arg0: i32) -> (i32, i32) {
    %c0_i32 = arith.constant 0 : i32
    %c0_i32_0 = arith.constant 0 : i32
    %c0_i32_1 = arith.constant 0 : i32
    return %c0_i32, %c0_i32_0 : i32, i32
  }
  func.func @transform_2(%arg0: i32) -> (i32, i32) {
    %c0_i32 = arith.constant 0 : i32
    %c0_i32_0 = arith.constant 0 : i32
    %c0_i32_1 = arith.constant 0 : i32
    return %c0_i32, %c0_i32_0 : i32, i32
  }
  func.func @transform_3(%arg0: i32) -> (i32, i32) {
    %c0_i32 = arith.constant 0 : i32
    %c0_i32_0 = arith.constant 0 : i32
    %c0_i32_1 = arith.constant 0 : i32
    return %c0_i32, %c0_i32_0 : i32, i32
  }
  func.func @transform_4(%arg0: i32) -> (i32, i32) {
    %c0_i32 = arith.constant 0 : i32
    %c0_i32_0 = arith.constant 0 : i32
    %c0_i32_1 = arith.constant 0 : i32
    return %c0_i32, %c0_i32_0 : i32, i32
  }
  func.func @transform_5(%arg0: i32) -> (i32, i32, i32) {
    %c0_i32 = arith.constant 0 : i32
    %c0_i32_0 = arith.constant 0 : i32
    %c0_i32_1 = arith.constant 0 : i32
    %c0_i32_2 = arith.constant 0 : i32
    return %c0_i32, %c0_i32_0, %c0_i32_1 : i32, i32, i32
  }
  func.func @transform_6(%arg0: i32) -> (i32, i32) {
    %c0_i32 = arith.constant 0 : i32
    %c0_i32_0 = arith.constant 0 : i32
    %c0_i32_1 = arith.constant 0 : i32
    return %c0_i32, %c0_i32_0 : i32, i32
  }
  func.func @transform_7(%arg0: i32) -> (i32, i32) {
    %c0_i32 = arith.constant 0 : i32
    %c0_i32_0 = arith.constant 0 : i32
    %c0_i32_1 = arith.constant 0 : i32
    return %c0_i32, %c0_i32_0 : i32, i32
  }
  func.func @transform_8(%arg0: i32) -> (i32, i32) {
    %c0_i32 = arith.constant 0 : i32
    %c0_i32_0 = arith.constant 0 : i32
    %c0_i32_1 = arith.constant 0 : i32
    return %c0_i32, %c0_i32_0 : i32, i32
  }
  func.func @transform_9(%arg0: i32) -> (i32, i32) {
    %c0_i32 = arith.constant 0 : i32
    %c0_i32_0 = arith.constant 0 : i32
    %c0_i32_1 = arith.constant 0 : i32
    return %c0_i32, %c0_i32_0 : i32, i32
  }
  func.func @transform_10(%arg0: i32) -> (i32, i32) {
    %c0_i32 = arith.constant 0 : i32
    %c0_i32_0 = arith.constant 0 : i32
    %c0_i32_1 = arith.constant 0 : i32
    return %c0_i32, %c0_i32_0 : i32, i32
  }
  func.func @transform_11(%arg0: i32) -> (i32, i32) {
    %c0_i32 = arith.constant 0 : i32
    %c0_i32_0 = arith.constant 0 : i32
    %c0_i32_1 = arith.constant 0 : i32
    return %c0_i32, %c0_i32_0 : i32, i32
  }
  func.func @transform_12(%arg0: i32) -> (i32, i32) {
    %c0_i32 = arith.constant 0 : i32
    %c0_i32_0 = arith.constant 0 : i32
    %c0_i32_1 = arith.constant 0 : i32
    return %c0_i32, %c0_i32_0 : i32, i32
  }
  func.func @transform_13(%arg0: i32) -> (i32, i32, i32) {
    %c0_i32 = arith.constant 0 : i32
    %c0_i32_0 = arith.constant 0 : i32
    %c0_i32_1 = arith.constant 0 : i32
    return %arg0, %c0_i32, %c0_i32_0 : i32, i32, i32
  }
}

module attributes {stable_mosaic.version = 11 : i64} {
  func.func @_head_kernel(%arg0: memref<2x128xbf16, #tpu.memory_space<vmem>>, %arg1: memref<1x128xf32, #tpu.memory_space<vmem>>, %arg2: memref<1x128xf32, #tpu.memory_space<vmem>>, %arg3: memref<128x128xbf16, #tpu.memory_space<vmem>>, %arg4: memref<1x128xf32, #tpu.memory_space<vmem>>, %arg5: memref<2x128xf32, #tpu.memory_space<vmem>>) attributes {dimension_semantics = [], scalar_prefetch = 0 : i64, scratch_operands = 0 : i64, tpu.core_type = #tpu.core_type<tc>} {
    %c0 = arith.constant 0 : index
    %c0_0 = arith.constant 0 : index
    %0 = vector.load %arg0[%c0, %c0_0] : memref<2x128xbf16, #tpu.memory_space<vmem>>, vector<2x128xbf16>
    %1 = arith.extf %0 : vector<2x128xbf16> to vector<2x128xf32>
    %c0_1 = arith.constant 0 : index
    %c0_2 = arith.constant 0 : index
    %2 = vector.load %arg1[%c0_1, %c0_2] : memref<1x128xf32, #tpu.memory_space<vmem>>, vector<1x128xf32>
    %c0_3 = arith.constant 0 : index
    %c0_4 = arith.constant 0 : index
    %3 = vector.load %arg2[%c0_3, %c0_4] : memref<1x128xf32, #tpu.memory_space<vmem>>, vector<1x128xf32>
    %cst = arith.constant dense<0.000000e+00> : vector<2xf32>
    %4 = vector.multi_reduction <add>, %1, %cst [1] : vector<2x128xf32> to vector<2xf32>
    %5 = vector.shape_cast %4 : vector<2xf32> to vector<2x1xf32>
    %6 = arith.mulf %1, %1 : vector<2x128xf32>
    %cst_5 = arith.constant dense<0.000000e+00> : vector<2xf32>
    %7 = vector.multi_reduction <add>, %6, %cst_5 [1] : vector<2x128xf32> to vector<2xf32>
    %8 = vector.shape_cast %7 : vector<2xf32> to vector<2x1xf32>
    %cst_6 = arith.constant 3.125000e-02 : f32
    %9 = vector.broadcast %cst_6 : f32 to vector<2x1xf32>
    %10 = arith.mulf %5, %9 : vector<2x1xf32>
    %cst_7 = arith.constant 3.125000e-02 : f32
    %11 = vector.broadcast %cst_7 : f32 to vector<2x1xf32>
    %12 = arith.mulf %8, %11 : vector<2x1xf32>
    %13 = arith.mulf %10, %10 : vector<2x1xf32>
    %14 = arith.subf %12, %13 : vector<2x1xf32>
    %cst_8 = arith.constant 0.000000e+00 : f32
    %15 = vector.broadcast %cst_8 : f32 to vector<2x1xf32>
    %16 = arith.maximumf %14, %15 : vector<2x1xf32>
    %cst_9 = arith.constant 9.99999974E-6 : f32
    %17 = vector.broadcast %cst_9 : f32 to vector<2x1xf32>
    %18 = arith.addf %16, %17 : vector<2x1xf32>
    %19 = math.rsqrt %18 : vector<2x1xf32>
    %20 = vector.broadcast %10 : vector<2x1xf32> to vector<2x128xf32>
    %21 = arith.subf %1, %20 : vector<2x128xf32>
    %22 = vector.broadcast %19 : vector<2x1xf32> to vector<2x128xf32>
    %23 = arith.mulf %21, %22 : vector<2x128xf32>
    %24 = vector.broadcast %2 : vector<1x128xf32> to vector<2x128xf32>
    %25 = arith.mulf %23, %24 : vector<2x128xf32>
    %26 = vector.broadcast %3 : vector<1x128xf32> to vector<2x128xf32>
    %27 = arith.addf %25, %26 : vector<2x128xf32>
    %28 = arith.truncf %27 : vector<2x128xf32> to vector<2x128xbf16>
    %c0_10 = arith.constant 0 : index
    %c0_11 = arith.constant 0 : index
    %29 = vector.load %arg3[%c0_10, %c0_11] : memref<128x128xbf16, #tpu.memory_space<vmem>>, vector<128x128xbf16>
    %cst_12 = arith.constant dense<0.000000e+00> : vector<2x128xf32>
    %30 = tpu.matmul %28, %29, %cst_12 {dimension_numbers = #tpu.dot_dimension_numbers<[1], [0], [0], [1], [0, 0, 1, 1], [], []>} : vector<2x128xbf16>, vector<128x128xbf16>, vector<2x128xf32> -> vector<2x128xf32>
    %c0_13 = arith.constant 0 : index
    %c0_14 = arith.constant 0 : index
    %31 = vector.load %arg4[%c0_13, %c0_14] : memref<1x128xf32, #tpu.memory_space<vmem>>, vector<1x128xf32>
    %32 = vector.broadcast %31 : vector<1x128xf32> to vector<2x128xf32>
    %33 = arith.addf %30, %32 : vector<2x128xf32>
    %c0_15 = arith.constant 0 : index
    %c0_16 = arith.constant 0 : index
    %34 = vector.load %arg5[%c0_15, %c0_16] : memref<2x128xf32, #tpu.memory_space<vmem>>, vector<2x128xf32>
    tpu.vector_store %arg5[%c0_15, %c0_16], %33 {strides = array<i32>} : memref<2x128xf32, #tpu.memory_space<vmem>>, vector<2x128xf32>,
    return
  }
}

</mosaic_0001>

<llo_original>
// kernel: _lambda_.4
$region0: #{_lambda_.4}
  #allocation0 [shape = 'u32[]', space=smem, size = 0x4, offset = 0x4, fixed_abs, tag = 'smem constant byte address 0x4 - core index']
  #allocation1 [shape = 'u32[144,128]{1,0:T(1,128)}', space=vmem, size = 0x12000, scoped, tag = 'internal scratch']
  %s0 = inlined_call_operand.vmem [shape: bf16[2,5,192], index: 0, kind: input, shape index: {}]
  %s1 = inlined_call_operand.vmem [shape: bf16[192,128], index: 1, kind: input, shape index: {}]
  %s2 = inlined_call_operand.vmem [shape: f32[5,128], index: 2, kind: input, shape index: {}]
  %s3 = inlined_call_operand.vmem [shape: f32[1,128], index: 3, kind: input, shape index: {}]
  %s4 = inlined_call_operand.vmem [shape: f32[1,128], index: 4, kind: input, shape index: {}]
  %s5 = inlined_call_operand.vmem [shape: bf16[2,5,128], index: 5, kind: output, shape index: {}]
  %s6 = sld [smem:[#allocation0]]
  $region53: #{_lambda_.4} parent=0
    _
  %s8 = ssub.s32 1, %s6
  %s9 = scalar_select 0, %s8, %s6
  loop: start=0, step=1, limit=4
  $region2: #{_lambda_.4} parent=0 // loop_pre_header
    _
  $region3: #{_lambda_.4} parent=0 // loop_header
    %s11 = sphi 0, %s15
    %p12 = scmp.ge.s32.totalorder %s11, 4
    %s21 = sphi 0, %s23
    %s24 = sphi 0, %s21
    %s25 = sphi 0, %s24
    %s41 = sphi 0, %s25
    %s45 = sphi 0, %s45
    %s47 = sphi 0, %s45
    %s48 = sphi 0, %s47
    %s62 = sphi 0, %s48
    %s66 = sphi 0, %s66
    %s68 = sphi 0, %s66
    %s69 = sphi 0, %s68
    %s83 = sphi 0, %s69
    %s87 = sphi 0, %s87
    %s89 = sphi 0, %s87
    %s90 = sphi 0, %s89
    %s104 = sphi 0, %s90
    %s108 = sphi 0, %s108
    %s110 = sphi 0, %s108
    %s111 = sphi 0, %s110
    %s125 = sphi 0, %s111
    %s131 = sphi 0, %s133
    %s134 = sphi 0, %s131
    %s135 = sphi 0, %s134
    %s151 = sphi 0, %s135
  $region4: #{_lambda_.4} parent=0 // loop_header_branch
    %14 = sbr.rel (%p12) target = $region8
  $region5: #{_lambda_.4} parent=0 // loop_body
    %s16 = ssub.s32 %s11, 1
    %s17 = ssub.s32 %s11, 2
    %s18 = sadd.s32 %s11, 1
    %s19 = ssub.s32 %s11, %s18
    %p20 = scmp.eq.s32.totalorder %s19, 0
    %s22 = sadd.s32 %s21, 1
    %s23 = scalar_select %p20, %s21, %s22
    %p26 = pneg %p20
    %p27 = scmp.eq.s32.totalorder %s11, 1
    %p28 = por %p26, %p27
    %p29 = scmp.ne.s32.totalorder %s21, %s24
    %p30 = scmp.eq.s32.totalorder %s11, 0
    %p31 = por %p29, %p30
    %p32 = scmp.ne.s32.totalorder %s21, %s24
    %p33 = scmp.eq.s32.totalorder %s16, 1
    %p34 = por %p32, %p33
    %p35 = scmp.ne.s32.totalorder %s24, %s25
    %p36 = scmp.eq.s32.totalorder %s16, 0
    %p37 = por %p35, %p36
    %p38 = scmp.ne.s32.totalorder %s24, %s25
    %p39 = scmp.eq.s32.totalorder %s17, 1
    %p40 = por %p38, %p39
    %p42 = scmp.ne.s32.totalorder %s25, %s41
    %p43 = scmp.eq.s32.totalorder %s17, 0
    %p44 = por %p42, %p43
    %s46 = sadd.s32 %s45, 1
    %p49 = scmp.eq.s32.totalorder %s11, 1
    %p50 = scmp.ne.s32.totalorder %s45, %s47
    %p51 = scmp.eq.s32.totalorder %s11, 0
    %p52 = por %p50, %p51
    %p53 = scmp.ne.s32.totalorder %s45, %s47
    %p54 = scmp.eq.s32.totalorder %s16, 1
    %p55 = por %p53, %p54
    %p56 = scmp.ne.s32.totalorder %s47, %s48
    %p57 = scmp.eq.s32.totalorder %s16, 0
    %p58 = por %p56, %p57
    %p59 = scmp.ne.s32.totalorder %s47, %s48
    %p60 = scmp.eq.s32.totalorder %s17, 1
    %p61 = por %p59, %p60
    %p63 = scmp.ne.s32.totalorder %s48, %s62
    %p64 = scmp.eq.s32.totalorder %s17, 0
    %p65 = por %p63, %p64
    %s67 = sadd.s32 %s66, 1
    %p70 = scmp.eq.s32.totalorder %s11, 1
    %p71 = scmp.ne.s32.totalorder %s66, %s68
    %p72 = scmp.eq.s32.totalorder %s11, 0
    %p73 = por %p71, %p72
    %p74 = scmp.ne.s32.totalorder %s66, %s68
    %p75 = scmp.eq.s32.totalorder %s16, 1
    %p76 = por %p74, %p75
    %p77 = scmp.ne.s32.totalorder %s68, %s69
    %p78 = scmp.eq.s32.totalorder %s16, 0
    %p79 = por %p77, %p78
    %p80 = scmp.ne.s32.totalorder %s68, %s69
    %p81 = scmp.eq.s32.totalorder %s17, 1
    %p82 = por %p80, %p81
    %p84 = scmp.ne.s32.totalorder %s69, %s83
    %p85 = scmp.eq.s32.totalorder %s17, 0
    %p86 = por %p84, %p85
    %s88 = sadd.s32 %s87, 1
    %p91 = scmp.eq.s32.totalorder %s11, 1
    %p92 = scmp.ne.s32.totalorder %s87, %s89
    %p93 = scmp.eq.s32.totalorder %s11, 0
    %p94 = por %p92, %p93
    %p95 = scmp.ne.s32.totalorder %s87, %s89
    %p96 = scmp.eq.s32.totalorder %s16, 1
    %p97 = por %p95, %p96
    %p98 = scmp.ne.s32.totalorder %s89, %s90
    %p99 = scmp.eq.s32.totalorder %s16, 0
    %p100 = por %p98, %p99
    %p101 = scmp.ne.s32.totalorder %s89, %s90
    %p102 = scmp.eq.s32.totalorder %s17, 1
    %p103 = por %p101, %p102
    %p105 = scmp.ne.s32.totalorder %s90, %s104
    %p106 = scmp.eq.s32.totalorder %s17, 0
    %p107 = por %p105, %p106
    %s109 = sadd.s32 %s108, 1
    %p112 = scmp.eq.s32.totalorder %s11, 1
    %p113 = scmp.ne.s32.totalorder %s108, %s110
    %p114 = scmp.eq.s32.totalorder %s11, 0
    %p115 = por %p113, %p114
    %p116 = scmp.ne.s32.totalorder %s108, %s110
    %p117 = scmp.eq.s32.totalorder %s16, 1
    %p118 = por %p116, %p117
    %p119 = scmp.ne.s32.totalorder %s110, %s111
    %p120 = scmp.eq.s32.totalorder %s16, 0
    %p121 = por %p119, %p120
    %p122 = scmp.ne.s32.totalorder %s110, %s111
    %p123 = scmp.eq.s32.totalorder %s17, 1
    %p124 = por %p122, %p123
    %p126 = scmp.ne.s32.totalorder %s111, %s125
    %p127 = scmp.eq.s32.totalorder %s17, 0
    %p128 = por %p126, %p127
    %s129 = ssub.s32 %s11, %s18
    %p130 = scmp.eq.s32.totalorder %s129, 0
    %s132 = sadd.s32 %s131, 1
    %s133 = scalar_select %p130, %s131, %s132
    %p136 = pneg %p130
    %p137 = scmp.eq.s32.totalorder %s11, 1
    %p138 = por %p136, %p137
    %p139 = scmp.ne.s32.totalorder %s131, %s134
    %p140 = scmp.eq.s32.totalorder %s11, 0
    %p141 = por %p139, %p140
    %p142 = scmp.ne.s32.totalorder %s131, %s134
    %p143 = scmp.eq.s32.totalorder %s16, 1
    %p144 = por %p142, %p143
    %p145 = scmp.ne.s32.totalorder %s134, %s135
    %p146 = scmp.eq.s32.totalorder %s16, 0
    %p147 = por %p145, %p146
    %p148 = scmp.ne.s32.totalorder %s134, %s135
    %p149 = scmp.eq.s32.totalorder %s17, 1
    %p150 = por %p148, %p149
    %p152 = scmp.ne.s32.totalorder %s135, %s151
    %p153 = scmp.eq.s32.totalorder %s17, 0
    %p154 = por %p152, %p153
    %p155 = scmp.le.s32.totalorder 1, %s11
    %p156 = scmp.lt.s32.totalorder %s11, 3
    %p157 = pnand %p155, %p156
    %p158 = pneg %p157
    // Predicated region
    $region9: #{_lambda_.4} parent=5 // pred_check
      _
    $region10: #{_lambda_.4} parent=5 // pred_check_branch
      %160 = sbr.rel (%p157) target = $region12
    $region11: #{_lambda_.4} parent=5 // pred_region
      %s161 = ssub.s32 %s11, 1
      // Predicated region
      $region13: #{_lambda_.4} parent=11 // pred_check
        %p162 = pneg %p58
      $region14: #{_lambda_.4} parent=11 // pred_check_branch
        %164 = sbr.rel (%p162) target = $region16
      $region15: #{_lambda_.4} parent=11 // pred_region
        _
      $region16: #{_lambda_.4} parent=11 // pred_fallthru
        _
      // Predicated region
      $region17: #{_lambda_.4} parent=11 // pred_check
        %p165 = pneg %p79
      $region18: #{_lambda_.4} parent=11 // pred_check_branch
        %167 = sbr.rel (%p165) target = $region20
      $region19: #{_lambda_.4} parent=11 // pred_region
        _
      $region20: #{_lambda_.4} parent=11 // pred_fallthru
        _
      // Predicated region
      $region21: #{_lambda_.4} parent=11 // pred_check
        %p168 = pneg %p100
      $region22: #{_lambda_.4} parent=11 // pred_check_branch
        %170 = sbr.rel (%p168) target = $region24
      $region23: #{_lambda_.4} parent=11 // pred_region
        _
      $region24: #{_lambda_.4} parent=11 // pred_fallthru
        _
      // Predicated region
      $region25: #{_lambda_.4} parent=11 // pred_check
        %p171 = pneg %p121
      $region26: #{_lambda_.4} parent=11 // pred_check_branch
        %173 = sbr.rel (%p171) target = $region28
      $region27: #{_lambda_.4} parent=11 // pred_region
        _
      $region28: #{_lambda_.4} parent=11 // pred_fallthru
        _
    $region12: #{_lambda_.4} parent=5 // pred_fallthru
      _
    %p174 = scmp.lt.s32.totalorder %s11, 2
    // Predicated region
    $region29: #{_lambda_.4} parent=5 // pred_check
      %p175 = pneg %p174
    $region30: #{_lambda_.4} parent=5 // pred_check_branch
      %177 = sbr.rel (%p175) target = $region32
    $region31: #{_lambda_.4} parent=5 // pred_region
      // Predicated region
      $region33: #{_lambda_.4} parent=31 // pred_check
        %p178 = pneg %p31
      $region34: #{_lambda_.4} parent=31 // pred_check_branch
        %180 = sbr.rel (%p178) target = $region36
      $region35: #{_lambda_.4} parent=31 // pred_region
        %p181 = scmp.lt.s32.totalorder %s11, 1
        %s182 = scalar_select %p181, %s11, 1
        %s183 = smul.addr %s182, 2
        %s184 = smul.addr %s183, 4
        %s185 = scalar_lea.vmem %s0, %s184
      $region36: #{_lambda_.4} parent=31 // pred_fallthru
        _
    $region32: #{_lambda_.4} parent=5 // pred_fallthru
      _
    %p186 = scmp.le.s32.totalorder 1, %s11
    %p187 = scmp.lt.s32.totalorder %s11, 3
    %p188 = pnand %p186, %p187
    %p189 = pneg %p188
    // Predicated region
    $region37: #{_lambda_.4} parent=5 // pred_check
      _
    $region38: #{_lambda_.4} parent=5 // pred_check_branch
      %191 = sbr.rel (%p188) target = $region40
    $region39: #{_lambda_.4} parent=5 // pred_region
      %s192 = ssub.s32 %s11, 1
      %p193 = scmp.lt.s32.totalorder %s16, 1
      %s194 = scalar_select %p193, %s16, 1
      %s195 = smul.addr %s194, 2
      %s196 = smul.addr %s195, 4
      %s197 = scalar_lea.vmem %s0, %s196
      %p198 = pneg %p37
      %p199 = pneg %p34
      %p200 = pneg %p58
      %p201 = pneg %p55
      %p202 = pneg %p79
      %p203 = pneg %p76
      %p204 = pneg %p100
      %p205 = pneg %p97
      %p206 = pneg %p121
      %p207 = pneg %p118
      %p208 = pneg %p147
      %p209 = pneg %p144
      %p210 = scmp.lt.s32.totalorder %s16, 1
      %s211 = scalar_select %p210, %s16, 1
      %s212 = smul.addr %s211, 4
      %s213 = scalar_lea.vmem %s5, %s212
      %p214 = scmp.lt.s32.totalorder %s16, 1
      %s215 = scalar_select %p214, %s16, 1
      %s216 = smul.addr %s215, 2
      %s217 = smul.addr %s216, 4
      %s218 = scalar_lea.vmem %s0, %s217
      %p219 = scmp.lt.s32.totalorder %s16, 1
      %s220 = scalar_select %p219, %s16, 1
      %s221 = smul.addr %s220, 4
      %s222 = scalar_lea.vmem %s5, %s221
      %v224 = vld [vmem:[%s218] sm:$0x77]
      %v225 = vld [vmem:[%s1] sm:$0xf]
      %v226 = vld [vmem:[%s1 + $0x4] sm:$0xf]
      %v227 = vld [vmem:[%s1 + $0x8] sm:$0xf]
      %v228 = vld [vmem:[%s1 + $0xc] sm:$0xf]
      %v229 = vld [vmem:[%s1 + $0x10] sm:$0xf]
      %v230 = vld [vmem:[%s1 + $0x14] sm:$0xf]
      %v231 = vld [vmem:[%s1 + $0x18] sm:$0xf]
      %v232 = vld [vmem:[%s1 + $0x1c] sm:$0xf]
      %v233 = vld [vmem:[%s1 + $0x20] sm:$0xf]
      %v234 = vld [vmem:[%s1 + $0x24] sm:$0xf]
      %v235 = vld [vmem:[%s1 + $0x28] sm:$0xf]
      %v236 = vld [vmem:[%s1 + $0x2c] sm:$0xf]
      %v237 = vld [vmem:[%s1 + $0x30] sm:$0xf]
      %v238 = vld [vmem:[%s1 + $0x34] sm:$0xf]
      %v239 = vld [vmem:[%s1 + $0x38] sm:$0xf]
      %v240 = vld [vmem:[%s1 + $0x3c] sm:$0xf]
      %v241 = vld [vmem:[%s1 + $0x40] sm:$0xf]
      %v242 = vld [vmem:[%s1 + $0x44] sm:$0xf]
      %v243 = vld [vmem:[%s1 + $0x48] sm:$0xf]
      %v244 = vld [vmem:[%s1 + $0x4c] sm:$0xf]
      %v245 = vld [vmem:[%s1 + $0x50] sm:$0xf]
      %v246 = vld [vmem:[%s1 + $0x54] sm:$0xf]
      %v247 = vld [vmem:[%s1 + $0x58] sm:$0xf]
      %v248 = vld [vmem:[%s1 + $0x5c] sm:$0xf]
      %v249 = vld [vmem:[%s2] sm:$0x1f]
      %v251 = vunpack.c.l.b16 %v224
      %v252 = vunpack.c.h.b16 %v224
      %v253 = vpack.c.b16 %v251, %v251
      %v254 = vpack.c.b16 %v252, %v252
      %v280 = vunpack.c.l.b16 %v225
      %v281 = vunpack.c.l.b16 %v226
      %v282 = vunpack.c.l.b16 %v227
      %v283 = vunpack.c.l.b16 %v228
      %v284 = vunpack.c.l.b16 %v229
      %v285 = vunpack.c.l.b16 %v230
      %v286 = vunpack.c.l.b16 %v231
      %v287 = vunpack.c.l.b16 %v232
      %v288 = vunpack.c.l.b16 %v233
      %v289 = vunpack.c.l.b16 %v234
      %v290 = vunpack.c.l.b16 %v235
      %v291 = vunpack.c.l.b16 %v236
      %v292 = vunpack.c.l.b16 %v237
      %v293 = vunpack.c.l.b16 %v238
      %v294 = vunpack.c.l.b16 %v239
      %v295 = vunpack.c.l.b16 %v240
      %v296 = vunpack.c.l.b16 %v241
      %v297 = vunpack.c.l.b16 %v242
      %v298 = vunpack.c.l.b16 %v243
      %v299 = vunpack.c.l.b16 %v244
      %v300 = vunpack.c.l.b16 %v245
      %v301 = vunpack.c.l.b16 %v246
      %v302 = vunpack.c.l.b16 %v247
      %v303 = vunpack.c.l.b16 %v248
      %v304 = vpack.c.b16 %v281, %v280
      %v305 = vpack.c.b16 %v283, %v282
      %v306 = vpack.c.b16 %v285, %v284
      %v307 = vpack.c.b16 %v287, %v286
      %v308 = vpack.c.b16 %v289, %v288
      %v309 = vpack.c.b16 %v291, %v290
      %v310 = vpack.c.b16 %v293, %v292
      %v311 = vpack.c.b16 %v295, %v294
      %v312 = vpack.c.b16 %v297, %v296
      %v313 = vpack.c.b16 %v299, %v298
      %v314 = vpack.c.b16 %v301, %v300
      %v315 = vpack.c.b16 %v303, %v302
      %vm328 = vcmask 523264
      %v330 = vsel %vm328, %v254, 0
      %332 = vmatprep.subr.bf16.mxu0 0
      %333 = vmatpush1.bf16.msra.mxu0 %v311
      %334 = vmatprep.subr.bf16.mxu0 0
      %335 = vmatpush1.bf16.msra.mxu0 %v310
      %336 = vmatprep.subr.bf16.mxu0 0
      %337 = vmatpush1.bf16.msra.mxu0 %v309
      %338 = vmatprep.subr.bf16.mxu0 0
      %339 = vmatpush1.bf16.msra.mxu0 %v308
      %340 = vmatprep.subr.bf16.mxu0 0
      %341 = vmatpush1.bf16.msra.mxu0 %v307
      %342 = vmatprep.subr.bf16.mxu0 0
      %343 = vmatpush1.bf16.msra.mxu0 %v306
      %344 = vmatprep.subr.bf16.mxu0 0
      %345 = vmatpush1.bf16.msra.mxu0 %v305
      %346 = vmatprep.subr.bf16.mxu0 0
      %347 = vmatpush1.bf16.msra.mxu0 %v304
      %348 = vmatprep.subr.bf16.mxu0 0
      %349 = vmatpush2.bf16.msra.mxu0 0
      %350 = vmatprep.subr.bf16.mxu0 0
      %351 = vmatpush2.bf16.msra.mxu0 0
      %352 = vmatprep.subr.bf16.mxu0 0
      %353 = vmatpush2.bf16.msra.mxu0 0
      %354 = vmatprep.subr.bf16.mxu0 0
      %355 = vmatpush2.bf16.msra.mxu0 0
      %356 = vmatprep.subr.bf16.mxu0 0
      %357 = vmatpush2.bf16.msra.mxu0 %v315
      %358 = vmatprep.subr.bf16.mxu0 0
      %359 = vmatpush2.bf16.msra.mxu0 %v314
      %360 = vmatprep.subr.bf16.mxu0 0
      %361 = vmatpush2.bf16.msra.mxu0 %v313
      %362 = vmatprep.subr.bf16.mxu0 0
      %363 = vmatpush2.bf16.msra.mxu0 %v312
      %364 = vmatprep.mubr.bf16.mxu0 %v330
      %365 = vmatmul.mubr.bf16.gmra.mxu0 %v253
      %v366 = vpop.f32.mrf.mxu0
      %v367 = vadd.f32 %v249, %v366
      %v368 = vpop.f32.mrf.mxu0
      %v369 = vpop.f32.mrf.mxu0
      %v370 = vpop.f32.mrf.mxu0
      %371 = vdwg.mxu0
      %v372 = vld [vmem:[%s3] sm:$0x1]
      %v373 = vld [vmem:[%s4] sm:$0x1]
      %vm374 = vcmask 1044480
      %v375 = vsel %vm374, %v367, 0.0
      %376 = vadd.xlane.f32.xlu0 %v375
      %v377 = vpop.xlane.xlu0 %376
      %v378 = vmul.f32 %v367, %v367
      %v379 = vsel %vm374, %v378, 0.0
      %380 = vadd.xlane.f32.xlu0 %v379
      %v381 = vpop.xlane.xlu0 %380
      %v382 = vmul.f32 %v377, 0.03125
      %v383 = vmul.f32 %v381, 0.03125
      %v384 = vmul.f32 %v382, %v382
      %v385 = vsub.f32 %v383, %v384
      %v386 = vmax.f32 %v385, 0.0
      %v387 = vadd.f32 %v386, 1e-05
      %v388 = vrsqrt.pop %v387
      %v389 = vsub.f32 %v367, %v382
      %v390 = vmul.f32 %v389, %v388
      %v392 = vlaneseq
      %v393 = vshrl.u32 %v392, 7
      %v394 = vsub.s32 0, %v393
      %v395 = vrot.slane %v372, %v394
      %v397 = vmul.f32 %v390, %v395
      %v399 = vlaneseq
      %v400 = vshrl.u32 %v399, 7
      %v401 = vsub.s32 0, %v400
      %v402 = vrot.slane %v373, %v401
      %v404 = vadd.f32 %v397, %v402
      %v405 = vpack.c.bf16 %v404, %v404
      %vm406 = vcmask 1042432
      %vm407 = vsmask.f32 2304
      %vm408 = vmand %vm406, %vm407
      %v409 = vld [vmem:[%s222] sm:$0x7]
      %v410 = vsel %vm408, %v405, %v409
      %411 = vst [vmem:[%s222] sm:$0x7] %v410
      %p412 = scmp.lt.s32.totalorder %s16, 1
      %s413 = scalar_select %p412, %s16, 1
      %s414 = smul.addr %s413, 4
      %s415 = scalar_lea.vmem %s5, %s414
      // Predicated region
      $region41: #{_lambda_.4} parent=39 // pred_check
        %p416 = pneg %p144
      $region42: #{_lambda_.4} parent=39 // pred_check_branch
        %418 = sbr.rel (%p416) target = $region44
      $region43: #{_lambda_.4} parent=39 // pred_region
        _
      $region44: #{_lambda_.4} parent=39 // pred_fallthru
        _
    $region40: #{_lambda_.4} parent=5 // pred_fallthru
      _
    %p419 = scmp.le.s32.totalorder 2, %s11
    // Predicated region
    $region45: #{_lambda_.4} parent=5 // pred_check
      %p420 = pneg %p419
    $region46: #{_lambda_.4} parent=5 // pred_check_branch
      %422 = sbr.rel (%p420) target = $region48
    $region47: #{_lambda_.4} parent=5 // pred_region
      %s423 = ssub.s32 %s11, 2
      // Predicated region
      $region49: #{_lambda_.4} parent=47 // pred_check
        %p424 = pneg %p150
      $region50: #{_lambda_.4} parent=47 // pred_check_branch
        %426 = sbr.rel (%p424) target = $region52
      $region51: #{_lambda_.4} parent=47 // pred_region
        %p427 = scmp.lt.s32.totalorder %s17, 1
        %s428 = scalar_select %p427, %s17, 1
        %s429 = smul.addr %s428, 4
        %s430 = scalar_lea.vmem %s5, %s429
      $region52: #{_lambda_.4} parent=47 // pred_fallthru
        _
    $region48: #{_lambda_.4} parent=5 // pred_fallthru
      _
  $region6: #{_lambda_.4} parent=0 // loop_footer
    %s15 = sadd.s32 1, %s11
  $region7: #{_lambda_.4} parent=0 // loop_footer_branch
    %10 = sbr.rel target = $region3
  $region8: #{_lambda_.4} parent=0 // loop_exit
    _

// kernel: _lambda_.7
$region0: #{_lambda_.7}
  #allocation0 [shape = 'u32[]', space=smem, size = 0x4, offset = 0x4, fixed_abs, tag = 'smem constant byte address 0x4 - core index']
  #allocation1 [shape = 'u32[144,128]{1,0:T(1,128)}', space=vmem, size = 0x12000, scoped, tag = 'internal scratch']
  %s0 = inlined_call_operand.vmem [shape: bf16[2,128], index: 0, kind: input, shape index: {}]
  %s1 = inlined_call_operand.vmem [shape: f32[1,128], index: 1, kind: input, shape index: {}]
  %s2 = inlined_call_operand.vmem [shape: f32[1,128], index: 2, kind: input, shape index: {}]
  %s3 = inlined_call_operand.vmem [shape: bf16[128,128], index: 3, kind: input, shape index: {}]
  %s4 = inlined_call_operand.vmem [shape: f32[1,128], index: 4, kind: input, shape index: {}]
  %s5 = inlined_call_operand.hbm [shape: f32[2,128], index: 5, kind: output, shape index: {}]
  %s6 = sld [smem:[#allocation0]]
  $region30: #{_lambda_.7} parent=0
    _
  %s8 = ssub.s32 1, %s6
  %s9 = scalar_select 0, %s8, %s6
  $region1: #{_lambda_.7} parent=0
    #allocation2 [shape = 'u8[1024]{0}', space=vmem, size = 0x400, scoped, tag = 'output window, operand 0, single buffered']
    #allocation3 [shape = 's32[1]{0}', space=sflag, size = 0x4, scoped, tag = 'scoped memory for _lambda_.7']
    %10 = vsyncpa [#allocation3], 0
    // Predicated region
    $region2: #{_lambda_.7} parent=1 // pred_check
      _
    $region3: #{_lambda_.7} parent=1 // pred_check_branch
      %12 = sbr.rel (0) target = $region5
    $region4: #{_lambda_.7} parent=1 // pred_region
      _
    $region5: #{_lambda_.7} parent=1 // pred_fallthru
      _
    // Predicated region
    $region6: #{_lambda_.7} parent=1 // pred_check
      _
    $region7: #{_lambda_.7} parent=1 // pred_check_branch
      %14 = sbr.rel (0) target = $region9
    $region8: #{_lambda_.7} parent=1 // pred_region
      _
    $region9: #{_lambda_.7} parent=1 // pred_fallthru
      _
    // Predicated region
    $region10: #{_lambda_.7} parent=1 // pred_check
      _
    $region11: #{_lambda_.7} parent=1 // pred_check_branch
      %16 = sbr.rel (0) target = $region13
    $region12: #{_lambda_.7} parent=1 // pred_region
      _
    $region13: #{_lambda_.7} parent=1 // pred_fallthru
      _
    // Predicated region
    $region14: #{_lambda_.7} parent=1 // pred_check
      _
    $region15: #{_lambda_.7} parent=1 // pred_check_branch
      %18 = sbr.rel (0) target = $region17
    $region16: #{_lambda_.7} parent=1 // pred_region
      _
    $region17: #{_lambda_.7} parent=1 // pred_fallthru
      _
    // Predicated region
    $region18: #{_lambda_.7} parent=1 // pred_check
      _
    $region19: #{_lambda_.7} parent=1 // pred_check_branch
      %20 = sbr.rel (0) target = $region21
    $region20: #{_lambda_.7} parent=1 // pred_region
      _
    $region21: #{_lambda_.7} parent=1 // pred_fallthru
      _
    %v22 = vld [vmem:[%s0] sm:$0x1]
    %v23 = vunpack.c.l.bf16 %v22
    %v24 = vld [vmem:[%s1] sm:$0x1]
    %v25 = vld [vmem:[%s2] sm:$0x1]
    %vm26 = vcmask 1041408
    %v27 = vsel %vm26, %v23, 0.0
    %28 = vadd.xlane.f32.xlu0 %v27
    %v29 = vpop.xlane.xlu0 %28
    %v30 = vmul.f32 %v23, %v23
    %v31 = vsel %vm26, %v30, 0.0
    %32 = vadd.xlane.f32.xlu0 %v31
    %v33 = vpop.xlane.xlu0 %32
    %v34 = vmul.f32 %v29, 0.03125
    %v35 = vmul.f32 %v33, 0.03125
    %v36 = vmul.f32 %v34, %v34
    %v37 = vsub.f32 %v35, %v36
    %v38 = vmax.f32 %v37, 0.0
    %v39 = vadd.f32 %v38, 1e-05
    %v40 = vrsqrt.pop %v39
    %v41 = vsub.f32 %v23, %v34
    %v42 = vmul.f32 %v41, %v40
    %v44 = vlaneseq
    %v45 = vshrl.u32 %v44, 7
    %v46 = vsub.s32 0, %v45
    %v47 = vrot.slane %v24, %v46
    %v49 = vmul.f32 %v42, %v47
    %v51 = vlaneseq
    %v52 = vshrl.u32 %v51, 7
    %v53 = vsub.s32 0, %v52
    %v54 = vrot.slane %v25, %v53
    %v56 = vadd.f32 %v49, %v54
    %v57 = vpack.c.bf16 %v56, %v56
    %v58 = vld [vmem:[%s3] sm:$0xf]
    %v59 = vld [vmem:[%s3 + $0x4] sm:$0xf]
    %v60 = vld [vmem:[%s3 + $0x8] sm:$0xf]
    %v61 = vld [vmem:[%s3 + $0xc] sm:$0xf]
    %v62 = vld [vmem:[%s3 + $0x10] sm:$0xf]
    %v63 = vld [vmem:[%s3 + $0x14] sm:$0xf]
    %v64 = vld [vmem:[%s3 + $0x18] sm:$0xf]
    %v65 = vld [vmem:[%s3 + $0x1c] sm:$0xf]
    %v66 = vld [vmem:[%s3 + $0x20] sm:$0xf]
    %v67 = vld [vmem:[%s3 + $0x24] sm:$0xf]
    %v68 = vld [vmem:[%s3 + $0x28] sm:$0xf]
    %v69 = vld [vmem:[%s3 + $0x2c] sm:$0xf]
    %v70 = vld [vmem:[%s3 + $0x30] sm:$0xf]
    %v71 = vld [vmem:[%s3 + $0x34] sm:$0xf]
    %v72 = vld [vmem:[%s3 + $0x38] sm:$0xf]
    %v73 = vld [vmem:[%s3 + $0x3c] sm:$0xf]
    %v74 = vld [vmem:[%s4] sm:$0x1]
    %v76 = vlaneseq
    %v77 = vshrl.u32 %v76, 7
    %v78 = vsub.s32 0, %v77
    %v79 = vrot.slane %v74, %v78
    %v97 = vunpack.c.l.b16 %v58
    %v98 = vunpack.c.l.b16 %v59
    %v99 = vunpack.c.l.b16 %v60
    %v100 = vunpack.c.l.b16 %v61
    %v101 = vunpack.c.l.b16 %v62
    %v102 = vunpack.c.l.b16 %v63
    %v103 = vunpack.c.l.b16 %v64
    %v104 = vunpack.c.l.b16 %v65
    %v105 = vunpack.c.l.b16 %v66
    %v106 = vunpack.c.l.b16 %v67
    %v107 = vunpack.c.l.b16 %v68
    %v108 = vunpack.c.l.b16 %v69
    %v109 = vunpack.c.l.b16 %v70
    %v110 = vunpack.c.l.b16 %v71
    %v111 = vunpack.c.l.b16 %v72
    %v112 = vunpack.c.l.b16 %v73
    %v113 = vpack.c.b16 %v98, %v97
    %v114 = vpack.c.b16 %v100, %v99
    %v115 = vpack.c.b16 %v102, %v101
    %v116 = vpack.c.b16 %v104, %v103
    %v117 = vpack.c.b16 %v106, %v105
    %v118 = vpack.c.b16 %v108, %v107
    %v119 = vpack.c.b16 %v110, %v109
    %v120 = vpack.c.b16 %v112, %v111
    %129 = vmatprep.subr.bf16.mxu0 0
    %130 = vmatpush1.bf16.msra.mxu0 %v120
    %131 = vmatprep.subr.bf16.mxu0 0
    %132 = vmatpush1.bf16.msra.mxu0 %v119
    %133 = vmatprep.subr.bf16.mxu0 0
    %134 = vmatpush1.bf16.msra.mxu0 %v118
    %135 = vmatprep.subr.bf16.mxu0 0
    %136 = vmatpush1.bf16.msra.mxu0 %v117
    %137 = vmatprep.subr.bf16.mxu0 0
    %138 = vmatpush1.bf16.msra.mxu0 %v116
    %139 = vmatprep.subr.bf16.mxu0 0
    %140 = vmatpush1.bf16.msra.mxu0 %v115
    %141 = vmatprep.subr.bf16.mxu0 0
    %142 = vmatpush1.bf16.msra.mxu0 %v114
    %143 = vmatprep.subr.bf16.mxu0 0
    %144 = vmatpush1.bf16.msra.mxu0 %v113
    %145 = vmatprep.subr.bf16.mxu0 0
    %146 = vmatpush2.bf16.msra.mxu0 0
    %147 = vmatprep.subr.bf16.mxu0 0
    %148 = vmatpush2.bf16.msra.mxu0 0
    %149 = vmatprep.subr.bf16.mxu0 0
    %150 = vmatpush2.bf16.msra.mxu0 0
    %151 = vmatprep.subr.bf16.mxu0 0
    %152 = vmatpush2.bf16.msra.mxu0 0
    %153 = vmatprep.subr.bf16.mxu0 0
    %154 = vmatpush2.bf16.msra.mxu0 0
    %155 = vmatprep.subr.bf16.mxu0 0
    %156 = vmatpush2.bf16.msra.mxu0 0
    %157 = vmatprep.subr.bf16.mxu0 0
    %158 = vmatpush2.bf16.msra.mxu0 0
    %159 = vmatprep.subr.bf16.mxu0 0
    %160 = vmatpush2.bf16.msra.mxu0 0
    %161 = vmatprep.mubr.bf16.mxu0 0
    %162 = vmatmul.mubr.bf16.gmra.mxu0 %v57
    %v163 = vpop.f32.mrf.mxu0
    %v164 = vadd.f32 %v79, %v163
    %v165 = vpop.f32.mrf.mxu0
    %v166 = vpop.f32.mrf.mxu0
    %v167 = vpop.f32.mrf.mxu0
    %168 = vdwg.mxu0
    %169 = vst [vmem:[#allocation2] sm:$0x3] %v164
    // Predicated region
    $region22: #{_lambda_.7} parent=1 // pred_check
      _
    $region23: #{_lambda_.7} parent=1 // pred_check_branch
      %171 = sbr.rel (0) target = $region25
    $region24: #{_lambda_.7} parent=1 // pred_region
      %s173 = ssub.s32 32, 32
      %174 = vsyncadd [#allocation3], %s173
      %s176 = sshll.u32 [#allocation2], 4
      %s177 = int_to_ptr.vmem [resolvable:$true] %s176
      %179 = dma.vmem_to_hbm [thread:$0]  %s177, 32, %s5, [#allocation3]
    $region25: #{_lambda_.7} parent=1 // pred_fallthru
      _
    // Predicated region
    $region26: #{_lambda_.7} parent=1 // pred_check
      _
    $region27: #{_lambda_.7} parent=1 // pred_check_branch
      %181 = sbr.rel (0) target = $region29
    $region28: #{_lambda_.7} parent=1 // pred_region
      %182 = dma.done [#allocation3], 32
    $region29: #{_lambda_.7} parent=1 // pred_fallthru
      _
    %183 = vsyncpa [#allocation3], 1

// kernel: _lambda_.5
$region0: #{_lambda_.5}
  #allocation0 [shape = 'u32[]', space=smem, size = 0x4, offset = 0x4, fixed_abs, tag = 'smem constant byte address 0x4 - core index']
  #allocation1 [shape = 'u32[144,128]{1,0:T(1,128)}', space=vmem, size = 0x12000, scoped, tag = 'internal scratch']
  %s0 = inlined_call_operand.vmem [shape: bf16[2,5,128], index: 0, kind: input, shape index: {}]
  %s1 = inlined_call_operand.vmem [shape: f32[1,128], index: 1, kind: input, shape index: {}]
  %s2 = inlined_call_operand.vmem [shape: f32[1,128], index: 2, kind: input, shape index: {}]
  %s3 = inlined_call_operand.vmem [shape: bf16[128,384], index: 3, kind: input, shape index: {}]
  %s4 = inlined_call_operand.vmem [shape: f32[1,384], index: 4, kind: input, shape index: {}]
  %s5 = inlined_call_operand.vmem [shape: bf16[4,8,128], index: 5, kind: input, shape index: {}]
  %s6 = inlined_call_operand.vmem [shape: f32[1,128], index: 6, kind: input, shape index: {}]
  %s7 = inlined_call_operand.vmem [shape: f32[1,128], index: 7, kind: input, shape index: {}]
  %s8 = inlined_call_operand.vmem [shape: f32[1,128], index: 8, kind: input, shape index: {}]
  %s9 = inlined_call_operand.vmem [shape: bf16[128,128], index: 9, kind: input, shape index: {}]
  %s10 = inlined_call_operand.vmem [shape: f32[1,128], index: 10, kind: input, shape index: {}]
  %s11 = inlined_call_operand.vmem [shape: bf16[128,128], index: 11, kind: input, shape index: {}]
  %s12 = inlined_call_operand.vmem [shape: f32[1,128], index: 12, kind: input, shape index: {}]
  %s13 = inlined_call_operand.vmem [shape: bf16[2,5,128], index: 13, kind: output, shape index: {}]
  %s14 = sld [smem:[#allocation0]]
  $region85: #{_lambda_.5} parent=0
    _
  %s16 = ssub.s32 1, %s14
  %s17 = scalar_select 0, %s16, %s14
  loop: start=0, step=1, limit=4
  $region2: #{_lambda_.5} parent=0 // loop_pre_header
    _
  $region3: #{_lambda_.5} parent=0 // loop_header
    %s19 = sphi 0, %s23
    %p20 = scmp.ge.s32.totalorder %s19, 4
    %s29 = sphi 0, %s31
    %s32 = sphi 0, %s29
    %s33 = sphi 0, %s32
    %s49 = sphi 0, %s33
    %s53 = sphi 0, %s53
    %s55 = sphi 0, %s53
    %s56 = sphi 0, %s55
    %s70 = sphi 0, %s56
    %s74 = sphi 0, %s74
    %s76 = sphi 0, %s74
    %s77 = sphi 0, %s76
    %s91 = sphi 0, %s77
    %s95 = sphi 0, %s95
    %s97 = sphi 0, %s95
    %s98 = sphi 0, %s97
    %s112 = sphi 0, %s98
    %s116 = sphi 0, %s116
    %s118 = sphi 0, %s116
    %s119 = sphi 0, %s118
    %s133 = sphi 0, %s119
    %s137 = sphi 0, %s137
    %s139 = sphi 0, %s137
    %s140 = sphi 0, %s139
    %s154 = sphi 0, %s140
    %s158 = sphi 0, %s158
    %s160 = sphi 0, %s158
    %s161 = sphi 0, %s160
    %s175 = sphi 0, %s161
    %s179 = sphi 0, %s179
    %s181 = sphi 0, %s179
    %s182 = sphi 0, %s181
    %s196 = sphi 0, %s182
    %s200 = sphi 0, %s200
    %s202 = sphi 0, %s200
    %s203 = sphi 0, %s202
    %s217 = sphi 0, %s203
    %s221 = sphi 0, %s221
    %s223 = sphi 0, %s221
    %s224 = sphi 0, %s223
    %s238 = sphi 0, %s224
    %s242 = sphi 0, %s242
    %s244 = sphi 0, %s242
    %s245 = sphi 0, %s244
    %s259 = sphi 0, %s245
    %s263 = sphi 0, %s263
    %s265 = sphi 0, %s263
    %s266 = sphi 0, %s265
    %s280 = sphi 0, %s266
    %s284 = sphi 0, %s284
    %s286 = sphi 0, %s284
    %s287 = sphi 0, %s286
    %s301 = sphi 0, %s287
    %s307 = sphi 0, %s309
    %s310 = sphi 0, %s307
    %s311 = sphi 0, %s310
    %s327 = sphi 0, %s311
  $region4: #{_lambda_.5} parent=0 // loop_header_branch
    %22 = sbr.rel (%p20) target = $region8
  $region5: #{_lambda_.5} parent=0 // loop_body
    %s24 = ssub.s32 %s19, 1
    %s25 = ssub.s32 %s19, 2
    %s26 = sadd.s32 %s19, 1
    %s27 = ssub.s32 %s19, %s26
    %p28 = scmp.eq.s32.totalorder %s27, 0
    %s30 = sadd.s32 %s29, 1
    %s31 = scalar_select %p28, %s29, %s30
    %p34 = pneg %p28
    %p35 = scmp.eq.s32.totalorder %s19, 1
    %p36 = por %p34, %p35
    %p37 = scmp.ne.s32.totalorder %s29, %s32
    %p38 = scmp.eq.s32.totalorder %s19, 0
    %p39 = por %p37, %p38
    %p40 = scmp.ne.s32.totalorder %s29, %s32
    %p41 = scmp.eq.s32.totalorder %s24, 1
    %p42 = por %p40, %p41
    %p43 = scmp.ne.s32.totalorder %s32, %s33
    %p44 = scmp.eq.s32.totalorder %s24, 0
    %p45 = por %p43, %p44
    %p46 = scmp.ne.s32.totalorder %s32, %s33
    %p47 = scmp.eq.s32.totalorder %s25, 1
    %p48 = por %p46, %p47
    %p50 = scmp.ne.s32.totalorder %s33, %s49
    %p51 = scmp.eq.s32.totalorder %s25, 0
    %p52 = por %p50, %p51
    %s54 = sadd.s32 %s53, 1
    %p57 = scmp.eq.s32.totalorder %s19, 1
    %p58 = scmp.ne.s32.totalorder %s53, %s55
    %p59 = scmp.eq.s32.totalorder %s19, 0
    %p60 = por %p58, %p59
    %p61 = scmp.ne.s32.totalorder %s53, %s55
    %p62 = scmp.eq.s32.totalorder %s24, 1
    %p63 = por %p61, %p62
    %p64 = scmp.ne.s32.totalorder %s55, %s56
    %p65 = scmp.eq.s32.totalorder %s24, 0
    %p66 = por %p64, %p65
    %p67 = scmp.ne.s32.totalorder %s55, %s56
    %p68 = scmp.eq.s32.totalorder %s25, 1
    %p69 = por %p67, %p68
    %p71 = scmp.ne.s32.totalorder %s56, %s70
    %p72 = scmp.eq.s32.totalorder %s25, 0
    %p73 = por %p71, %p72
    %s75 = sadd.s32 %s74, 1
    %p78 = scmp.eq.s32.totalorder %s19, 1
    %p79 = scmp.ne.s32.totalorder %s74, %s76
    %p80 = scmp.eq.s32.totalorder %s19, 0
    %p81 = por %p79, %p80
    %p82 = scmp.ne.s32.totalorder %s74, %s76
    %p83 = scmp.eq.s32.totalorder %s24, 1
    %p84 = por %p82, %p83
    %p85 = scmp.ne.s32.totalorder %s76, %s77
    %p86 = scmp.eq.s32.totalorder %s24, 0
    %p87 = por %p85, %p86
    %p88 = scmp.ne.s32.totalorder %s76, %s77
    %p89 = scmp.eq.s32.totalorder %s25, 1
    %p90 = por %p88, %p89
    %p92 = scmp.ne.s32.totalorder %s77, %s91
    %p93 = scmp.eq.s32.totalorder %s25, 0
    %p94 = por %p92, %p93
    %s96 = sadd.s32 %s95, 1
    %p99 = scmp.eq.s32.totalorder %s19, 1
    %p100 = scmp.ne.s32.totalorder %s95, %s97
    %p101 = scmp.eq.s32.totalorder %s19, 0
    %p102 = por %p100, %p101
    %p103 = scmp.ne.s32.totalorder %s95, %s97
    %p104 = scmp.eq.s32.totalorder %s24, 1
    %p105 = por %p103, %p104
    %p106 = scmp.ne.s32.totalorder %s97, %s98
    %p107 = scmp.eq.s32.totalorder %s24, 0
    %p108 = por %p106, %p107
    %p109 = scmp.ne.s32.totalorder %s97, %s98
    %p110 = scmp.eq.s32.totalorder %s25, 1
    %p111 = por %p109, %p110
    %p113 = scmp.ne.s32.totalorder %s98, %s112
    %p114 = scmp.eq.s32.totalorder %s25, 0
    %p115 = por %p113, %p114
    %s117 = sadd.s32 %s116, 1
    %p120 = scmp.eq.s32.totalorder %s19, 1
    %p121 = scmp.ne.s32.totalorder %s116, %s118
    %p122 = scmp.eq.s32.totalorder %s19, 0
    %p123 = por %p121, %p122
    %p124 = scmp.ne.s32.totalorder %s116, %s118
    %p125 = scmp.eq.s32.totalorder %s24, 1
    %p126 = por %p124, %p125
    %p127 = scmp.ne.s32.totalorder %s118, %s119
    %p128 = scmp.eq.s32.totalorder %s24, 0
    %p129 = por %p127, %p128
    %p130 = scmp.ne.s32.totalorder %s118, %s119
    %p131 = scmp.eq.s32.totalorder %s25, 1
    %p132 = por %p130, %p131
    %p134 = scmp.ne.s32.totalorder %s119, %s133
    %p135 = scmp.eq.s32.totalorder %s25, 0
    %p136 = por %p134, %p135
    %s138 = sadd.s32 %s137, 1
    %p141 = scmp.eq.s32.totalorder %s19, 1
    %p142 = scmp.ne.s32.totalorder %s137, %s139
    %p143 = scmp.eq.s32.totalorder %s19, 0
    %p144 = por %p142, %p143
    %p145 = scmp.ne.s32.totalorder %s137, %s139
    %p146 = scmp.eq.s32.totalorder %s24, 1
    %p147 = por %p145, %p146
    %p148 = scmp.ne.s32.totalorder %s139, %s140
    %p149 = scmp.eq.s32.totalorder %s24, 0
    %p150 = por %p148, %p149
    %p151 = scmp.ne.s32.totalorder %s139, %s140
    %p152 = scmp.eq.s32.totalorder %s25, 1
    %p153 = por %p151, %p152
    %p155 = scmp.ne.s32.totalorder %s140, %s154
    %p156 = scmp.eq.s32.totalorder %s25, 0
    %p157 = por %p155, %p156
    %s159 = sadd.s32 %s158, 1
    %p162 = scmp.eq.s32.totalorder %s19, 1
    %p163 = scmp.ne.s32.totalorder %s158, %s160
    %p164 = scmp.eq.s32.totalorder %s19, 0
    %p165 = por %p163, %p164
    %p166 = scmp.ne.s32.totalorder %s158, %s160
    %p167 = scmp.eq.s32.totalorder %s24, 1
    %p168 = por %p166, %p167
    %p169 = scmp.ne.s32.totalorder %s160, %s161
    %p170 = scmp.eq.s32.totalorder %s24, 0
    %p171 = por %p169, %p170
    %p172 = scmp.ne.s32.totalorder %s160, %s161
    %p173 = scmp.eq.s32.totalorder %s25, 1
    %p174 = por %p172, %p173
    %p176 = scmp.ne.s32.totalorder %s161, %s175
    %p177 = scmp.eq.s32.totalorder %s25, 0
    %p178 = por %p176, %p177
    %s180 = sadd.s32 %s179, 1
    %p183 = scmp.eq.s32.totalorder %s19, 1
    %p184 = scmp.ne.s32.totalorder %s179, %s181
    %p185 = scmp.eq.s32.totalorder %s19, 0
    %p186 = por %p184, %p185
    %p187 = scmp.ne.s32.totalorder %s179, %s181
    %p188 = scmp.eq.s32.totalorder %s24, 1
    %p189 = por %p187, %p188
    %p190 = scmp.ne.s32.totalorder %s181, %s182
    %p191 = scmp.eq.s32.totalorder %s24, 0
    %p192 = por %p190, %p191
    %p193 = scmp.ne.s32.totalorder %s181, %s182
    %p194 = scmp.eq.s32.totalorder %s25, 1
    %p195 = por %p193, %p194
    %p197 = scmp.ne.s32.totalorder %s182, %s196
    %p198 = scmp.eq.s32.totalorder %s25, 0
    %p199 = por %p197, %p198
    %s201 = sadd.s32 %s200, 1
    %p204 = scmp.eq.s32.totalorder %s19, 1
    %p205 = scmp.ne.s32.totalorder %s200, %s202
    %p206 = scmp.eq.s32.totalorder %s19, 0
    %p207 = por %p205, %p206
    %p208 = scmp.ne.s32.totalorder %s200, %s202
    %p209 = scmp.eq.s32.totalorder %s24, 1
    %p210 = por %p208, %p209
    %p211 = scmp.ne.s32.totalorder %s202, %s203
    %p212 = scmp.eq.s32.totalorder %s24, 0
    %p213 = por %p211, %p212
    %p214 = scmp.ne.s32.totalorder %s202, %s203
    %p215 = scmp.eq.s32.totalorder %s25, 1
    %p216 = por %p214, %p215
    %p218 = scmp.ne.s32.totalorder %s203, %s217
    %p219 = scmp.eq.s32.totalorder %s25, 0
    %p220 = por %p218, %p219
    %s222 = sadd.s32 %s221, 1
    %p225 = scmp.eq.s32.totalorder %s19, 1
    %p226 = scmp.ne.s32.totalorder %s221, %s223
    %p227 = scmp.eq.s32.totalorder %s19, 0
    %p228 = por %p226, %p227
    %p229 = scmp.ne.s32.totalorder %s221, %s223
    %p230 = scmp.eq.s32.totalorder %s24, 1
    %p231 = por %p229, %p230
    %p232 = scmp.ne.s32.totalorder %s223, %s224
    %p233 = scmp.eq.s32.totalorder %s24, 0
    %p234 = por %p232, %p233
    %p235 = scmp.ne.s32.totalorder %s223, %s224
    %p236 = scmp.eq.s32.totalorder %s25, 1
    %p237 = por %p235, %p236
    %p239 = scmp.ne.s32.totalorder %s224, %s238
    %p240 = scmp.eq.s32.totalorder %s25, 0
    %p241 = por %p239, %p240
    %s243 = sadd.s32 %s242, 1
    %p246 = scmp.eq.s32.totalorder %s19, 1
    %p247 = scmp.ne.s32.totalorder %s242, %s244
    %p248 = scmp.eq.s32.totalorder %s19, 0
    %p249 = por %p247, %p248
    %p250 = scmp.ne.s32.totalorder %s242, %s244
    %p251 = scmp.eq.s32.totalorder %s24, 1
    %p252 = por %p250, %p251
    %p253 = scmp.ne.s32.totalorder %s244, %s245
    %p254 = scmp.eq.s32.totalorder %s24, 0
    %p255 = por %p253, %p254
    %p256 = scmp.ne.s32.totalorder %s244, %s245
    %p257 = scmp.eq.s32.totalorder %s25, 1
    %p258 = por %p256, %p257
    %p260 = scmp.ne.s32.totalorder %s245, %s259
    %p261 = scmp.eq.s32.totalorder %s25, 0
    %p262 = por %p260, %p261
    %s264 = sadd.s32 %s263, 1
    %p267 = scmp.eq.s32.totalorder %s19, 1
    %p268 = scmp.ne.s32.totalorder %s263, %s265
    %p269 = scmp.eq.s32.totalorder %s19, 0
    %p270 = por %p268, %p269
    %p271 = scmp.ne.s32.totalorder %s263, %s265
    %p272 = scmp.eq.s32.totalorder %s24, 1
    %p273 = por %p271, %p272
    %p274 = scmp.ne.s32.totalorder %s265, %s266
    %p275 = scmp.eq.s32.totalorder %s24, 0
    %p276 = por %p274, %p275
    %p277 = scmp.ne.s32.totalorder %s265, %s266
    %p278 = scmp.eq.s32.totalorder %s25, 1
    %p279 = por %p277, %p278
    %p281 = scmp.ne.s32.totalorder %s266, %s280
    %p282 = scmp.eq.s32.totalorder %s25, 0
    %p283 = por %p281, %p282
    %s285 = sadd.s32 %s284, 1
    %p288 = scmp.eq.s32.totalorder %s19, 1
    %p289 = scmp.ne.s32.totalorder %s284, %s286
    %p290 = scmp.eq.s32.totalorder %s19, 0
    %p291 = por %p289, %p290
    %p292 = scmp.ne.s32.totalorder %s284, %s286
    %p293 = scmp.eq.s32.totalorder %s24, 1
    %p294 = por %p292, %p293
    %p295 = scmp.ne.s32.totalorder %s286, %s287
    %p296 = scmp.eq.s32.totalorder %s24, 0
    %p297 = por %p295, %p296
    %p298 = scmp.ne.s32.totalorder %s286, %s287
    %p299 = scmp.eq.s32.totalorder %s25, 1
    %p300 = por %p298, %p299
    %p302 = scmp.ne.s32.totalorder %s287, %s301
    %p303 = scmp.eq.s32.totalorder %s25, 0
    %p304 = por %p302, %p303
    %s305 = ssub.s32 %s19, %s26
    %p306 = scmp.eq.s32.totalorder %s305, 0
    %s308 = sadd.s32 %s307, 1
    %s309 = scalar_select %p306, %s307, %s308
    %p312 = pneg %p306
    %p313 = scmp.eq.s32.totalorder %s19, 1
    %p314 = por %p312, %p313
    %p315 = scmp.ne.s32.totalorder %s307, %s310
    %p316 = scmp.eq.s32.totalorder %s19, 0
    %p317 = por %p315, %p316
    %p318 = scmp.ne.s32.totalorder %s307, %s310
    %p319 = scmp.eq.s32.totalorder %s24, 1
    %p320 = por %p318, %p319
    %p321 = scmp.ne.s32.totalorder %s310, %s311
    %p322 = scmp.eq.s32.totalorder %s24, 0
    %p323 = por %p321, %p322
    %p324 = scmp.ne.s32.totalorder %s310, %s311
    %p325 = scmp.eq.s32.totalorder %s25, 1
    %p326 = por %p324, %p325
    %p328 = scmp.ne.s32.totalorder %s311, %s327
    %p329 = scmp.eq.s32.totalorder %s25, 0
    %p330 = por %p328, %p329
    %p331 = scmp.le.s32.totalorder 1, %s19
    %p332 = scmp.lt.s32.totalorder %s19, 3
    %p333 = pnand %p331, %p332
    %p334 = pneg %p333
    // Predicated region
    $region9: #{_lambda_.5} parent=5 // pred_check
      _
    $region10: #{_lambda_.5} parent=5 // pred_check_branch
      %336 = sbr.rel (%p333) target = $region12
    $region11: #{_lambda_.5} parent=5 // pred_region
      %s337 = ssub.s32 %s19, 1
      // Predicated region
      $region13: #{_lambda_.5} parent=11 // pred_check
        %p338 = pneg %p66
      $region14: #{_lambda_.5} parent=11 // pred_check_branch
        %340 = sbr.rel (%p338) target = $region16
      $region15: #{_lambda_.5} parent=11 // pred_region
        _
      $region16: #{_lambda_.5} parent=11 // pred_fallthru
        _
      // Predicated region
      $region17: #{_lambda_.5} parent=11 // pred_check
        %p341 = pneg %p87
      $region18: #{_lambda_.5} parent=11 // pred_check_branch
        %343 = sbr.rel (%p341) target = $region20
      $region19: #{_lambda_.5} parent=11 // pred_region
        _
      $region20: #{_lambda_.5} parent=11 // pred_fallthru
        _
      // Predicated region
      $region21: #{_lambda_.5} parent=11 // pred_check
        %p344 = pneg %p108
      $region22: #{_lambda_.5} parent=11 // pred_check_branch
        %346 = sbr.rel (%p344) target = $region24
      $region23: #{_lambda_.5} parent=11 // pred_region
        _
      $region24: #{_lambda_.5} parent=11 // pred_fallthru
        _
      // Predicated region
      $region25: #{_lambda_.5} parent=11 // pred_check
        %p347 = pneg %p129
      $region26: #{_lambda_.5} parent=11 // pred_check_branch
        %349 = sbr.rel (%p347) target = $region28
      $region27: #{_lambda_.5} parent=11 // pred_region
        _
      $region28: #{_lambda_.5} parent=11 // pred_fallthru
        _
      // Predicated region
      $region29: #{_lambda_.5} parent=11 // pred_check
        %p350 = pneg %p150
      $region30: #{_lambda_.5} parent=11 // pred_check_branch
        %352 = sbr.rel (%p350) target = $region32
      $region31: #{_lambda_.5} parent=11 // pred_region
        _
      $region32: #{_lambda_.5} parent=11 // pred_fallthru
        _
      // Predicated region
      $region33: #{_lambda_.5} parent=11 // pred_check
        %p353 = pneg %p171
      $region34: #{_lambda_.5} parent=11 // pred_check_branch
        %355 = sbr.rel (%p353) target = $region36
      $region35: #{_lambda_.5} parent=11 // pred_region
        _
      $region36: #{_lambda_.5} parent=11 // pred_fallthru
        _
      // Predicated region
      $region37: #{_lambda_.5} parent=11 // pred_check
        %p356 = pneg %p192
      $region38: #{_lambda_.5} parent=11 // pred_check_branch
        %358 = sbr.rel (%p356) target = $region40
      $region39: #{_lambda_.5} parent=11 // pred_region
        _
      $region40: #{_lambda_.5} parent=11 // pred_fallthru
        _
      // Predicated region
      $region41: #{_lambda_.5} parent=11 // pred_check
        %p359 = pneg %p213
      $region42: #{_lambda_.5} parent=11 // pred_check_branch
        %361 = sbr.rel (%p359) target = $region44
      $region43: #{_lambda_.5} parent=11 // pred_region
        _
      $region44: #{_lambda_.5} parent=11 // pred_fallthru
        _
      // Predicated region
      $region45: #{_lambda_.5} parent=11 // pred_check
        %p362 = pneg %p234
      $region46: #{_lambda_.5} parent=11 // pred_check_branch
        %364 = sbr.rel (%p362) target = $region48
      $region47: #{_lambda_.5} parent=11 // pred_region
        _
      $region48: #{_lambda_.5} parent=11 // pred_fallthru
        _
      // Predicated region
      $region49: #{_lambda_.5} parent=11 // pred_check
        %p365 = pneg %p255
      $region50: #{_lambda_.5} parent=11 // pred_check_branch
        %367 = sbr.rel (%p365) target = $region52
      $region51: #{_lambda_.5} parent=11 // pred_region
        _
      $region52: #{_lambda_.5} parent=11 // pred_fallthru
        _
      // Predicated region
      $region53: #{_lambda_.5} parent=11 // pred_check
        %p368 = pneg %p276
      $region54: #{_lambda_.5} parent=11 // pred_check_branch
        %370 = sbr.rel (%p368) target = $region56
      $region55: #{_lambda_.5} parent=11 // pred_region
        _
      $region56: #{_lambda_.5} parent=11 // pred_fallthru
        _
      // Predicated region
      $region57: #{_lambda_.5} parent=11 // pred_check
        %p371 = pneg %p297
      $region58: #{_lambda_.5} parent=11 // pred_check_branch
        %373 = sbr.rel (%p371) target = $region60
      $region59: #{_lambda_.5} parent=11 // pred_region
        _
      $region60: #{_lambda_.5} parent=11 // pred_fallthru
        _
    $region12: #{_lambda_.5} parent=5 // pred_fallthru
      _
    %p374 = scmp.lt.s32.totalorder %s19, 2
    // Predicated region
    $region61: #{_lambda_.5} parent=5 // pred_check
      %p375 = pneg %p374
    $region62: #{_lambda_.5} parent=5 // pred_check_branch
      %377 = sbr.rel (%p375) target = $region64
    $region63: #{_lambda_.5} parent=5 // pred_region
      // Predicated region
      $region65: #{_lambda_.5} parent=63 // pred_check
        %p378 = pneg %p39
      $region66: #{_lambda_.5} parent=63 // pred_check_branch
        %380 = sbr.rel (%p378) target = $region68
      $region67: #{_lambda_.5} parent=63 // pred_region
        %p381 = scmp.lt.s32.totalorder %s19, 1
        %s382 = scalar_select %p381, %s19, 1
        %s383 = smul.addr %s382, 4
        %s384 = scalar_lea.vmem %s0, %s383
      $region68: #{_lambda_.5} parent=63 // pred_fallthru
        _
    $region64: #{_lambda_.5} parent=5 // pred_fallthru
      _
    %p385 = scmp.le.s32.totalorder 1, %s19
    %p386 = scmp.lt.s32.totalorder %s19, 3
    %p387 = pnand %p385, %p386
    %p388 = pneg %p387
    // Predicated region
    $region69: #{_lambda_.5} parent=5 // pred_check
      _
    $region70: #{_lambda_.5} parent=5 // pred_check_branch
      %390 = sbr.rel (%p387) target = $region72
    $region71: #{_lambda_.5} parent=5 // pred_region
      %s391 = ssub.s32 %s19, 1
      %p392 = scmp.lt.s32.totalorder %s24, 1
      %s393 = scalar_select %p392, %s24, 1
      %s394 = smul.addr %s393, 4
      %s395 = scalar_lea.vmem %s0, %s394
      %p396 = pneg %p45
      %p397 = pneg %p42
      %p398 = pneg %p66
      %p399 = pneg %p63
      %p400 = pneg %p87
      %p401 = pneg %p84
      %p402 = pneg %p108
      %p403 = pneg %p105
      %p404 = pneg %p129
      %p405 = pneg %p126
      %p406 = pneg %p150
      %p407 = pneg %p147
      %p408 = pneg %p171
      %p409 = pneg %p168
      %p410 = pneg %p192
      %p411 = pneg %p189
      %p412 = pneg %p213
      %p413 = pneg %p210
      %p414 = pneg %p234
      %p415 = pneg %p231
      %p416 = pneg %p255
      %p417 = pneg %p252
      %p418 = pneg %p276
      %p419 = pneg %p273
      %p420 = pneg %p297
      %p421 = pneg %p294
      %p422 = pneg %p323
      %p423 = pneg %p320
      %p424 = scmp.lt.s32.totalorder %s24, 1
      %s425 = scalar_select %p424, %s24, 1
      %s426 = smul.addr %s425, 4
      %s427 = scalar_lea.vmem %s13, %s426
      %p428 = scmp.lt.s32.totalorder %s24, 1
      %s429 = scalar_select %p428, %s24, 1
      %s430 = smul.addr %s429, 4
      %s431 = scalar_lea.vmem %s0, %s430
      %p432 = scmp.lt.s32.totalorder %s24, 1
      %s433 = scalar_select %p432, %s24, 1
      %s434 = smul.addr %s433, 4
      %s435 = scalar_lea.vmem %s13, %s434
      %v437 = vld [vmem:[%s431] sm:$0x7]
      %v438 = vunpack.c.l.bf16 %v437
      %v439 = vld [vmem:[%s1] sm:$0x1]
      %v440 = vld [vmem:[%s2] sm:$0x1]
      %vm441 = vcmask 1044480
      %v442 = vsel %vm441, %v438, 0.0
      %443 = vadd.xlane.f32.xlu0 %v442
      %v444 = vpop.xlane.xlu0 %443
      %v445 = vmul.f32 %v438, %v438
      %v446 = vsel %vm441, %v445, 0.0
      %447 = vadd.xlane.f32.xlu0 %v446
      %v448 = vpop.xlane.xlu0 %447
      %v449 = vmul.f32 %v444, 0.03125
      %v450 = vmul.f32 %v448, 0.03125
      %v451 = vmul.f32 %v449, %v449
      %v452 = vsub.f32 %v450, %v451
      %v453 = vmax.f32 %v452, 0.0
      %v454 = vadd.f32 %v453, 1e-05
      %v455 = vrsqrt.pop %v454
      %v456 = vsub.f32 %v438, %v449
      %v457 = vmul.f32 %v456, %v455
      %v459 = vlaneseq
      %v460 = vshrl.u32 %v459, 7
      %v461 = vsub.s32 0, %v460
      %v462 = vrot.slane %v439, %v461
      %v464 = vmul.f32 %v457, %v462
      %v466 = vlaneseq
      %v467 = vshrl.u32 %v466, 7
      %v468 = vsub.s32 0, %v467
      %v469 = vrot.slane %v440, %v468
      %v471 = vadd.f32 %v464, %v469
      %v472 = vpack.c.bf16 %v471, %v471
      %v473 = vld [vmem:[%s3] sm:$0xff]
      %v474 = vld [vmem:[%s3 + $0x8] sm:$0xf]
      %v475 = vld [vmem:[%s3 + $0xc] sm:$0xff]
      %v476 = vld [vmem:[%s3 + $0x14] sm:$0xf]
      %v477 = vld [vmem:[%s3 + $0x18] sm:$0xff]
      %v478 = vld [vmem:[%s3 + $0x20] sm:$0xf]
      %v479 = vld [vmem:[%s3 + $0x24] sm:$0xff]
      %v480 = vld [vmem:[%s3 + $0x2c] sm:$0xf]
      %v481 = vld [vmem:[%s3 + $0x30] sm:$0xff]
      %v482 = vld [vmem:[%s3 + $0x38] sm:$0xf]
      %v483 = vld [vmem:[%s3 + $0x3c] sm:$0xff]
      %v484 = vld [vmem:[%s3 + $0x44] sm:$0xf]
      %v485 = vld [vmem:[%s3 + $0x48] sm:$0xff]
      %v486 = vld [vmem:[%s3 + $0x50] sm:$0xf]
      %v487 = vld [vmem:[%s3 + $0x54] sm:$0xff]
      %v488 = vld [vmem:[%s3 + $0x5c] sm:$0xf]
      %v489 = vld [vmem:[%s3 + $0x60] sm:$0xff]
      %v490 = vld [vmem:[%s3 + $0x68] sm:$0xf]
      %v491 = vld [vmem:[%s3 + $0x6c] sm:$0xff]
      %v492 = vld [vmem:[%s3 + $0x74] sm:$0xf]
      %v493 = vld [vmem:[%s3 + $0x78] sm:$0xff]
      %v494 = vld [vmem:[%s3 + $0x80] sm:$0xf]
      %v495 = vld [vmem:[%s3 + $0x84] sm:$0xff]
      %v496 = vld [vmem:[%s3 + $0x8c] sm:$0xf]
      %v497 = vld [vmem:[%s3 + $0x90] sm:$0xff]
      %v498 = vld [vmem:[%s3 + $0x98] sm:$0xf]
      %v499 = vld [vmem:[%s3 + $0x9c] sm:$0xff]
      %v500 = vld [vmem:[%s3 + $0xa4] sm:$0xf]
      %v501 = vld [vmem:[%s3 + $0xa8] sm:$0xff]
      %v502 = vld [vmem:[%s3 + $0xb0] sm:$0xf]
      %v503 = vld [vmem:[%s3 + $0xb4] sm:$0xff]
      %v504 = vld [vmem:[%s3 + $0xbc] sm:$0xf]
      %v505 = vld [vmem:[%s4] sm:$0x7]
      %v507 = vlaneseq
      %v508 = vshrl.u32 %v507, 7
      %v509 = vsub.s32 0, %v508
      %v510 = vrot.slane %v505, %v509
      %v511 = vlaneseq
      %v512 = vshrl.u32 %v511, 7
      %v513 = vsub.s32 1, %v512
      %v514 = vrot.slane %v505, %v513
      %v515 = vlaneseq
      %v516 = vshrl.u32 %v515, 7
      %v517 = vsub.s32 2, %v516
      %v518 = vrot.slane %v505, %v517
      %v554 = vunpack.c.l.b16 %v473
      %v555 = vunpack.c.h.b16 %v473
      %v556 = vunpack.c.l.b16 %v474
      %v557 = vunpack.c.l.b16 %v475
      %v558 = vunpack.c.h.b16 %v475
      %v559 = vunpack.c.l.b16 %v476
      %v560 = vunpack.c.l.b16 %v477
      %v561 = vunpack.c.h.b16 %v477
      %v562 = vunpack.c.l.b16 %v478
      %v563 = vunpack.c.l.b16 %v479
      %v564 = vunpack.c.h.b16 %v479
      %v565 = vunpack.c.l.b16 %v480
      %v566 = vunpack.c.l.b16 %v481
      %v567 = vunpack.c.h.b16 %v481
      %v568 = vunpack.c.l.b16 %v482
      %v569 = vunpack.c.l.b16 %v483
      %v570 = vunpack.c.h.b16 %v483
      %v571 = vunpack.c.l.b16 %v484
      %v572 = vunpack.c.l.b16 %v485
      %v573 = vunpack.c.h.b16 %v485
      %v574 = vunpack.c.l.b16 %v486
      %v575 = vunpack.c.l.b16 %v487
      %v576 = vunpack.c.h.b16 %v487
      %v577 = vunpack.c.l.b16 %v488
      %v578 = vunpack.c.l.b16 %v489
      %v579 = vunpack.c.h.b16 %v489
      %v580 = vunpack.c.l.b16 %v490
      %v581 = vunpack.c.l.b16 %v491
      %v582 = vunpack.c.h.b16 %v491
      %v583 = vunpack.c.l.b16 %v492
      %v584 = vunpack.c.l.b16 %v493
      %v585 = vunpack.c.h.b16 %v493
      %v586 = vunpack.c.l.b16 %v494
      %v587 = vunpack.c.l.b16 %v495
      %v588 = vunpack.c.h.b16 %v495
      %v589 = vunpack.c.l.b16 %v496
      %v590 = vunpack.c.l.b16 %v497
      %v591 = vunpack.c.h.b16 %v497
      %v592 = vunpack.c.l.b16 %v498
      %v593 = vunpack.c.l.b16 %v499
      %v594 = vunpack.c.h.b16 %v499
      %v595 = vunpack.c.l.b16 %v500
      %v596 = vunpack.c.l.b16 %v501
      %v597 = vunpack.c.h.b16 %v501
      %v598 = vunpack.c.l.b16 %v502
      %v599 = vunpack.c.l.b16 %v503
      %v600 = vunpack.c.h.b16 %v503
      %v601 = vunpack.c.l.b16 %v504
      %v602 = vpack.c.b16 %v557, %v554
      %v603 = vpack.c.b16 %v558, %v555
      %v604 = vpack.c.b16 %v559, %v556
      %v605 = vpack.c.b16 %v563, %v560
      %v606 = vpack.c.b16 %v564, %v561
      %v607 = vpack.c.b16 %v565, %v562
      %v608 = vpack.c.b16 %v569, %v566
      %v609 = vpack.c.b16 %v570, %v567
      %v610 = vpack.c.b16 %v571, %v568
      %v611 = vpack.c.b16 %v575, %v572
      %v612 = vpack.c.b16 %v576, %v573
      %v613 = vpack.c.b16 %v577, %v574
      %v614 = vpack.c.b16 %v581, %v578
      %v615 = vpack.c.b16 %v582, %v579
      %v616 = vpack.c.b16 %v583, %v580
      %v617 = vpack.c.b16 %v587, %v584
      %v618 = vpack.c.b16 %v588, %v585
      %v619 = vpack.c.b16 %v589, %v586
      %v620 = vpack.c.b16 %v593, %v590
      %v621 = vpack.c.b16 %v594, %v591
      %v622 = vpack.c.b16 %v595, %v592
      %v623 = vpack.c.b16 %v599, %v596
      %v624 = vpack.c.b16 %v600, %v597
      %v625 = vpack.c.b16 %v601, %v598
      %650 = vmatprep.subr.bf16.mxu0 %v624
      %651 = vmatpush1.bf16.msra.mxu0 %v623
      %652 = vmatprep.subr.bf16.mxu0 %v621
      %653 = vmatpush1.bf16.msra.mxu0 %v620
      %654 = vmatprep.subr.bf16.mxu0 %v618
      %655 = vmatpush1.bf16.msra.mxu0 %v617
      %656 = vmatprep.subr.bf16.mxu0 %v615
      %657 = vmatpush1.bf16.msra.mxu0 %v614
      %658 = vmatprep.subr.bf16.mxu0 %v612
      %659 = vmatpush1.bf16.msra.mxu0 %v611
      %660 = vmatprep.subr.bf16.mxu0 %v609
      %661 = vmatpush1.bf16.msra.mxu0 %v608
      %662 = vmatprep.subr.bf16.mxu0 %v606
      %663 = vmatpush1.bf16.msra.mxu0 %v605
      %664 = vmatprep.subr.bf16.mxu0 %v603
      %665 = vmatpush1.bf16.msra.mxu0 %v602
      %666 = vmatprep.subr.bf16.mxu0 0
      %667 = vmatpush2.bf16.msra.mxu0 0
      %668 = vmatprep.subr.bf16.mxu0 0
      %669 = vmatpush2.bf16.msra.mxu0 0
      %670 = vmatprep.subr.bf16.mxu0 0
      %671 = vmatpush2.bf16.msra.mxu0 0
      %672 = vmatprep.subr.bf16.mxu0 0
      %673 = vmatpush2.bf16.msra.mxu0 0
      %674 = vmatprep.subr.bf16.mxu0 0
      %675 = vmatpush2.bf16.msra.mxu0 0
      %676 = vmatprep.subr.bf16.mxu0 0
      %677 = vmatpush2.bf16.msra.mxu0 0
      %678 = vmatprep.subr.bf16.mxu0 0
      %679 = vmatpush2.bf16.msra.mxu0 0
      %680 = vmatprep.subr.bf16.mxu0 0
      %681 = vmatpush2.bf16.msra.mxu0 0
      %682 = vmatprep.mubr.bf16.mxu0 0
      %683 = vmatmul.mubr.bf16.gmra.mxu0 %v472
      %v684 = vpop.f32.mrf.mxu0
      %v685 = vadd.f32 %v510, %v684
      %v686 = vpop.f32.mrf.mxu0
      %v687 = vadd.f32 %v514, %v686
      %v688 = vpop.f32.mrf.mxu0
      %v689 = vpop.f32.mrf.mxu0
      %690 = vdwg.mxu0
      %691 = vmatprep.subr.bf16.mxu0 0
      %692 = vmatpush1.bf16.msra.mxu0 %v625
      %693 = vmatprep.subr.bf16.mxu0 0
      %694 = vmatpush1.bf16.msra.mxu0 %v622
      %695 = vmatprep.subr.bf16.mxu0 0
      %696 = vmatpush1.bf16.msra.mxu0 %v619
      %697 = vmatprep.subr.bf16.mxu0 0
      %698 = vmatpush1.bf16.msra.mxu0 %v616
      %699 = vmatprep.subr.bf16.mxu0 0
      %700 = vmatpush1.bf16.msra.mxu0 %v613
      %701 = vmatprep.subr.bf16.mxu0 0
      %702 = vmatpush1.bf16.msra.mxu0 %v610
      %703 = vmatprep.subr.bf16.mxu0 0
      %704 = vmatpush1.bf16.msra.mxu0 %v607
      %705 = vmatprep.subr.bf16.mxu0 0
      %706 = vmatpush1.bf16.msra.mxu0 %v604
      %707 = vmatprep.subr.bf16.mxu0 0
      %708 = vmatpush2.bf16.msra.mxu0 0
      %709 = vmatprep.subr.bf16.mxu0 0
      %710 = vmatpush2.bf16.msra.mxu0 0
      %711 = vmatprep.subr.bf16.mxu0 0
      %712 = vmatpush2.bf16.msra.mxu0 0
      %713 = vmatprep.subr.bf16.mxu0 0
      %714 = vmatpush2.bf16.msra.mxu0 0
      %715 = vmatprep.subr.bf16.mxu0 0
      %716 = vmatpush2.bf16.msra.mxu0 0
      %717 = vmatprep.subr.bf16.mxu0 0
      %718 = vmatpush2.bf16.msra.mxu0 0
      %719 = vmatprep.subr.bf16.mxu0 0
      %720 = vmatpush2.bf16.msra.mxu0 0
      %721 = vmatprep.subr.bf16.mxu0 0
      %722 = vmatpush2.bf16.msra.mxu0 0
      %723 = vmatprep.mubr.bf16.mxu0 0
      %724 = vmatmul.mubr.bf16.gmra.mxu0 %v472
      %v725 = vpop.f32.mrf.mxu0
      %v726 = vadd.f32 %v518, %v725
      %v727 = vpop.f32.mrf.mxu0
      %v728 = vpop.f32.mrf.mxu0
      %v729 = vpop.f32.mrf.mxu0
      %730 = vdwg.mxu0
      %vm731 = vcmask 64512
      %v733 = vsel %vm731, %v685, 0
      %v736 = vsel %vm731, %v687, 0
      %738 = vmatprep.subr.mxu0 0.0
      %739 = vmatpush1.xpose.msra.mxu0 0.0
      %740 = vmatprep.subr.mxu0 0.0
      %741 = vmatpush1.xpose.msra.mxu0 0.0
      %742 = vmatprep.subr.mxu0 0.0
      %743 = vmatpush1.xpose.msra.mxu0 0.0
      %744 = vmatprep.subr.mxu0 0.0
      %745 = vmatpush1.xpose.msra.mxu0 0.0
      %746 = vmatprep.subr.mxu0 0.0
      %747 = vmatpush1.xpose.msra.mxu0 0.0
      %748 = vmatprep.subr.mxu0 0.0
      %749 = vmatpush1.xpose.msra.mxu0 0.0
      %750 = vmatprep.subr.mxu0 0.0
      %751 = vmatpush1.xpose.msra.mxu0 0.0
      %752 = vmatprep.subr.mxu0 0.0
      %753 = vmatpush1.xpose.msra.mxu0 0.0
      %754 = vmatprep.subr.mxu0 0.0
      %755 = vmatpush1.xpose.msra.mxu0 0.0
      %756 = vmatprep.subr.mxu0 0.0
      %757 = vmatpush1.xpose.msra.mxu0 0.0
      %758 = vmatprep.subr.mxu0 0.0
      %759 = vmatpush1.xpose.msra.mxu0 0.0
      %760 = vmatprep.subr.mxu0 0.0
      %761 = vmatpush1.xpose.msra.mxu0 0.0
      %762 = vmatprep.subr.mxu0 0.0
      %763 = vmatpush1.xpose.msra.mxu0 0.0
      %764 = vmatprep.subr.mxu0 0.0
      %765 = vmatpush1.xpose.msra.mxu0 0.0
      %766 = vmatprep.subr.mxu0 0.0
      %767 = vmatpush1.xpose.msra.mxu0 0.0
      %768 = vmatprep.subr.mxu0 0.0
      %769 = vmatpush1.xpose.msra.mxu0 %v736
      %770 = vmatprep.subr.mxu0 0.0
      %771 = vmatpush2.xpose.msra.mxu0 0.0
      %772 = vmatprep.subr.mxu0 0.0
      %773 = vmatpush2.xpose.msra.mxu0 0.0
      %774 = vmatprep.subr.mxu0 0.0
      %775 = vmatpush2.xpose.msra.mxu0 0.0
      %776 = vmatprep.subr.mxu0 0.0
      %777 = vmatpush2.xpose.msra.mxu0 0.0
      %778 = vmatprep.subr.mxu0 0.0
      %779 = vmatpush2.xpose.msra.mxu0 0.0
      %780 = vmatprep.subr.mxu0 0.0
      %781 = vmatpush2.xpose.msra.mxu0 0.0
      %782 = vmatprep.subr.mxu0 0.0
      %783 = vmatpush2.xpose.msra.mxu0 0.0
      %784 = vmatprep.subr.mxu0 0.0
      %785 = vmatpush2.xpose.msra.mxu0 0.0
      %786 = vmatprep.subr.mxu0 0.0
      %787 = vmatpush2.xpose.msra.mxu0 0.0
      %788 = vmatprep.subr.mxu0 0.0
      %789 = vmatpush2.xpose.msra.mxu0 0.0
      %790 = vmatprep.subr.mxu0 0.0
      %791 = vmatpush2.xpose.msra.mxu0 0.0
      %792 = vmatprep.subr.mxu0 0.0
      %793 = vmatpush2.xpose.msra.mxu0 0.0
      %794 = vmatprep.subr.mxu0 0.0
      %795 = vmatpush2.xpose.msra.mxu0 0.0
      %796 = vmatprep.subr.mxu0 0.0
      %797 = vmatpush2.xpose.msra.mxu0 0.0
      %798 = vmatprep.subr.mxu0 0.0
      %799 = vmatpush2.xpose.msra.mxu0 0.0
      %800 = vmatprep.subr.mxu0 0.0
      %801 = vmatpush2.xpose.msra.mxu0 0.0
      %802 = vmatprep.mubr.f32.mxu0 0.0
      %803 = vmatmul.mubr.f32.gmra.mxu0 %v733
      %v804 = vpop.f32.mrf.mxu0
      %v805 = vadd.f32 0.0, %v804
      %v806 = vpop.f32.mrf.mxu0
      %807 = vdwg.mxu0
      %v808 = vmul.f32 %v805, 0.35355338
      %vm809 = vcmask 36864
      %v810 = vsel %vm809, %v808, -inf
      %811 = vmax.xlane.f32.xlu0 %v810
      %v812 = vpop.xlane.xlu0 %811
      %v813 = vsub.f32 %v808, %v812
      %v814 = vmul.f32 %v813, 1.442695
      %v815 = vpow.pop %v814
      %v816 = vsel %vm809, %v815, 0.0
      %817 = vadd.xlane.f32.xlu0 %v816
      %v818 = vpop.xlane.xlu0 %817
      %v819 = vrcp.pop %v818
      %v820 = vmul.f32 %v815, %v819
      %vm821 = vcmask 39936
      %v823 = vsel %vm821, %v820, 0
      %v826 = vsel %vm441, %v726, 0
      %828 = vmatprep.subr.mxu0 0.0
      %829 = vmatpush1.msra.mxu0 0.0
      %830 = vmatprep.subr.mxu0 0.0
      %831 = vmatpush1.msra.mxu0 0.0
      %832 = vmatprep.subr.mxu0 0.0
      %833 = vmatpush1.msra.mxu0 0.0
      %834 = vmatprep.subr.mxu0 0.0
      %835 = vmatpush1.msra.mxu0 0.0
      %836 = vmatprep.subr.mxu0 0.0
      %837 = vmatpush1.msra.mxu0 0.0
      %838 = vmatprep.subr.mxu0 0.0
      %839 = vmatpush1.msra.mxu0 0.0
      %840 = vmatprep.subr.mxu0 0.0
      %841 = vmatpush1.msra.mxu0 0.0
      %842 = vmatprep.subr.mxu0 0.0
      %843 = vmatpush1.msra.mxu0 0.0
      %844 = vmatprep.subr.mxu0 0.0
      %845 = vmatpush1.msra.mxu0 0.0
      %846 = vmatprep.subr.mxu0 0.0
      %847 = vmatpush1.msra.mxu0 0.0
      %848 = vmatprep.subr.mxu0 0.0
      %849 = vmatpush1.msra.mxu0 0.0
      %850 = vmatprep.subr.mxu0 0.0
      %851 = vmatpush1.msra.mxu0 0.0
      %852 = vmatprep.subr.mxu0 0.0
      %853 = vmatpush1.msra.mxu0 0.0
      %854 = vmatprep.subr.mxu0 0.0
      %855 = vmatpush1.msra.mxu0 0.0
      %856 = vmatprep.subr.mxu0 0.0
      %857 = vmatpush1.msra.mxu0 0.0
      %858 = vmatprep.subr.mxu0 0.0
      %859 = vmatpush1.msra.mxu0 %v826
      %860 = vmatprep.subr.mxu0 0.0
      %861 = vmatpush2.msra.mxu0 0.0
      %862 = vmatprep.subr.mxu0 0.0
      %863 = vmatpush2.msra.mxu0 0.0
      %864 = vmatprep.subr.mxu0 0.0
      %865 = vmatpush2.msra.mxu0 0.0
      %866 = vmatprep.subr.mxu0 0.0
      %867 = vmatpush2.msra.mxu0 0.0
      %868 = vmatprep.subr.mxu0 0.0
      %869 = vmatpush2.msra.mxu0 0.0
      %870 = vmatprep.subr.mxu0 0.0
      %871 = vmatpush2.msra.mxu0 0.0
      %872 = vmatprep.subr.mxu0 0.0
      %873 = vmatpush2.msra.mxu0 0.0
      %874 = vmatprep.subr.mxu0 0.0
      %875 = vmatpush2.msra.mxu0 0.0
      %876 = vmatprep.subr.mxu0 0.0
      %877 = vmatpush2.msra.mxu0 0.0
      %878 = vmatprep.subr.mxu0 0.0
      %879 = vmatpush2.msra.mxu0 0.0
      %880 = vmatprep.subr.mxu0 0.0
      %881 = vmatpush2.msra.mxu0 0.0
      %882 = vmatprep.subr.mxu0 0.0
      %883 = vmatpush2.msra.mxu0 0.0
      %884 = vmatprep.subr.mxu0 0.0
      %885 = vmatpush2.msra.mxu0 0.0
      %886 = vmatprep.subr.mxu0 0.0
      %887 = vmatpush2.msra.mxu0 0.0
      %888 = vmatprep.subr.mxu0 0.0
      %889 = vmatpush2.msra.mxu0 0.0
      %890 = vmatprep.subr.mxu0 0.0
      %891 = vmatpush2.msra.mxu0 0.0
      %892 = vmatprep.mubr.f32.mxu0 0.0
      %893 = vmatmul.mubr.f32.gmra.mxu0 %v823
      %v894 = vpop.f32.mrf.mxu0
      %v895 = vadd.f32 0.0, %v894
      %v896 = vpop.f32.mrf.mxu0
      %897 = vdwg.mxu0
      %v898 = vpack.c.bf16 %v895, %v895
      %v899 = vld [vmem:[%s5] sm:$0xf]
      %900 = vrot.lane.b32.xlu0 %v685, 120
      %v901 = vpop.permute.xlu0 %900
      %902 = vrot.lane.b32.xlu0 %v687, 120
      %v903 = vpop.permute.xlu0 %902
      %v904 = vsel %vm731, %v901, 0
      %v906 = vsel %vm731, %v903, 0
      %908 = vmatprep.subr.mxu0 0.0
      %909 = vmatpush1.xpose.msra.mxu0 0.0
      %910 = vmatprep.subr.mxu0 0.0
      %911 = vmatpush1.xpose.msra.mxu0 0.0
      %912 = vmatprep.subr.mxu0 0.0
      %913 = vmatpush1.xpose.msra.mxu0 0.0
      %914 = vmatprep.subr.mxu0 0.0
      %915 = vmatpush1.xpose.msra.mxu0 0.0
      %916 = vmatprep.subr.mxu0 0.0
      %917 = vmatpush1.xpose.msra.mxu0 0.0
      %918 = vmatprep.subr.mxu0 0.0
      %919 = vmatpush1.xpose.msra.mxu0 0.0
      %920 = vmatprep.subr.mxu0 0.0
      %921 = vmatpush1.xpose.msra.mxu0 0.0
      %922 = vmatprep.subr.mxu0 0.0
      %923 = vmatpush1.xpose.msra.mxu0 0.0
      %924 = vmatprep.subr.mxu0 0.0
      %925 = vmatpush1.xpose.msra.mxu0 0.0
      %926 = vmatprep.subr.mxu0 0.0
      %927 = vmatpush1.xpose.msra.mxu0 0.0
      %928 = vmatprep.subr.mxu0 0.0
      %929 = vmatpush1.xpose.msra.mxu0 0.0
      %930 = vmatprep.subr.mxu0 0.0
      %931 = vmatpush1.xpose.msra.mxu0 0.0
      %932 = vmatprep.subr.mxu0 0.0
      %933 = vmatpush1.xpose.msra.mxu0 0.0
      %934 = vmatprep.subr.mxu0 0.0
      %935 = vmatpush1.xpose.msra.mxu0 0.0
      %936 = vmatprep.subr.mxu0 0.0
      %937 = vmatpush1.xpose.msra.mxu0 0.0
      %938 = vmatprep.subr.mxu0 0.0
      %939 = vmatpush1.xpose.msra.mxu0 %v906
      %940 = vmatprep.subr.mxu0 0.0
      %941 = vmatpush2.xpose.msra.mxu0 0.0
      %942 = vmatprep.subr.mxu0 0.0
      %943 = vmatpush2.xpose.msra.mxu0 0.0
      %944 = vmatprep.subr.mxu0 0.0
      %945 = vmatpush2.xpose.msra.mxu0 0.0
      %946 = vmatprep.subr.mxu0 0.0
      %947 = vmatpush2.xpose.msra.mxu0 0.0
      %948 = vmatprep.subr.mxu0 0.0
      %949 = vmatpush2.xpose.msra.mxu0 0.0
      %950 = vmatprep.subr.mxu0 0.0
      %951 = vmatpush2.xpose.msra.mxu0 0.0
      %952 = vmatprep.subr.mxu0 0.0
      %953 = vmatpush2.xpose.msra.mxu0 0.0
      %954 = vmatprep.subr.mxu0 0.0
      %955 = vmatpush2.xpose.msra.mxu0 0.0
      %956 = vmatprep.subr.mxu0 0.0
      %957 = vmatpush2.xpose.msra.mxu0 0.0
      %958 = vmatprep.subr.mxu0 0.0
      %959 = vmatpush2.xpose.msra.mxu0 0.0
      %960 = vmatprep.subr.mxu0 0.0
      %961 = vmatpush2.xpose.msra.mxu0 0.0
      %962 = vmatprep.subr.mxu0 0.0
      %963 = vmatpush2.xpose.msra.mxu0 0.0
      %964 = vmatprep.subr.mxu0 0.0
      %965 = vmatpush2.xpose.msra.mxu0 0.0
      %966 = vmatprep.subr.mxu0 0.0
      %967 = vmatpush2.xpose.msra.mxu0 0.0
      %968 = vmatprep.subr.mxu0 0.0
      %969 = vmatpush2.xpose.msra.mxu0 0.0
      %970 = vmatprep.subr.mxu0 0.0
      %971 = vmatpush2.xpose.msra.mxu0 0.0
      %972 = vmatprep.mubr.f32.mxu0 0.0
      %973 = vmatmul.mubr.f32.gmra.mxu0 %v904
      %v974 = vpop.f32.mrf.mxu0
      %v975 = vadd.f32 0.0, %v974
      %v976 = vpop.f32.mrf.mxu0
      %977 = vdwg.mxu0
      %v978 = vmul.f32 %v975, 0.35355338
      %v979 = vsel %vm809, %v978, -inf
      %980 = vmax.xlane.f32.xlu0 %v979
      %v981 = vpop.xlane.xlu0 %980
      %v982 = vsub.f32 %v978, %v981
      %v983 = vmul.f32 %v982, 1.442695
      %v984 = vpow.pop %v983
      %v985 = vsel %vm809, %v984, 0.0
      %986 = vadd.xlane.f32.xlu0 %v985
      %v987 = vpop.xlane.xlu0 %986
      %v988 = vrcp.pop %v987
      %v989 = vmul.f32 %v984, %v988
      %990 = vrot.lane.b32.xlu0 %v726, 120
      %v991 = vpop.permute.xlu0 %990
      %v993 = vsel %vm821, %v989, 0
      %v995 = vsel %vm441, %v991, 0
      %997 = vmatprep.subr.mxu0 0.0
      %998 = vmatpush1.msra.mxu0 0.0
      %999 = vmatprep.subr.mxu0 0.0
      %1000 = vmatpush1.msra.mxu0 0.0
      %1001 = vmatprep.subr.mxu0 0.0
      %1002 = vmatpush1.msra.mxu0 0.0
      %1003 = vmatprep.subr.mxu0 0.0
      %1004 = vmatpush1.msra.mxu0 0.0
      %1005 = vmatprep.subr.mxu0 0.0
      %1006 = vmatpush1.msra.mxu0 0.0
      %1007 = vmatprep.subr.mxu0 0.0
      %1008 = vmatpush1.msra.mxu0 0.0
      %1009 = vmatprep.subr.mxu0 0.0
      %1010 = vmatpush1.msra.mxu0 0.0
      %1011 = vmatprep.subr.mxu0 0.0
      %1012 = vmatpush1.msra.mxu0 0.0
      %1013 = vmatprep.subr.mxu0 0.0
      %1014 = vmatpush1.msra.mxu0 0.0
      %1015 = vmatprep.subr.mxu0 0.0
      %1016 = vmatpush1.msra.mxu0 0.0
      %1017 = vmatprep.subr.mxu0 0.0
      %1018 = vmatpush1.msra.mxu0 0.0
      %1019 = vmatprep.subr.mxu0 0.0
      %1020 = vmatpush1.msra.mxu0 0.0
      %1021 = vmatprep.subr.mxu0 0.0
      %1022 = vmatpush1.msra.mxu0 0.0
      %1023 = vmatprep.subr.mxu0 0.0
      %1024 = vmatpush1.msra.mxu0 0.0
      %1025 = vmatprep.subr.mxu0 0.0
      %1026 = vmatpush1.msra.mxu0 0.0
      %1027 = vmatprep.subr.mxu0 0.0
      %1028 = vmatpush1.msra.mxu0 %v995
      %1029 = vmatprep.subr.mxu0 0.0
      %1030 = vmatpush2.msra.mxu0 0.0
      %1031 = vmatprep.subr.mxu0 0.0
      %1032 = vmatpush2.msra.mxu0 0.0
      %1033 = vmatprep.subr.mxu0 0.0
      %1034 = vmatpush2.msra.mxu0 0.0
      %1035 = vmatprep.subr.mxu0 0.0
      %1036 = vmatpush2.msra.mxu0 0.0
      %1037 = vmatprep.subr.mxu0 0.0
      %1038 = vmatpush2.msra.mxu0 0.0
      %1039 = vmatprep.subr.mxu0 0.0
      %1040 = vmatpush2.msra.mxu0 0.0
      %1041 = vmatprep.subr.mxu0 0.0
      %1042 = vmatpush2.msra.mxu0 0.0
      %1043 = vmatprep.subr.mxu0 0.0
      %1044 = vmatpush2.msra.mxu0 0.0
      %1045 = vmatprep.subr.mxu0 0.0
      %1046 = vmatpush2.msra.mxu0 0.0
      %1047 = vmatprep.subr.mxu0 0.0
      %1048 = vmatpush2.msra.mxu0 0.0
      %1049 = vmatprep.subr.mxu0 0.0
      %1050 = vmatpush2.msra.mxu0 0.0
      %1051 = vmatprep.subr.mxu0 0.0
      %1052 = vmatpush2.msra.mxu0 0.0
      %1053 = vmatprep.subr.mxu0 0.0
      %1054 = vmatpush2.msra.mxu0 0.0
      %1055 = vmatprep.subr.mxu0 0.0
      %1056 = vmatpush2.msra.mxu0 0.0
      %1057 = vmatprep.subr.mxu0 0.0
      %1058 = vmatpush2.msra.mxu0 0.0
      %1059 = vmatprep.subr.mxu0 0.0
      %1060 = vmatpush2.msra.mxu0 0.0
      %1061 = vmatprep.mubr.f32.mxu0 0.0
      %1062 = vmatmul.mubr.f32.gmra.mxu0 %v993
      %v1063 = vpop.f32.mrf.mxu0
      %v1064 = vadd.f32 0.0, %v1063
      %v1065 = vpop.f32.mrf.mxu0
      %1066 = vdwg.mxu0
      %v1067 = vpack.c.bf16 %v1064, %v1064
      %s1068 = scalar_lea.vmem %s5, 4
      %v1069 = vld [vmem:[%s1068] sm:$0xf]
      %v1071 = vsel %vm731, %v1067, 0
      %vm1073 = vcmask 1043456
      %v1075 = vsel %vm1073, %v1069, 0
      %1077 = vmatprep.subr.bf16.mxu0 0
      %1078 = vmatpush1.bf16.msra.mxu0 0
      %1079 = vmatprep.subr.bf16.mxu0 0
      %1080 = vmatpush1.bf16.msra.mxu0 0
      %1081 = vmatprep.subr.bf16.mxu0 0
      %1082 = vmatpush1.bf16.msra.mxu0 0
      %1083 = vmatprep.subr.bf16.mxu0 0
      %1084 = vmatpush1.bf16.msra.mxu0 0
      %1085 = vmatprep.subr.bf16.mxu0 0
      %1086 = vmatpush1.bf16.msra.mxu0 0
      %1087 = vmatprep.subr.bf16.mxu0 0
      %1088 = vmatpush1.bf16.msra.mxu0 0
      %1089 = vmatprep.subr.bf16.mxu0 0
      %1090 = vmatpush1.bf16.msra.mxu0 0
      %1091 = vmatprep.subr.bf16.mxu0 0
      %1092 = vmatpush1.bf16.msra.mxu0 %v1075
      %1093 = vmatprep.subr.bf16.mxu0 0
      %1094 = vmatpush2.bf16.msra.mxu0 0
      %1095 = vmatprep.subr.bf16.mxu0 0
      %1096 = vmatpush2.bf16.msra.mxu0 0
      %1097 = vmatprep.subr.bf16.mxu0 0
      %1098 = vmatpush2.bf16.msra.mxu0 0
      %1099 = vmatprep.subr.bf16.mxu0 0
      %1100 = vmatpush2.bf16.msra.mxu0 0
      %1101 = vmatprep.subr.bf16.mxu0 0
      %1102 = vmatpush2.bf16.msra.mxu0 0
      %1103 = vmatprep.subr.bf16.mxu0 0
      %1104 = vmatpush2.bf16.msra.mxu0 0
      %1105 = vmatprep.subr.bf16.mxu0 0
      %1106 = vmatpush2.bf16.msra.mxu0 0
      %1107 = vmatprep.subr.bf16.mxu0 0
      %1108 = vmatpush2.bf16.msra.mxu0 0
      %1109 = vmatprep.mubr.bf16.mxu0 0
      %1110 = vmatmul.mubr.bf16.gmra.mxu0 %v1071
      %v1111 = vpop.f32.mrf.mxu0
      %v1112 = vadd.f32 0.0, %v1111
      %v1113 = vpop.f32.mrf.mxu0
      %v1114 = vpop.f32.mrf.mxu0
      %v1115 = vpop.f32.mrf.mxu0
      %1116 = vdwg.mxu0
      %v1118 = vsel %vm731, %v898, 0
      %v1121 = vsel %vm1073, %v899, 0
      %1123 = vmatprep.subr.bf16.mxu0 0
      %1124 = vmatpush1.bf16.msra.mxu0 0
      %1125 = vmatprep.subr.bf16.mxu0 0
      %1126 = vmatpush1.bf16.msra.mxu0 0
      %1127 = vmatprep.subr.bf16.mxu0 0
      %1128 = vmatpush1.bf16.msra.mxu0 0
      %1129 = vmatprep.subr.bf16.mxu0 0
      %1130 = vmatpush1.bf16.msra.mxu0 0
      %1131 = vmatprep.subr.bf16.mxu0 0
      %1132 = vmatpush1.bf16.msra.mxu0 0
      %1133 = vmatprep.subr.bf16.mxu0 0
      %1134 = vmatpush1.bf16.msra.mxu0 0
      %1135 = vmatprep.subr.bf16.mxu0 0
      %1136 = vmatpush1.bf16.msra.mxu0 0
      %1137 = vmatprep.subr.bf16.mxu0 0
      %1138 = vmatpush1.bf16.msra.mxu0 %v1121
      %1139 = vmatprep.subr.bf16.mxu0 0
      %1140 = vmatpush2.bf16.msra.mxu0 0
      %1141 = vmatprep.subr.bf16.mxu0 0
      %1142 = vmatpush2.bf16.msra.mxu0 0
      %1143 = vmatprep.subr.bf16.mxu0 0
      %1144 = vmatpush2.bf16.msra.mxu0 0
      %1145 = vmatprep.subr.bf16.mxu0 0
      %1146 = vmatpush2.bf16.msra.mxu0 0
      %1147 = vmatprep.subr.bf16.mxu0 0
      %1148 = vmatpush2.bf16.msra.mxu0 0
      %1149 = vmatprep.subr.bf16.mxu0 0
      %1150 = vmatpush2.bf16.msra.mxu0 0
      %1151 = vmatprep.subr.bf16.mxu0 0
      %1152 = vmatpush2.bf16.msra.mxu0 0
      %1153 = vmatprep.subr.bf16.mxu0 0
      %1154 = vmatpush2.bf16.msra.mxu0 0
      %1155 = vmatprep.mubr.bf16.mxu0 0
      %1156 = vmatmul.mubr.bf16.gmra.mxu0 %v1118
      %v1157 = vpop.f32.mrf.mxu0
      %v1158 = vadd.f32 %v1112, %v1157
      %v1159 = vpop.f32.mrf.mxu0
      %v1160 = vpop.f32.mrf.mxu0
      %v1161 = vpop.f32.mrf.mxu0
      %1162 = vdwg.mxu0
      %1163 = vrot.lane.b32.xlu0 %v685, 112
      %v1164 = vpop.permute.xlu0 %1163
      %1165 = vrot.lane.b32.xlu0 %v687, 112
      %v1166 = vpop.permute.xlu0 %1165
      %v1167 = vsel %vm731, %v1164, 0
      %v1169 = vsel %vm731, %v1166, 0
      %1171 = vmatprep.subr.mxu0 0.0
      %1172 = vmatpush1.xpose.msra.mxu0 0.0
      %1173 = vmatprep.subr.mxu0 0.0
      %1174 = vmatpush1.xpose.msra.mxu0 0.0
      %1175 = vmatprep.subr.mxu0 0.0
      %1176 = vmatpush1.xpose.msra.mxu0 0.0
      %1177 = vmatprep.subr.mxu0 0.0
      %1178 = vmatpush1.xpose.msra.mxu0 0.0
      %1179 = vmatprep.subr.mxu0 0.0
      %1180 = vmatpush1.xpose.msra.mxu0 0.0
      %1181 = vmatprep.subr.mxu0 0.0
      %1182 = vmatpush1.xpose.msra.mxu0 0.0
      %1183 = vmatprep.subr.mxu0 0.0
      %1184 = vmatpush1.xpose.msra.mxu0 0.0
      %1185 = vmatprep.subr.mxu0 0.0
      %1186 = vmatpush1.xpose.msra.mxu0 0.0
      %1187 = vmatprep.subr.mxu0 0.0
      %1188 = vmatpush1.xpose.msra.mxu0 0.0
      %1189 = vmatprep.subr.mxu0 0.0
      %1190 = vmatpush1.xpose.msra.mxu0 0.0
      %1191 = vmatprep.subr.mxu0 0.0
      %1192 = vmatpush1.xpose.msra.mxu0 0.0
      %1193 = vmatprep.subr.mxu0 0.0
      %1194 = vmatpush1.xpose.msra.mxu0 0.0
      %1195 = vmatprep.subr.mxu0 0.0
      %1196 = vmatpush1.xpose.msra.mxu0 0.0
      %1197 = vmatprep.subr.mxu0 0.0
      %1198 = vmatpush1.xpose.msra.mxu0 0.0
      %1199 = vmatprep.subr.mxu0 0.0
      %1200 = vmatpush1.xpose.msra.mxu0 0.0
      %1201 = vmatprep.subr.mxu0 0.0
      %1202 = vmatpush1.xpose.msra.mxu0 %v1169
      %1203 = vmatprep.subr.mxu0 0.0
      %1204 = vmatpush2.xpose.msra.mxu0 0.0
      %1205 = vmatprep.subr.mxu0 0.0
      %1206 = vmatpush2.xpose.msra.mxu0 0.0
      %1207 = vmatprep.subr.mxu0 0.0
      %1208 = vmatpush2.xpose.msra.mxu0 0.0
      %1209 = vmatprep.subr.mxu0 0.0
      %1210 = vmatpush2.xpose.msra.mxu0 0.0
      %1211 = vmatprep.subr.mxu0 0.0
      %1212 = vmatpush2.xpose.msra.mxu0 0.0
      %1213 = vmatprep.subr.mxu0 0.0
      %1214 = vmatpush2.xpose.msra.mxu0 0.0
      %1215 = vmatprep.subr.mxu0 0.0
      %1216 = vmatpush2.xpose.msra.mxu0 0.0
      %1217 = vmatprep.subr.mxu0 0.0
      %1218 = vmatpush2.xpose.msra.mxu0 0.0
      %1219 = vmatprep.subr.mxu0 0.0
      %1220 = vmatpush2.xpose.msra.mxu0 0.0
      %1221 = vmatprep.subr.mxu0 0.0
      %1222 = vmatpush2.xpose.msra.mxu0 0.0
      %1223 = vmatprep.subr.mxu0 0.0
      %1224 = vmatpush2.xpose.msra.mxu0 0.0
      %1225 = vmatprep.subr.mxu0 0.0
      %1226 = vmatpush2.xpose.msra.mxu0 0.0
      %1227 = vmatprep.subr.mxu0 0.0
      %1228 = vmatpush2.xpose.msra.mxu0 0.0
      %1229 = vmatprep.subr.mxu0 0.0
      %1230 = vmatpush2.xpose.msra.mxu0 0.0
      %1231 = vmatprep.subr.mxu0 0.0
      %1232 = vmatpush2.xpose.msra.mxu0 0.0
      %1233 = vmatprep.subr.mxu0 0.0
      %1234 = vmatpush2.xpose.msra.mxu0 0.0
      %1235 = vmatprep.mubr.f32.mxu0 0.0
      %1236 = vmatmul.mubr.f32.gmra.mxu0 %v1167
      %v1237 = vpop.f32.mrf.mxu0
      %v1238 = vadd.f32 0.0, %v1237
      %v1239 = vpop.f32.mrf.mxu0
      %1240 = vdwg.mxu0
      %v1241 = vmul.f32 %v1238, 0.35355338
      %v1242 = vsel %vm809, %v1241, -inf
      %1243 = vmax.xlane.f32.xlu0 %v1242
      %v1244 = vpop.xlane.xlu0 %1243
      %v1245 = vsub.f32 %v1241, %v1244
      %v1246 = vmul.f32 %v1245, 1.442695
      %v1247 = vpow.pop %v1246
      %v1248 = vsel %vm809, %v1247, 0.0
      %1249 = vadd.xlane.f32.xlu0 %v1248
      %v1250 = vpop.xlane.xlu0 %1249
      %v1251 = vrcp.pop %v1250
      %v1252 = vmul.f32 %v1247, %v1251
      %1253 = vrot.lane.b32.xlu0 %v726, 112
      %v1254 = vpop.permute.xlu0 %1253
      %v1256 = vsel %vm821, %v1252, 0
      %v1258 = vsel %vm441, %v1254, 0
      %1260 = vmatprep.subr.mxu0 0.0
      %1261 = vmatpush1.msra.mxu0 0.0
      %1262 = vmatprep.subr.mxu0 0.0
      %1263 = vmatpush1.msra.mxu0 0.0
      %1264 = vmatprep.subr.mxu0 0.0
      %1265 = vmatpush1.msra.mxu0 0.0
      %1266 = vmatprep.subr.mxu0 0.0
      %1267 = vmatpush1.msra.mxu0 0.0
      %1268 = vmatprep.subr.mxu0 0.0
      %1269 = vmatpush1.msra.mxu0 0.0
      %1270 = vmatprep.subr.mxu0 0.0
      %1271 = vmatpush1.msra.mxu0 0.0
      %1272 = vmatprep.subr.mxu0 0.0
      %1273 = vmatpush1.msra.mxu0 0.0
      %1274 = vmatprep.subr.mxu0 0.0
      %1275 = vmatpush1.msra.mxu0 0.0
      %1276 = vmatprep.subr.mxu0 0.0
      %1277 = vmatpush1.msra.mxu0 0.0
      %1278 = vmatprep.subr.mxu0 0.0
      %1279 = vmatpush1.msra.mxu0 0.0
      %1280 = vmatprep.subr.mxu0 0.0
      %1281 = vmatpush1.msra.mxu0 0.0
      %1282 = vmatprep.subr.mxu0 0.0
      %1283 = vmatpush1.msra.mxu0 0.0
      %1284 = vmatprep.subr.mxu0 0.0
      %1285 = vmatpush1.msra.mxu0 0.0
      %1286 = vmatprep.subr.mxu0 0.0
      %1287 = vmatpush1.msra.mxu0 0.0
      %1288 = vmatprep.subr.mxu0 0.0
      %1289 = vmatpush1.msra.mxu0 0.0
      %1290 = vmatprep.subr.mxu0 0.0
      %1291 = vmatpush1.msra.mxu0 %v1258
      %1292 = vmatprep.subr.mxu0 0.0
      %1293 = vmatpush2.msra.mxu0 0.0
      %1294 = vmatprep.subr.mxu0 0.0
      %1295 = vmatpush2.msra.mxu0 0.0
      %1296 = vmatprep.subr.mxu0 0.0
      %1297 = vmatpush2.msra.mxu0 0.0
      %1298 = vmatprep.subr.mxu0 0.0
      %1299 = vmatpush2.msra.mxu0 0.0
      %1300 = vmatprep.subr.mxu0 0.0
      %1301 = vmatpush2.msra.mxu0 0.0
      %1302 = vmatprep.subr.mxu0 0.0
      %1303 = vmatpush2.msra.mxu0 0.0
      %1304 = vmatprep.subr.mxu0 0.0
      %1305 = vmatpush2.msra.mxu0 0.0
      %1306 = vmatprep.subr.mxu0 0.0
      %1307 = vmatpush2.msra.mxu0 0.0
      %1308 = vmatprep.subr.mxu0 0.0
      %1309 = vmatpush2.msra.mxu0 0.0
      %1310 = vmatprep.subr.mxu0 0.0
      %1311 = vmatpush2.msra.mxu0 0.0
      %1312 = vmatprep.subr.mxu0 0.0
      %1313 = vmatpush2.msra.mxu0 0.0
      %1314 = vmatprep.subr.mxu0 0.0
      %1315 = vmatpush2.msra.mxu0 0.0
      %1316 = vmatprep.subr.mxu0 0.0
      %1317 = vmatpush2.msra.mxu0 0.0
      %1318 = vmatprep.subr.mxu0 0.0
      %1319 = vmatpush2.msra.mxu0 0.0
      %1320 = vmatprep.subr.mxu0 0.0
      %1321 = vmatpush2.msra.mxu0 0.0
      %1322 = vmatprep.subr.mxu0 0.0
      %1323 = vmatpush2.msra.mxu0 0.0
      %1324 = vmatprep.mubr.f32.mxu0 0.0
      %1325 = vmatmul.mubr.f32.gmra.mxu0 %v1256
      %v1326 = vpop.f32.mrf.mxu0
      %v1327 = vadd.f32 0.0, %v1326
      %v1328 = vpop.f32.mrf.mxu0
      %1329 = vdwg.mxu0
      %v1330 = vpack.c.bf16 %v1327, %v1327
      %s1331 = scalar_lea.vmem %s5, 8
      %v1332 = vld [vmem:[%s1331] sm:$0xf]
      %v1334 = vsel %vm731, %v1330, 0
      %v1337 = vsel %vm1073, %v1332, 0
      %1339 = vmatprep.subr.bf16.mxu0 0
      %1340 = vmatpush1.bf16.msra.mxu0 0
      %1341 = vmatprep.subr.bf16.mxu0 0
      %1342 = vmatpush1.bf16.msra.mxu0 0
      %1343 = vmatprep.subr.bf16.mxu0 0
      %1344 = vmatpush1.bf16.msra.mxu0 0
      %1345 = vmatprep.subr.bf16.mxu0 0
      %1346 = vmatpush1.bf16.msra.mxu0 0
      %1347 = vmatprep.subr.bf16.mxu0 0
      %1348 = vmatpush1.bf16.msra.mxu0 0
      %1349 = vmatprep.subr.bf16.mxu0 0
      %1350 = vmatpush1.bf16.msra.mxu0 0
      %1351 = vmatprep.subr.bf16.mxu0 0
      %1352 = vmatpush1.bf16.msra.mxu0 0
      %1353 = vmatprep.subr.bf16.mxu0 0
      %1354 = vmatpush1.bf16.msra.mxu0 %v1337
      %1355 = vmatprep.subr.bf16.mxu0 0
      %1356 = vmatpush2.bf16.msra.mxu0 0
      %1357 = vmatprep.subr.bf16.mxu0 0
      %1358 = vmatpush2.bf16.msra.mxu0 0
      %1359 = vmatprep.subr.bf16.mxu0 0
      %1360 = vmatpush2.bf16.msra.mxu0 0
      %1361 = vmatprep.subr.bf16.mxu0 0
      %1362 = vmatpush2.bf16.msra.mxu0 0
      %1363 = vmatprep.subr.bf16.mxu0 0
      %1364 = vmatpush2.bf16.msra.mxu0 0
      %1365 = vmatprep.subr.bf16.mxu0 0
      %1366 = vmatpush2.bf16.msra.mxu0 0
      %1367 = vmatprep.subr.bf16.mxu0 0
      %1368 = vmatpush2.bf16.msra.mxu0 0
      %1369 = vmatprep.subr.bf16.mxu0 0
      %1370 = vmatpush2.bf16.msra.mxu0 0
      %1371 = vmatprep.mubr.bf16.mxu0 0
      %1372 = vmatmul.mubr.bf16.gmra.mxu0 %v1334
      %v1373 = vpop.f32.mrf.mxu0
      %v1374 = vadd.f32 0.0, %v1373
      %v1375 = vpop.f32.mrf.mxu0
      %v1376 = vpop.f32.mrf.mxu0
      %v1377 = vpop.f32.mrf.mxu0
      %1378 = vdwg.mxu0
      %v1379 = vadd.f32 %v1158, %v1374
      %1380 = vrot.lane.b32.xlu0 %v685, 104
      %v1381 = vpop.permute.xlu0 %1380
      %1382 = vrot.lane.b32.xlu0 %v687, 104
      %v1383 = vpop.permute.xlu0 %1382
      %v1384 = vsel %vm731, %v1381, 0
      %v1386 = vsel %vm731, %v1383, 0
      %1388 = vmatprep.subr.mxu0 0.0
      %1389 = vmatpush1.xpose.msra.mxu0 0.0
      %1390 = vmatprep.subr.mxu0 0.0
      %1391 = vmatpush1.xpose.msra.mxu0 0.0
      %1392 = vmatprep.subr.mxu0 0.0
      %1393 = vmatpush1.xpose.msra.mxu0 0.0
      %1394 = vmatprep.subr.mxu0 0.0
      %1395 = vmatpush1.xpose.msra.mxu0 0.0
      %1396 = vmatprep.subr.mxu0 0.0
      %1397 = vmatpush1.xpose.msra.mxu0 0.0
      %1398 = vmatprep.subr.mxu0 0.0
      %1399 = vmatpush1.xpose.msra.mxu0 0.0
      %1400 = vmatprep.subr.mxu0 0.0
      %1401 = vmatpush1.xpose.msra.mxu0 0.0
      %1402 = vmatprep.subr.mxu0 0.0
      %1403 = vmatpush1.xpose.msra.mxu0 0.0
      %1404 = vmatprep.subr.mxu0 0.0
      %1405 = vmatpush1.xpose.msra.mxu0 0.0
      %1406 = vmatprep.subr.mxu0 0.0
      %1407 = vmatpush1.xpose.msra.mxu0 0.0
      %1408 = vmatprep.subr.mxu0 0.0
      %1409 = vmatpush1.xpose.msra.mxu0 0.0
      %1410 = vmatprep.subr.mxu0 0.0
      %1411 = vmatpush1.xpose.msra.mxu0 0.0
      %1412 = vmatprep.subr.mxu0 0.0
      %1413 = vmatpush1.xpose.msra.mxu0 0.0
      %1414 = vmatprep.subr.mxu0 0.0
      %1415 = vmatpush1.xpose.msra.mxu0 0.0
      %1416 = vmatprep.subr.mxu0 0.0
      %1417 = vmatpush1.xpose.msra.mxu0 0.0
      %1418 = vmatprep.subr.mxu0 0.0
      %1419 = vmatpush1.xpose.msra.mxu0 %v1386
      %1420 = vmatprep.subr.mxu0 0.0
      %1421 = vmatpush2.xpose.msra.mxu0 0.0
      %1422 = vmatprep.subr.mxu0 0.0
      %1423 = vmatpush2.xpose.msra.mxu0 0.0
      %1424 = vmatprep.subr.mxu0 0.0
      %1425 = vmatpush2.xpose.msra.mxu0 0.0
      %1426 = vmatprep.subr.mxu0 0.0
      %1427 = vmatpush2.xpose.msra.mxu0 0.0
      %1428 = vmatprep.subr.mxu0 0.0
      %1429 = vmatpush2.xpose.msra.mxu0 0.0
      %1430 = vmatprep.subr.mxu0 0.0
      %1431 = vmatpush2.xpose.msra.mxu0 0.0
      %1432 = vmatprep.subr.mxu0 0.0
      %1433 = vmatpush2.xpose.msra.mxu0 0.0
      %1434 = vmatprep.subr.mxu0 0.0
      %1435 = vmatpush2.xpose.msra.mxu0 0.0
      %1436 = vmatprep.subr.mxu0 0.0
      %1437 = vmatpush2.xpose.msra.mxu0 0.0
      %1438 = vmatprep.subr.mxu0 0.0
      %1439 = vmatpush2.xpose.msra.mxu0 0.0
      %1440 = vmatprep.subr.mxu0 0.0
      %1441 = vmatpush2.xpose.msra.mxu0 0.0
      %1442 = vmatprep.subr.mxu0 0.0
      %1443 = vmatpush2.xpose.msra.mxu0 0.0
      %1444 = vmatprep.subr.mxu0 0.0
      %1445 = vmatpush2.xpose.msra.mxu0 0.0
      %1446 = vmatprep.subr.mxu0 0.0
      %1447 = vmatpush2.xpose.msra.mxu0 0.0
      %1448 = vmatprep.subr.mxu0 0.0
      %1449 = vmatpush2.xpose.msra.mxu0 0.0
      %1450 = vmatprep.subr.mxu0 0.0
      %1451 = vmatpush2.xpose.msra.mxu0 0.0
      %1452 = vmatprep.mubr.f32.mxu0 0.0
      %1453 = vmatmul.mubr.f32.gmra.mxu0 %v1384
      %v1454 = vpop.f32.mrf.mxu0
      %v1455 = vadd.f32 0.0, %v1454
      %v1456 = vpop.f32.mrf.mxu0
      %1457 = vdwg.mxu0
      %v1458 = vmul.f32 %v1455, 0.35355338
      %v1459 = vsel %vm809, %v1458, -inf
      %1460 = vmax.xlane.f32.xlu0 %v1459
      %v1461 = vpop.xlane.xlu0 %1460
      %v1462 = vsub.f32 %v1458, %v1461
      %v1463 = vmul.f32 %v1462, 1.442695
      %v1464 = vpow.pop %v1463
      %v1465 = vsel %vm809, %v1464, 0.0
      %1466 = vadd.xlane.f32.xlu0 %v1465
      %v1467 = vpop.xlane.xlu0 %1466
      %v1468 = vrcp.pop %v1467
      %v1469 = vmul.f32 %v1464, %v1468
      %1470 = vrot.lane.b32.xlu0 %v726, 104
      %v1471 = vpop.permute.xlu0 %1470
      %v1473 = vsel %vm821, %v1469, 0
      %v1475 = vsel %vm441, %v1471, 0
      %1477 = vmatprep.subr.mxu0 0.0
      %1478 = vmatpush1.msra.mxu0 0.0
      %1479 = vmatprep.subr.mxu0 0.0
      %1480 = vmatpush1.msra.mxu0 0.0
      %1481 = vmatprep.subr.mxu0 0.0
      %1482 = vmatpush1.msra.mxu0 0.0
      %1483 = vmatprep.subr.mxu0 0.0
      %1484 = vmatpush1.msra.mxu0 0.0
      %1485 = vmatprep.subr.mxu0 0.0
      %1486 = vmatpush1.msra.mxu0 0.0
      %1487 = vmatprep.subr.mxu0 0.0
      %1488 = vmatpush1.msra.mxu0 0.0
      %1489 = vmatprep.subr.mxu0 0.0
      %1490 = vmatpush1.msra.mxu0 0.0
      %1491 = vmatprep.subr.mxu0 0.0
      %1492 = vmatpush1.msra.mxu0 0.0
      %1493 = vmatprep.subr.mxu0 0.0
      %1494 = vmatpush1.msra.mxu0 0.0
      %1495 = vmatprep.subr.mxu0 0.0
      %1496 = vmatpush1.msra.mxu0 0.0
      %1497 = vmatprep.subr.mxu0 0.0
      %1498 = vmatpush1.msra.mxu0 0.0
      %1499 = vmatprep.subr.mxu0 0.0
      %1500 = vmatpush1.msra.mxu0 0.0
      %1501 = vmatprep.subr.mxu0 0.0
      %1502 = vmatpush1.msra.mxu0 0.0
      %1503 = vmatprep.subr.mxu0 0.0
      %1504 = vmatpush1.msra.mxu0 0.0
      %1505 = vmatprep.subr.mxu0 0.0
      %1506 = vmatpush1.msra.mxu0 0.0
      %1507 = vmatprep.subr.mxu0 0.0
      %1508 = vmatpush1.msra.mxu0 %v1475
      %1509 = vmatprep.subr.mxu0 0.0
      %1510 = vmatpush2.msra.mxu0 0.0
      %1511 = vmatprep.subr.mxu0 0.0
      %1512 = vmatpush2.msra.mxu0 0.0
      %1513 = vmatprep.subr.mxu0 0.0
      %1514 = vmatpush2.msra.mxu0 0.0
      %1515 = vmatprep.subr.mxu0 0.0
      %1516 = vmatpush2.msra.mxu0 0.0
      %1517 = vmatprep.subr.mxu0 0.0
      %1518 = vmatpush2.msra.mxu0 0.0
      %1519 = vmatprep.subr.mxu0 0.0
      %1520 = vmatpush2.msra.mxu0 0.0
      %1521 = vmatprep.subr.mxu0 0.0
      %1522 = vmatpush2.msra.mxu0 0.0
      %1523 = vmatprep.subr.mxu0 0.0
      %1524 = vmatpush2.msra.mxu0 0.0
      %1525 = vmatprep.subr.mxu0 0.0
      %1526 = vmatpush2.msra.mxu0 0.0
      %1527 = vmatprep.subr.mxu0 0.0
      %1528 = vmatpush2.msra.mxu0 0.0
      %1529 = vmatprep.subr.mxu0 0.0
      %1530 = vmatpush2.msra.mxu0 0.0
      %1531 = vmatprep.subr.mxu0 0.0
      %1532 = vmatpush2.msra.mxu0 0.0
      %1533 = vmatprep.subr.mxu0 0.0
      %1534 = vmatpush2.msra.mxu0 0.0
      %1535 = vmatprep.subr.mxu0 0.0
      %1536 = vmatpush2.msra.mxu0 0.0
      %1537 = vmatprep.subr.mxu0 0.0
      %1538 = vmatpush2.msra.mxu0 0.0
      %1539 = vmatprep.subr.mxu0 0.0
      %1540 = vmatpush2.msra.mxu0 0.0
      %1541 = vmatprep.mubr.f32.mxu0 0.0
      %1542 = vmatmul.mubr.f32.gmra.mxu0 %v1473
      %v1543 = vpop.f32.mrf.mxu0
      %v1544 = vadd.f32 0.0, %v1543
      %v1545 = vpop.f32.mrf.mxu0
      %1546 = vdwg.mxu0
      %v1547 = vpack.c.bf16 %v1544, %v1544
      %s1548 = scalar_lea.vmem %s5, 12
      %v1549 = vld [vmem:[%s1548] sm:$0xf]
      %v1551 = vsel %vm731, %v1547, 0
      %v1554 = vsel %vm1073, %v1549, 0
      %1556 = vmatprep.subr.bf16.mxu0 0
      %1557 = vmatpush1.bf16.msra.mxu0 0
      %1558 = vmatprep.subr.bf16.mxu0 0
      %1559 = vmatpush1.bf16.msra.mxu0 0
      %1560 = vmatprep.subr.bf16.mxu0 0
      %1561 = vmatpush1.bf16.msra.mxu0 0
      %1562 = vmatprep.subr.bf16.mxu0 0
      %1563 = vmatpush1.bf16.msra.mxu0 0
      %1564 = vmatprep.subr.bf16.mxu0 0
      %1565 = vmatpush1.bf16.msra.mxu0 0
      %1566 = vmatprep.subr.bf16.mxu0 0
      %1567 = vmatpush1.bf16.msra.mxu0 0
      %1568 = vmatprep.subr.bf16.mxu0 0
      %1569 = vmatpush1.bf16.msra.mxu0 0
      %1570 = vmatprep.subr.bf16.mxu0 0
      %1571 = vmatpush1.bf16.msra.mxu0 %v1554
      %1572 = vmatprep.subr.bf16.mxu0 0
      %1573 = vmatpush2.bf16.msra.mxu0 0
      %1574 = vmatprep.subr.bf16.mxu0 0
      %1575 = vmatpush2.bf16.msra.mxu0 0
      %1576 = vmatprep.subr.bf16.mxu0 0
      %1577 = vmatpush2.bf16.msra.mxu0 0
      %1578 = vmatprep.subr.bf16.mxu0 0
      %1579 = vmatpush2.bf16.msra.mxu0 0
      %1580 = vmatprep.subr.bf16.mxu0 0
      %1581 = vmatpush2.bf16.msra.mxu0 0
      %1582 = vmatprep.subr.bf16.mxu0 0
      %1583 = vmatpush2.bf16.msra.mxu0 0
      %1584 = vmatprep.subr.bf16.mxu0 0
      %1585 = vmatpush2.bf16.msra.mxu0 0
      %1586 = vmatprep.subr.bf16.mxu0 0
      %1587 = vmatpush2.bf16.msra.mxu0 0
      %1588 = vmatprep.mubr.bf16.mxu0 0
      %1589 = vmatmul.mubr.bf16.gmra.mxu0 %v1551
      %v1590 = vpop.f32.mrf.mxu0
      %v1591 = vadd.f32 0.0, %v1590
      %v1592 = vpop.f32.mrf.mxu0
      %v1593 = vpop.f32.mrf.mxu0
      %v1594 = vpop.f32.mrf.mxu0
      %1595 = vdwg.mxu0
      %v1596 = vadd.f32 %v1379, %v1591
      %v1597 = vadd.f32 %v438, %v1596
      %v1598 = vld [vmem:[%s6] sm:$0x1]
      %v1600 = vlaneseq
      %v1601 = vshrl.u32 %v1600, 7
      %v1602 = vsub.s32 0, %v1601
      %v1603 = vrot.slane %v1598, %v1602
      %v1605 = vadd.f32 %v1597, %v1603
      %v1606 = vld [vmem:[%s7] sm:$0x1]
      %v1607 = vld [vmem:[%s8] sm:$0x1]
      %v1608 = vsel %vm441, %v1605, 0.0
      %1609 = vadd.xlane.f32.xlu0 %v1608
      %v1610 = vpop.xlane.xlu0 %1609
      %v1611 = vmul.f32 %v1605, %v1605
      %v1612 = vsel %vm441, %v1611, 0.0
      %1613 = vadd.xlane.f32.xlu0 %v1612
      %v1614 = vpop.xlane.xlu0 %1613
      %v1615 = vmul.f32 %v1610, 0.03125
      %v1616 = vmul.f32 %v1614, 0.03125
      %v1617 = vmul.f32 %v1615, %v1615
      %v1618 = vsub.f32 %v1616, %v1617
      %v1619 = vmax.f32 %v1618, 0.0
      %v1620 = vadd.f32 %v1619, 1e-05
      %v1621 = vrsqrt.pop %v1620
      %v1622 = vsub.f32 %v1605, %v1615
      %v1623 = vmul.f32 %v1622, %v1621
      %v1625 = vlaneseq
      %v1626 = vshrl.u32 %v1625, 7
      %v1627 = vsub.s32 0, %v1626
      %v1628 = vrot.slane %v1606, %v1627
      %v1630 = vmul.f32 %v1623, %v1628
      %v1632 = vlaneseq
      %v1633 = vshrl.u32 %v1632, 7
      %v1634 = vsub.s32 0, %v1633
      %v1635 = vrot.slane %v1607, %v1634
      %v1637 = vadd.f32 %v1630, %v1635
      %v1638 = vpack.c.bf16 %v1637, %v1637
      %v1639 = vld [vmem:[%s9] sm:$0xf]
      %v1640 = vld [vmem:[%s9 + $0x4] sm:$0xf]
      %v1641 = vld [vmem:[%s9 + $0x8] sm:$0xf]
      %v1642 = vld [vmem:[%s9 + $0xc] sm:$0xf]
      %v1643 = vld [vmem:[%s9 + $0x10] sm:$0xf]
      %v1644 = vld [vmem:[%s9 + $0x14] sm:$0xf]
      %v1645 = vld [vmem:[%s9 + $0x18] sm:$0xf]
      %v1646 = vld [vmem:[%s9 + $0x1c] sm:$0xf]
      %v1647 = vld [vmem:[%s9 + $0x20] sm:$0xf]
      %v1648 = vld [vmem:[%s9 + $0x24] sm:$0xf]
      %v1649 = vld [vmem:[%s9 + $0x28] sm:$0xf]
      %v1650 = vld [vmem:[%s9 + $0x2c] sm:$0xf]
      %v1651 = vld [vmem:[%s9 + $0x30] sm:$0xf]
      %v1652 = vld [vmem:[%s9 + $0x34] sm:$0xf]
      %v1653 = vld [vmem:[%s9 + $0x38] sm:$0xf]
      %v1654 = vld [vmem:[%s9 + $0x3c] sm:$0xf]
      %v1655 = vld [vmem:[%s10] sm:$0x1]
      %v1657 = vlaneseq
      %v1658 = vshrl.u32 %v1657, 7
      %v1659 = vsub.s32 0, %v1658
      %v1660 = vrot.slane %v1655, %v1659
      %v1678 = vunpack.c.l.b16 %v1639
      %v1679 = vunpack.c.l.b16 %v1640
      %v1680 = vunpack.c.l.b16 %v1641
      %v1681 = vunpack.c.l.b16 %v1642
      %v1682 = vunpack.c.l.b16 %v1643
      %v1683 = vunpack.c.l.b16 %v1644
      %v1684 = vunpack.c.l.b16 %v1645
      %v1685 = vunpack.c.l.b16 %v1646
      %v1686 = vunpack.c.l.b16 %v1647
      %v1687 = vunpack.c.l.b16 %v1648
      %v1688 = vunpack.c.l.b16 %v1649
      %v1689 = vunpack.c.l.b16 %v1650
      %v1690 = vunpack.c.l.b16 %v1651
      %v1691 = vunpack.c.l.b16 %v1652
      %v1692 = vunpack.c.l.b16 %v1653
      %v1693 = vunpack.c.l.b16 %v1654
      %v1694 = vpack.c.b16 %v1679, %v1678
      %v1695 = vpack.c.b16 %v1681, %v1680
      %v1696 = vpack.c.b16 %v1683, %v1682
      %v1697 = vpack.c.b16 %v1685, %v1684
      %v1698 = vpack.c.b16 %v1687, %v1686
      %v1699 = vpack.c.b16 %v1689, %v1688
      %v1700 = vpack.c.b16 %v1691, %v1690
      %v1701 = vpack.c.b16 %v1693, %v1692
      %1710 = vmatprep.subr.bf16.mxu0 0
      %1711 = vmatpush1.bf16.msra.mxu0 %v1701
      %1712 = vmatprep.subr.bf16.mxu0 0
      %1713 = vmatpush1.bf16.msra.mxu0 %v1700
      %1714 = vmatprep.subr.bf16.mxu0 0
      %1715 = vmatpush1.bf16.msra.mxu0 %v1699
      %1716 = vmatprep.subr.bf16.mxu0 0
      %1717 = vmatpush1.bf16.msra.mxu0 %v1698
      %1718 = vmatprep.subr.bf16.mxu0 0
      %1719 = vmatpush1.bf16.msra.mxu0 %v1697
      %1720 = vmatprep.subr.bf16.mxu0 0
      %1721 = vmatpush1.bf16.msra.mxu0 %v1696
      %1722 = vmatprep.subr.bf16.mxu0 0
      %1723 = vmatpush1.bf16.msra.mxu0 %v1695
      %1724 = vmatprep.subr.bf16.mxu0 0
      %1725 = vmatpush1.bf16.msra.mxu0 %v1694
      %1726 = vmatprep.subr.bf16.mxu0 0
      %1727 = vmatpush2.bf16.msra.mxu0 0
      %1728 = vmatprep.subr.bf16.mxu0 0
      %1729 = vmatpush2.bf16.msra.mxu0 0
      %1730 = vmatprep.subr.bf16.mxu0 0
      %1731 = vmatpush2.bf16.msra.mxu0 0
      %1732 = vmatprep.subr.bf16.mxu0 0
      %1733 = vmatpush2.bf16.msra.mxu0 0
      %1734 = vmatprep.subr.bf16.mxu0 0
      %1735 = vmatpush2.bf16.msra.mxu0 0
      %1736 = vmatprep.subr.bf16.mxu0 0
      %1737 = vmatpush2.bf16.msra.mxu0 0
      %1738 = vmatprep.subr.bf16.mxu0 0
      %1739 = vmatpush2.bf16.msra.mxu0 0
      %1740 = vmatprep.subr.bf16.mxu0 0
      %1741 = vmatpush2.bf16.msra.mxu0 0
      %1742 = vmatprep.mubr.bf16.mxu0 0
      %1743 = vmatmul.mubr.bf16.gmra.mxu0 %v1638
      %v1744 = vpop.f32.mrf.mxu0
      %v1745 = vadd.f32 %v1660, %v1744
      %v1746 = vpop.f32.mrf.mxu0
      %v1747 = vpop.f32.mrf.mxu0
      %v1748 = vpop.f32.mrf.mxu0
      %1749 = vdwg.mxu0
      %v1750 = vmul.f32 %v1745, 1.702
      %v1751 = vxor.u32 %v1750, 2147483648
      %v1752 = vmul.f32 %v1751, 1.442695
      %v1753 = vpow.pop %v1752
      %v1754 = vadd.f32 %v1753, 1.0
      %v1755 = vrcp.pop %v1754
      %v1756 = vmul.f32 1.0, %v1755
      %v1757 = vmul.f32 %v1745, %v1756
      %v1758 = vpack.c.bf16 %v1757, %v1757
      %v1759 = vld [vmem:[%s11] sm:$0xf]
      %v1760 = vld [vmem:[%s11 + $0x4] sm:$0xf]
      %v1761 = vld [vmem:[%s11 + $0x8] sm:$0xf]
      %v1762 = vld [vmem:[%s11 + $0xc] sm:$0xf]
      %v1763 = vld [vmem:[%s11 + $0x10] sm:$0xf]
      %v1764 = vld [vmem:[%s11 + $0x14] sm:$0xf]
      %v1765 = vld [vmem:[%s11 + $0x18] sm:$0xf]
      %v1766 = vld [vmem:[%s11 + $0x1c] sm:$0xf]
      %v1767 = vld [vmem:[%s11 + $0x20] sm:$0xf]
      %v1768 = vld [vmem:[%s11 + $0x24] sm:$0xf]
      %v1769 = vld [vmem:[%s11 + $0x28] sm:$0xf]
      %v1770 = vld [vmem:[%s11 + $0x2c] sm:$0xf]
      %v1771 = vld [vmem:[%s11 + $0x30] sm:$0xf]
      %v1772 = vld [vmem:[%s11 + $0x34] sm:$0xf]
      %v1773 = vld [vmem:[%s11 + $0x38] sm:$0xf]
      %v1774 = vld [vmem:[%s11 + $0x3c] sm:$0xf]
      %v1775 = vld [vmem:[%s12] sm:$0x1]
      %v1777 = vlaneseq
      %v1778 = vshrl.u32 %v1777, 7
      %v1779 = vsub.s32 0, %v1778
      %v1780 = vrot.slane %v1775, %v1779
      %v1798 = vunpack.c.l.b16 %v1759
      %v1799 = vunpack.c.l.b16 %v1760
      %v1800 = vunpack.c.l.b16 %v1761
      %v1801 = vunpack.c.l.b16 %v1762
      %v1802 = vunpack.c.l.b16 %v1763
      %v1803 = vunpack.c.l.b16 %v1764
      %v1804 = vunpack.c.l.b16 %v1765
      %v1805 = vunpack.c.l.b16 %v1766
      %v1806 = vunpack.c.l.b16 %v1767
      %v1807 = vunpack.c.l.b16 %v1768
      %v1808 = vunpack.c.l.b16 %v1769
      %v1809 = vunpack.c.l.b16 %v1770
      %v1810 = vunpack.c.l.b16 %v1771
      %v1811 = vunpack.c.l.b16 %v1772
      %v1812 = vunpack.c.l.b16 %v1773
      %v1813 = vunpack.c.l.b16 %v1774
      %v1814 = vpack.c.b16 %v1799, %v1798
      %v1815 = vpack.c.b16 %v1801, %v1800
      %v1816 = vpack.c.b16 %v1803, %v1802
      %v1817 = vpack.c.b16 %v1805, %v1804
      %v1818 = vpack.c.b16 %v1807, %v1806
      %v1819 = vpack.c.b16 %v1809, %v1808
      %v1820 = vpack.c.b16 %v1811, %v1810
      %v1821 = vpack.c.b16 %v1813, %v1812
      %1830 = vmatprep.subr.bf16.mxu0 0
      %1831 = vmatpush1.bf16.msra.mxu0 %v1821
      %1832 = vmatprep.subr.bf16.mxu0 0
      %1833 = vmatpush1.bf16.msra.mxu0 %v1820
      %1834 = vmatprep.subr.bf16.mxu0 0
      %1835 = vmatpush1.bf16.msra.mxu0 %v1819
      %1836 = vmatprep.subr.bf16.mxu0 0
      %1837 = vmatpush1.bf16.msra.mxu0 %v1818
      %1838 = vmatprep.subr.bf16.mxu0 0
      %1839 = vmatpush1.bf16.msra.mxu0 %v1817
      %1840 = vmatprep.subr.bf16.mxu0 0
      %1841 = vmatpush1.bf16.msra.mxu0 %v1816
      %1842 = vmatprep.subr.bf16.mxu0 0
      %1843 = vmatpush1.bf16.msra.mxu0 %v1815
      %1844 = vmatprep.subr.bf16.mxu0 0
      %1845 = vmatpush1.bf16.msra.mxu0 %v1814
      %1846 = vmatprep.subr.bf16.mxu0 0
      %1847 = vmatpush2.bf16.msra.mxu0 0
      %1848 = vmatprep.subr.bf16.mxu0 0
      %1849 = vmatpush2.bf16.msra.mxu0 0
      %1850 = vmatprep.subr.bf16.mxu0 0
      %1851 = vmatpush2.bf16.msra.mxu0 0
      %1852 = vmatprep.subr.bf16.mxu0 0
      %1853 = vmatpush2.bf16.msra.mxu0 0
      %1854 = vmatprep.subr.bf16.mxu0 0
      %1855 = vmatpush2.bf16.msra.mxu0 0
      %1856 = vmatprep.subr.bf16.mxu0 0
      %1857 = vmatpush2.bf16.msra.mxu0 0
      %1858 = vmatprep.subr.bf16.mxu0 0
      %1859 = vmatpush2.bf16.msra.mxu0 0
      %1860 = vmatprep.subr.bf16.mxu0 0
      %1861 = vmatpush2.bf16.msra.mxu0 0
      %1862 = vmatprep.mubr.bf16.mxu0 0
      %1863 = vmatmul.mubr.bf16.gmra.mxu0 %v1758
      %v1864 = vpop.f32.mrf.mxu0
      %v1865 = vadd.f32 %v1780, %v1864
      %v1866 = vpop.f32.mrf.mxu0
      %v1867 = vpop.f32.mrf.mxu0
      %v1868 = vpop.f32.mrf.mxu0
      %1869 = vdwg.mxu0
      %v1870 = vadd.f32 %v1605, %v1865
      %v1871 = vpack.c.bf16 %v1870, %v1870
      %vm1872 = vcmask 1042432
      %vm1873 = vsmask.f32 2304
      %vm1874 = vmand %vm1872, %vm1873
      %v1875 = vld [vmem:[%s435] sm:$0x7]
      %v1876 = vsel %vm1874, %v1871, %v1875
      %1877 = vst [vmem:[%s435] sm:$0x7] %v1876
      %p1878 = scmp.lt.s32.totalorder %s24, 1
      %s1879 = scalar_select %p1878, %s24, 1
      %s1880 = smul.addr %s1879, 4
      %s1881 = scalar_lea.vmem %s13, %s1880
      // Predicated region
      $region73: #{_lambda_.5} parent=71 // pred_check
        %p1882 = pneg %p320
      $region74: #{_lambda_.5} parent=71 // pred_check_branch
        %1884 = sbr.rel (%p1882) target = $region76
      $region75: #{_lambda_.5} parent=71 // pred_region
        _
      $region76: #{_lambda_.5} parent=71 // pred_fallthru
        _
    $region72: #{_lambda_.5} parent=5 // pred_fallthru
      _
    %p1885 = scmp.le.s32.totalorder 2, %s19
    // Predicated region
    $region77: #{_lambda_.5} parent=5 // pred_check
      %p1886 = pneg %p1885
    $region78: #{_lambda_.5} parent=5 // pred_check_branch
      %1888 = sbr.rel (%p1886) target = $region80
    $region79: #{_lambda_.5} parent=5 // pred_region
      %s1889 = ssub.s32 %s19, 2
      // Predicated region
      $region81: #{_lambda_.5} parent=79 // pred_check
        %p1890 = pneg %p326
      $region82: #{_lambda_.5} parent=79 // pred_check_branch
        %1892 = sbr.rel (%p1890) target = $region84
      $region83: #{_lambda_.5} parent=79 // pred_region
        %p1893 = scmp.lt.s32.totalorder %s25, 1
        %s1894 = scalar_select %p1893, %s25, 1
        %s1895 = smul.addr %s1894, 4
        %s1896 = scalar_lea.vmem %s13, %s1895
      $region84: #{_lambda_.5} parent=79 // pred_fallthru
        _
    $region80: #{_lambda_.5} parent=5 // pred_fallthru
      _
  $region6: #{_lambda_.5} parent=0 // loop_footer
    %s23 = sadd.s32 1, %s19
  $region7: #{_lambda_.5} parent=0 // loop_footer_branch
    %18 = sbr.rel target = $region3
  $region8: #{_lambda_.5} parent=0 // loop_exit
    _

</llo_original>
